<compile_context>
chip_gen: v7x
topology: tpu7x:2x2x1
jax: 0.10.0
libtpu: 0.0.40
codegen_flags: <defaults>
</compile_context>

<pallas_src>
import functools

import jax
import jax.numpy as jnp
import numpy as np
from jax import lax
from jax.experimental import pallas as pl
from jax.experimental.pallas import tpu as pltpu

LEAKY_SLOPE = 0.01   # InPlaceABNSync default: leaky_relu with slope 0.01
BN_EPS = 1e-5


def _valid_taps(H, W, d):
    """Static list of 3x3 taps (ky, kx, dy, dx) that touch the image at all."""
    taps = []
    for ky in range(3):
        for kx in range(3):
            dy, dx = (ky - 1) * d, (kx - 1) * d
            oh0, oh1 = max(0, -dy), min(H, H - dy)
            ow0, ow1 = max(0, -dx), min(W, W - dx)
            if oh0 < oh1 and ow0 < ow1:
                taps.append((ky, kx, dy, dx))
    return taps


def _aspp_kernel(x_ref, w1_ref, w2_ref, *rest, H, W, C, Ci, Co, tap_offsets):
    n_dil = len(tap_offsets)
    ws_refs = rest[:n_dil]
    wb_ref, sc5_ref, sh5_ref, scb_ref, shb_ref, o_ref = rest[n_dil:]

    f32 = jnp.float32
    x = x_ref[0]                                   # (H, W, C), compute dtype
    cdt = x.dtype
    x2d = x.reshape(H * W, C)                      # matmul operand (cdt)
    xf = x.astype(f32)                             # f32 working copy for halos
    xf2d = xf.reshape(H * W, C)

    def bn_act(t, scale, shift):                   # folded BN + leaky_relu(0.01)
        t = t * scale + shift
        return jnp.where(t >= 0, t, LEAKY_SLOPE * t)

    def shifted(dy, dx):
        # (H, W, C) array holding xf[h+dy, w+dx] where in-bounds, else 0
        # (the conv's zero padding), built from static clamped slices and
        # zero-block concatenation -- no padded tensor ever touches HBM.
        oh0, oh1 = max(0, -dy), min(H, H - dy)
        ow0, ow1 = max(0, -dx), min(W, W - dx)
        sub = xf[oh0 + dy:oh1 + dy, ow0 + dx:ow1 + dx, :]
        vh = oh1 - oh0
        if ow0 > 0:
            sub = jnp.concatenate([jnp.zeros((vh, ow0, C), f32), sub], axis=1)
        if ow1 < W:
            sub = jnp.concatenate([sub, jnp.zeros((vh, W - ow1, C), f32)], axis=1)
        if oh0 > 0:
            sub = jnp.concatenate([jnp.zeros((oh0, W, C), f32), sub], axis=0)
        if oh1 < H:
            sub = jnp.concatenate([sub, jnp.zeros((H - oh1, W, C), f32)], axis=0)
        return sub

    # ---- branch 1: AdaptiveAvgPool2d((1,1)) -> 1x1 conv -> ABN -> bilinear
    # upsample from 1x1 (== spatially constant) -> through the bottleneck 1x1
    # conv it is just a (1, Co) bias added to the accumulator.
    pooled = jnp.mean(xf2d, axis=0, keepdims=True)                    # (1, C)
    f1 = jnp.dot(pooled, w1_ref[...].astype(f32),
                 preferred_element_type=f32)                          # (1, Ci)
    f1 = bn_act(f1, sc5_ref[0:1, :], sh5_ref[0:1, :])
    bias1 = jnp.dot(f1, wb_ref[0].astype(f32),
                    preferred_element_type=f32)                       # (1, Co)

    # ---- branch 2: 1x1 conv -> ABN, fused immediately into the bottleneck.
    feat2 = jnp.dot(x2d, w2_ref[...], preferred_element_type=f32)     # (HW, Ci)
    feat2 = bn_act(feat2, sc5_ref[1:2, :], sh5_ref[1:2, :])
    bott = jnp.dot(feat2.astype(cdt), wb_ref[1], preferred_element_type=f32)

    # ---- branches 3..5: 3x3 dilated conv == ONE matmul per dilation with the
    # valid taps stacked along the contraction axis; fused into the bottleneck.
    for b in range(n_dil):
        pieces = []
        for (dy, dx) in tap_offsets[b]:
            if dy == 0 and dx == 0:
                pieces.append(xf2d)
            else:
                pieces.append(shifted(dy, dx).reshape(H * W, C))
        stacked = pieces[0] if len(pieces) == 1 else jnp.concatenate(pieces, axis=-1)
        feat = jnp.dot(stacked.astype(cdt), ws_refs[b][...],
                       preferred_element_type=f32)                    # (HW, Ci)
        feat = bn_act(feat, sc5_ref[2 + b:3 + b, :], sh5_ref[2 + b:3 + b, :])
        bott = bott + jnp.dot(feat.astype(cdt), wb_ref[2 + b],
                              preferred_element_type=f32)

    bott = bn_act(bott + bias1, scb_ref[0:1, :], shb_ref[0:1, :])
    # TODO(synk): nn.Dropout2d(0.1) is identity at inference; training-mode
    # channel dropout would need pltpu.prng_* + a training flag.
    # NOTE: Co=16 here makes the store lane-sparse; production Co=512 (>=128)
    # is lane-dense so no output reshaping is done.
    o_ref[0] = bott.reshape(H, W, Co).astype(o_ref.dtype)


def aspp_pallas(x, params, dilations=(12, 24, 36)):
    """x: (N, H, W, C) NHWC. Returns (N, H, W, out_features) in x.dtype."""
    N, H, W, C = x.shape
    Ci = params['w1'].shape[1]
    Co = params['wb'].shape[2]

    # Pre-stack the 3x3 dilated weights per branch over the statically-valid
    # taps -> one contraction of K = len(taps)*C per dilation in the kernel.
    w345 = params['w345']                                  # (n_dil, 3, 3, C, Ci)
    w_stk, tap_offsets = [], []
    for b, d in enumerate(dilations):
        taps = _valid_taps(H, W, d)
        tap_offsets.append(tuple((dy, dx) for (_, _, dy, dx) in taps))
        w_stk.append(jnp.concatenate([w345[b, ky, kx] for (ky, kx, _, _) in taps],
                                     axis=0))              # (len(taps)*C, Ci)
    tap_offsets = tuple(tap_offsets)

    kern = functools.partial(_aspp_kernel, H=H, W=W, C=C, Ci=Ci, Co=Co,
                             tap_offsets=tap_offsets)

    def full_spec(a):
        return pl.BlockSpec(a.shape, lambda n, _nd=a.ndim: (0,) * _nd)

    small_inputs = (params['w1'], params['w2'], *w_stk, params['wb'],
                    params['sc5'], params['sh5'], params['scb'], params['shb'])

    return pl.pallas_call(
        kern,
        out_shape=jax.ShapeDtypeStruct((N, H, W, Co), x.dtype),
        grid=(N,),
        in_specs=[pl.BlockSpec((1, H, W, C), lambda n: (n, 0, 0, 0))]
                 + [full_spec(a) for a in small_inputs],
        out_specs=pl.BlockSpec((1, H, W, Co), lambda n: (n, 0, 0, 0)),
        compiler_params=pltpu.CompilerParams(
            dimension_semantics=("parallel",),       # batch shards across TCs (v7x)
            vmem_limit_bytes=48 * 1024 * 1024),      # < v7x 64 MiB physical
    )(x, *small_inputs)


def cast_compute(x, params, dtype):
    """Cast activations + conv weights to `dtype`; keep BN affine in f32."""
    p = dict(params)
    for k in ('w1', 'w2', 'w345', 'wb'):
        p[k] = params[k].astype(dtype)
    return x.astype(dtype), p


def init_params(key, C, Ci, Co):
    """Deterministic synthetic parameters (conv weights + folded BN affine)."""
    ks = jax.random.split(key, 5)
    w1 = 0.1 * jax.random.normal(ks[0], (C, Ci), jnp.float32)
    w2 = 0.1 * jax.random.normal(ks[1], (C, Ci), jnp.float32)
    w345 = 0.1 * jax.random.normal(ks[2], (3, 3, 3, C, Ci), jnp.float32)
    wb = 0.1 * jax.random.normal(ks[3], (5, Ci, Co), jnp.float32)

    def bn_fold(k, n):
        kg, kb, km, kv = jax.random.split(k, 4)
        gamma = 1.0 + 0.1 * jax.random.normal(kg, (n,), jnp.float32)
        beta = 0.1 * jax.random.normal(kb, (n,), jnp.float32)
        mean = 0.1 * jax.random.normal(km, (n,), jnp.float32)
        var = 1.0 + 0.1 * jax.random.uniform(kv, (n,), jnp.float32)
        scale = gamma / jnp.sqrt(var + BN_EPS)
        shift = beta - mean * scale
        return scale, shift

    bn_keys = jax.random.split(ks[4], 6)
    scales, shifts = [], []
    for i in range(6):
        n = Ci if i < 5 else Co
        s, sh = bn_fold(bn_keys[i], n)
        scales.append(s)
        shifts.append(sh)

    return dict(
        w1=w1, w2=w2, w345=w345, wb=wb,
        sc5=jnp.stack(scales[:5]), sh5=jnp.stack(shifts[:5]),
        scb=scales[5][None, :], shb=shifts[5][None, :],
    )


def aspp_reference(x, params, dilations=(12, 24, 36)):
    """Pure-JAX reference mirroring the kernel's dtype policy (operands in
    x.dtype, f32 accumulation, BN/leaky in f32). concat + 1x1 bottleneck conv
    == sum of per-branch matmuls; bilinear upsample of a 1x1 map == broadcast."""
    f32 = jnp.float32
    cdt = x.dtype

    def bn_act(t, scale, shift):
        t = t * scale + shift
        return jnp.where(t >= 0, t, LEAKY_SLOPE * t)

    wb = params['wb']
    pooled = jnp.mean(x.astype(f32), axis=(1, 2))                       # (N, C)
    f1 = bn_act(pooled @ params['w1'].astype(f32),
                params['sc5'][0], params['sh5'][0])                     # (N, Ci)
    out = jnp.einsum('nf,fo->no', f1, wb[0].astype(f32))[:, None, None, :]

    feat2 = bn_act(jnp.einsum('nhwc,cf->nhwf', x, params['w2'],
                              preferred_element_type=f32),
                   params['sc5'][1], params['sh5'][1])
    out = out + jnp.einsum('nhwf,fo->nhwo', feat2.astype(cdt), wb[1],
                           preferred_element_type=f32)

    for b, d in enumerate(dilations):
        y = lax.conv_general_dilated(
            x, params['w345'][b], window_strides=(1, 1),
            padding=((d, d), (d, d)), rhs_dilation=(d, d),
            dimension_numbers=('NHWC', 'HWIO', 'NHWC'),
            preferred_element_type=f32)
        feat = bn_act(y, params['sc5'][2 + b], params['sh5'][2 + b])
        out = out + jnp.einsum('nhwf,fo->nhwo', feat.astype(cdt), wb[2 + b],
                               preferred_element_type=f32)

    return bn_act(out, params['scb'][0], params['shb'][0])


if __name__ == "__main__":
    key = jax.random.PRNGKey(0)
    kx, kp = jax.random.split(key)

    # Small shapes consistent with the module: features=4 -> inner=8 -> out=16
    N, C, H, W = 2, 4, 16, 16
    Ci, Co = 8, 16
    dilations = (12, 24, 36)

    x_nchw = jax.random.normal(kx, (N, C, H, W), jnp.float32)   # PyTorch NCHW input
    x = jnp.transpose(x_nchw, (0, 2, 3, 1))                     # -> NHWC for the kernel
    params = init_params(kp, C, Ci, Co)

    # --- f32 path ---
    out = jax.block_until_ready(aspp_pallas(x, params, dilations))
    ref = aspp_reference(x, params, dilations)
    assert out.shape == (N, H, W, Co)
    np.testing.assert_allclose(np.asarray(out), np.asarray(ref),
                               atol=1e-3, rtol=1e-3)

    # --- bf16 path (v6e/v7x: bf16 operands, f32 accumulation & elementwise) ---
    x_bf, p_bf = cast_compute(x, params, jnp.bfloat16)
    out_bf = jax.block_until_ready(aspp_pallas(x_bf, p_bf, dilations))
    ref_bf = aspp_reference(x_bf, p_bf, dilations)
    np.testing.assert_allclose(np.asarray(out_bf, dtype=np.float32),
                               np.asarray(ref_bf, dtype=np.float32),
                               atol=2e-2, rtol=2e-2)

    print("KERNEL_OK")
</pallas_src>

<mosaic_0001>
module attributes {stable_mosaic.version = 11 : i64} {
  func.func @_aspp_kernel(%arg0: i32, %arg1: memref<1x16x16x4xf32, #tpu.memory_space<vmem>>, %arg2: memref<4x8xf32, #tpu.memory_space<vmem>>, %arg3: memref<4x8xf32, #tpu.memory_space<vmem>>, %arg4: memref<36x8xf32, #tpu.memory_space<vmem>>, %arg5: memref<4x8xf32, #tpu.memory_space<vmem>>, %arg6: memref<4x8xf32, #tpu.memory_space<vmem>>, %arg7: memref<5x8x16xf32, #tpu.memory_space<vmem>>, %arg8: memref<5x8xf32, #tpu.memory_space<vmem>>, %arg9: memref<5x8xf32, #tpu.memory_space<vmem>>, %arg10: memref<1x16xf32, #tpu.memory_space<vmem>>, %arg11: memref<1x16xf32, #tpu.memory_space<vmem>>, %arg12: memref<1x16x16x16xf32, #tpu.memory_space<vmem>>) attributes {dimension_semantics = [#tpu.dimension_semantics<parallel>], iteration_bounds = array<i64: 2>, scalar_prefetch = 0 : i64, scratch_operands = 0 : i64, tpu.core_type = #tpu.core_type<tc>, window_params = [{transform_indices = @transform_0, window_bounds = array<i64: 1, 16, 16, 4>}, {pipeline_mode = #tpu.pipeline_mode<synchronous>, transform_indices = @transform_1, window_bounds = array<i64: 4, 8>}, {pipeline_mode = #tpu.pipeline_mode<synchronous>, transform_indices = @transform_2, window_bounds = array<i64: 4, 8>}, {pipeline_mode = #tpu.pipeline_mode<synchronous>, transform_indices = @transform_3, window_bounds = array<i64: 36, 8>}, {pipeline_mode = #tpu.pipeline_mode<synchronous>, transform_indices = @transform_4, window_bounds = array<i64: 4, 8>}, {pipeline_mode = #tpu.pipeline_mode<synchronous>, transform_indices = @transform_5, window_bounds = array<i64: 4, 8>}, {pipeline_mode = #tpu.pipeline_mode<synchronous>, transform_indices = @transform_6, window_bounds = array<i64: 5, 8, 16>}, {pipeline_mode = #tpu.pipeline_mode<synchronous>, transform_indices = @transform_7, window_bounds = array<i64: 5, 8>}, {pipeline_mode = #tpu.pipeline_mode<synchronous>, transform_indices = @transform_8, window_bounds = array<i64: 5, 8>}, {pipeline_mode = #tpu.pipeline_mode<synchronous>, transform_indices = @transform_9, window_bounds = array<i64: 1, 16>}, {pipeline_mode = #tpu.pipeline_mode<synchronous>, transform_indices = @transform_10, window_bounds = array<i64: 1, 16>}, {transform_indices = @transform_11, window_bounds = array<i64: 1, 16, 16, 16>}]} {
    %c0 = arith.constant 0 : index
    %c0_0 = arith.constant 0 : index
    %c0_1 = arith.constant 0 : index
    %c0_2 = arith.constant 0 : index
    %0 = vector.load %arg1[%c0, %c0_0, %c0_1, %c0_2] : memref<1x16x16x4xf32, #tpu.memory_space<vmem>>, vector<1x16x16x4xf32>
    %1 = vector.shape_cast %0 : vector<1x16x16x4xf32> to vector<16x16x4xf32>
    %2 = vector.shape_cast %1 : vector<16x16x4xf32> to vector<256x4xf32>
    %3 = vector.shape_cast %1 : vector<16x16x4xf32> to vector<256x4xf32>
    %cst = arith.constant dense<0.000000e+00> : vector<4xf32>
    %4 = vector.multi_reduction <add>, %3, %cst [0] : vector<256x4xf32> to vector<4xf32>
    %5 = vector.shape_cast %4 : vector<4xf32> to vector<1x4xf32>
    %cst_3 = arith.constant 2.560000e+02 : f32
    %6 = vector.broadcast %cst_3 : f32 to vector<1x4xf32>
    %7 = arith.divf %5, %6 : vector<1x4xf32>
    %c0_4 = arith.constant 0 : index
    %c0_5 = arith.constant 0 : index
    %8 = vector.load %arg2[%c0_4, %c0_5] : memref<4x8xf32, #tpu.memory_space<vmem>>, vector<4x8xf32>
    %cst_6 = arith.constant dense<0.000000e+00> : vector<1x8xf32>
    %9 = tpu.matmul %7, %8, %cst_6 {dimension_numbers = #tpu.dot_dimension_numbers<[1], [0], [0], [1], [0, 0, 1, 1], [], []>} : vector<1x4xf32>, vector<4x8xf32>, vector<1x8xf32> -> vector<1x8xf32>
    %c0_7 = arith.constant 0 : index
    %c0_8 = arith.constant 0 : index
    %10 = vector.load %arg8[%c0_7, %c0_8] : memref<5x8xf32, #tpu.memory_space<vmem>>, vector<1x8xf32>
    %c0_9 = arith.constant 0 : index
    %c0_10 = arith.constant 0 : index
    %11 = vector.load %arg9[%c0_9, %c0_10] : memref<5x8xf32, #tpu.memory_space<vmem>>, vector<1x8xf32>
    %12 = arith.mulf %9, %10 : vector<1x8xf32>
    %13 = arith.addf %12, %11 : vector<1x8xf32>
    %cst_11 = arith.constant 0.000000e+00 : f32
    %14 = vector.broadcast %cst_11 : f32 to vector<1x8xf32>
    %15 = arith.cmpf oge, %13, %14 : vector<1x8xf32>
    %cst_12 = arith.constant 0.00999999977 : f32
    %16 = vector.broadcast %cst_12 : f32 to vector<1x8xf32>
    %17 = arith.mulf %16, %13 : vector<1x8xf32>
    %18 = arith.select %15, %13, %17 : vector<1x8xi1>, vector<1x8xf32>
    %c0_13 = arith.constant 0 : index
    %c0_14 = arith.constant 0 : index
    %c0_15 = arith.constant 0 : index
    %19 = vector.load %arg7[%c0_13, %c0_14, %c0_15] : memref<5x8x16xf32, #tpu.memory_space<vmem>>, vector<1x8x16xf32>
    %20 = vector.shape_cast %19 : vector<1x8x16xf32> to vector<8x16xf32>
    %cst_16 = arith.constant dense<0.000000e+00> : vector<1x16xf32>
    %21 = tpu.matmul %18, %20, %cst_16 {dimension_numbers = #tpu.dot_dimension_numbers<[1], [0], [0], [1], [0, 0, 1, 1], [], []>} : vector<1x8xf32>, vector<8x16xf32>, vector<1x16xf32> -> vector<1x16xf32>
    %c0_17 = arith.constant 0 : index
    %c0_18 = arith.constant 0 : index
    %22 = vector.load %arg3[%c0_17, %c0_18] : memref<4x8xf32, #tpu.memory_space<vmem>>, vector<4x8xf32>
    %cst_19 = arith.constant dense<0.000000e+00> : vector<256x8xf32>
    %23 = tpu.matmul %2, %22, %cst_19 {dimension_numbers = #tpu.dot_dimension_numbers<[1], [0], [0], [1], [0, 0, 1, 1], [], []>} : vector<256x4xf32>, vector<4x8xf32>, vector<256x8xf32> -> vector<256x8xf32>
    %c1 = arith.constant 1 : index
    %c0_20 = arith.constant 0 : index
    %24 = vector.load %arg8[%c1, %c0_20] : memref<5x8xf32, #tpu.memory_space<vmem>>, vector<1x8xf32>
    %c1_21 = arith.constant 1 : index
    %c0_22 = arith.constant 0 : index
    %25 = vector.load %arg9[%c1_21, %c0_22] : memref<5x8xf32, #tpu.memory_space<vmem>>, vector<1x8xf32>
    %26 = vector.broadcast %24 : vector<1x8xf32> to vector<256x8xf32>
    %27 = arith.mulf %23, %26 : vector<256x8xf32>
    %28 = vector.broadcast %25 : vector<1x8xf32> to vector<256x8xf32>
    %29 = arith.addf %27, %28 : vector<256x8xf32>
    %cst_23 = arith.constant 0.000000e+00 : f32
    %30 = vector.broadcast %cst_23 : f32 to vector<256x8xf32>
    %31 = arith.cmpf oge, %29, %30 : vector<256x8xf32>
    %cst_24 = arith.constant 0.00999999977 : f32
    %32 = vector.broadcast %cst_24 : f32 to vector<256x8xf32>
    %33 = arith.mulf %32, %29 : vector<256x8xf32>
    %34 = arith.select %31, %29, %33 : vector<256x8xi1>, vector<256x8xf32>
    %c1_25 = arith.constant 1 : index
    %c0_26 = arith.constant 0 : index
    %c0_27 = arith.constant 0 : index
    %35 = vector.load %arg7[%c1_25, %c0_26, %c0_27] : memref<5x8x16xf32, #tpu.memory_space<vmem>>, vector<1x8x16xf32>
    %36 = vector.shape_cast %35 : vector<1x8x16xf32> to vector<8x16xf32>
    %cst_28 = arith.constant dense<0.000000e+00> : vector<256x16xf32>
    %37 = tpu.matmul %34, %36, %cst_28 {dimension_numbers = #tpu.dot_dimension_numbers<[1], [0], [0], [1], [0, 0, 1, 1], [], []>} : vector<256x8xf32>, vector<8x16xf32>, vector<256x16xf32> -> vector<256x16xf32>
    %38 = vector.extract_strided_slice %1 {offsets = [0, 0, 0], sizes = [4, 4, 4], strides = [1, 1, 1]} : vector<16x16x4xf32> to vector<4x4x4xf32>
    %cst_29 = arith.constant 0.000000e+00 : f32
    %39 = vector.broadcast %cst_29 : f32 to vector<4x12x4xf32>
    %40 = tpu.concatenate %39, %38 in 1 : vector<4x12x4xf32>, vector<4x4x4xf32> -> vector<4x16x4xf32>
    %cst_30 = arith.constant 0.000000e+00 : f32
    %41 = vector.broadcast %cst_30 : f32 to vector<12x16x4xf32>
    %42 = tpu.concatenate %41, %40 in 0 : vector<12x16x4xf32>, vector<4x16x4xf32> -> vector<16x16x4xf32>
    %43 = vector.shape_cast %42 : vector<16x16x4xf32> to vector<256x4xf32>
    %44 = vector.extract_strided_slice %1 {offsets = [0, 0, 0], sizes = [4, 16, 4], strides = [1, 1, 1]} : vector<16x16x4xf32> to vector<4x16x4xf32>
    %cst_31 = arith.constant 0.000000e+00 : f32
    %45 = vector.broadcast %cst_31 : f32 to vector<12x16x4xf32>
    %46 = tpu.concatenate %45, %44 in 0 : vector<12x16x4xf32>, vector<4x16x4xf32> -> vector<16x16x4xf32>
    %47 = vector.shape_cast %46 : vector<16x16x4xf32> to vector<256x4xf32>
    %48 = vector.extract_strided_slice %1 {offsets = [0, 12, 0], sizes = [4, 4, 4], strides = [1, 1, 1]} : vector<16x16x4xf32> to vector<4x4x4xf32>
    %cst_32 = arith.constant 0.000000e+00 : f32
    %49 = vector.broadcast %cst_32 : f32 to vector<4x12x4xf32>
    %50 = tpu.concatenate %48, %49 in 1 : vector<4x4x4xf32>, vector<4x12x4xf32> -> vector<4x16x4xf32>
    %cst_33 = arith.constant 0.000000e+00 : f32
    %51 = vector.broadcast %cst_33 : f32 to vector<12x16x4xf32>
    %52 = tpu.concatenate %51, %50 in 0 : vector<12x16x4xf32>, vector<4x16x4xf32> -> vector<16x16x4xf32>
    %53 = vector.shape_cast %52 : vector<16x16x4xf32> to vector<256x4xf32>
    %54 = vector.extract_strided_slice %1 {offsets = [0, 0, 0], sizes = [16, 4, 4], strides = [1, 1, 1]} : vector<16x16x4xf32> to vector<16x4x4xf32>
    %cst_34 = arith.constant 0.000000e+00 : f32
    %55 = vector.broadcast %cst_34 : f32 to vector<16x12x4xf32>
    %56 = tpu.concatenate %55, %54 in 1 : vector<16x12x4xf32>, vector<16x4x4xf32> -> vector<16x16x4xf32>
    %57 = vector.shape_cast %56 : vector<16x16x4xf32> to vector<256x4xf32>
    %58 = vector.extract_strided_slice %1 {offsets = [0, 12, 0], sizes = [16, 4, 4], strides = [1, 1, 1]} : vector<16x16x4xf32> to vector<16x4x4xf32>
    %cst_35 = arith.constant 0.000000e+00 : f32
    %59 = vector.broadcast %cst_35 : f32 to vector<16x12x4xf32>
    %60 = tpu.concatenate %58, %59 in 1 : vector<16x4x4xf32>, vector<16x12x4xf32> -> vector<16x16x4xf32>
    %61 = vector.shape_cast %60 : vector<16x16x4xf32> to vector<256x4xf32>
    %62 = vector.extract_strided_slice %1 {offsets = [12, 0, 0], sizes = [4, 4, 4], strides = [1, 1, 1]} : vector<16x16x4xf32> to vector<4x4x4xf32>
    %cst_36 = arith.constant 0.000000e+00 : f32
    %63 = vector.broadcast %cst_36 : f32 to vector<4x12x4xf32>
    %64 = tpu.concatenate %63, %62 in 1 : vector<4x12x4xf32>, vector<4x4x4xf32> -> vector<4x16x4xf32>
    %cst_37 = arith.constant 0.000000e+00 : f32
    %65 = vector.broadcast %cst_37 : f32 to vector<12x16x4xf32>
    %66 = tpu.concatenate %64, %65 in 0 : vector<4x16x4xf32>, vector<12x16x4xf32> -> vector<16x16x4xf32>
    %67 = vector.shape_cast %66 : vector<16x16x4xf32> to vector<256x4xf32>
    %68 = vector.extract_strided_slice %1 {offsets = [12, 0, 0], sizes = [4, 16, 4], strides = [1, 1, 1]} : vector<16x16x4xf32> to vector<4x16x4xf32>
    %cst_38 = arith.constant 0.000000e+00 : f32
    %69 = vector.broadcast %cst_38 : f32 to vector<12x16x4xf32>
    %70 = tpu.concatenate %68, %69 in 0 : vector<4x16x4xf32>, vector<12x16x4xf32> -> vector<16x16x4xf32>
    %71 = vector.shape_cast %70 : vector<16x16x4xf32> to vector<256x4xf32>
    %72 = vector.extract_strided_slice %1 {offsets = [12, 12, 0], sizes = [4, 4, 4], strides = [1, 1, 1]} : vector<16x16x4xf32> to vector<4x4x4xf32>
    %cst_39 = arith.constant 0.000000e+00 : f32
    %73 = vector.broadcast %cst_39 : f32 to vector<4x12x4xf32>
    %74 = tpu.concatenate %72, %73 in 1 : vector<4x4x4xf32>, vector<4x12x4xf32> -> vector<4x16x4xf32>
    %cst_40 = arith.constant 0.000000e+00 : f32
    %75 = vector.broadcast %cst_40 : f32 to vector<12x16x4xf32>
    %76 = tpu.concatenate %74, %75 in 0 : vector<4x16x4xf32>, vector<12x16x4xf32> -> vector<16x16x4xf32>
    %77 = vector.shape_cast %76 : vector<16x16x4xf32> to vector<256x4xf32>
    %78 = tpu.concatenate %43, %47, %53, %57, %3, %61, %67, %71, %77 in 1 : vector<256x4xf32>, vector<256x4xf32>, vector<256x4xf32>, vector<256x4xf32>, vector<256x4xf32>, vector<256x4xf32>, vector<256x4xf32>, vector<256x4xf32>, vector<256x4xf32> -> vector<256x36xf32>
    %c0_41 = arith.constant 0 : index
    %c0_42 = arith.constant 0 : index
    %79 = vector.load %arg4[%c0_41, %c0_42] : memref<36x8xf32, #tpu.memory_space<vmem>>, vector<36x8xf32>
    %cst_43 = arith.constant dense<0.000000e+00> : vector<256x8xf32>
    %80 = tpu.matmul %78, %79, %cst_43 {dimension_numbers = #tpu.dot_dimension_numbers<[1], [0], [0], [1], [0, 0, 1, 1], [], []>} : vector<256x36xf32>, vector<36x8xf32>, vector<256x8xf32> -> vector<256x8xf32>
    %c2 = arith.constant 2 : index
    %c0_44 = arith.constant 0 : index
    %81 = vector.load %arg8[%c2, %c0_44] : memref<5x8xf32, #tpu.memory_space<vmem>>, vector<1x8xf32>
    %c2_45 = arith.constant 2 : index
    %c0_46 = arith.constant 0 : index
    %82 = vector.load %arg9[%c2_45, %c0_46] : memref<5x8xf32, #tpu.memory_space<vmem>>, vector<1x8xf32>
    %83 = vector.broadcast %81 : vector<1x8xf32> to vector<256x8xf32>
    %84 = arith.mulf %80, %83 : vector<256x8xf32>
    %85 = vector.broadcast %82 : vector<1x8xf32> to vector<256x8xf32>
    %86 = arith.addf %84, %85 : vector<256x8xf32>
    %cst_47 = arith.constant 0.000000e+00 : f32
    %87 = vector.broadcast %cst_47 : f32 to vector<256x8xf32>
    %88 = arith.cmpf oge, %86, %87 : vector<256x8xf32>
    %cst_48 = arith.constant 0.00999999977 : f32
    %89 = vector.broadcast %cst_48 : f32 to vector<256x8xf32>
    %90 = arith.mulf %89, %86 : vector<256x8xf32>
    %91 = arith.select %88, %86, %90 : vector<256x8xi1>, vector<256x8xf32>
    %c2_49 = arith.constant 2 : index
    %c0_50 = arith.constant 0 : index
    %c0_51 = arith.constant 0 : index
    %92 = vector.load %arg7[%c2_49, %c0_50, %c0_51] : memref<5x8x16xf32, #tpu.memory_space<vmem>>, vector<1x8x16xf32>
    %93 = vector.shape_cast %92 : vector<1x8x16xf32> to vector<8x16xf32>
    %cst_52 = arith.constant dense<0.000000e+00> : vector<256x16xf32>
    %94 = tpu.matmul %91, %93, %cst_52 {dimension_numbers = #tpu.dot_dimension_numbers<[1], [0], [0], [1], [0, 0, 1, 1], [], []>} : vector<256x8xf32>, vector<8x16xf32>, vector<256x16xf32> -> vector<256x16xf32>
    %95 = arith.addf %37, %94 : vector<256x16xf32>
    %c0_53 = arith.constant 0 : index
    %c0_54 = arith.constant 0 : index
    %96 = vector.load %arg5[%c0_53, %c0_54] : memref<4x8xf32, #tpu.memory_space<vmem>>, vector<4x8xf32>
    %cst_55 = arith.constant dense<0.000000e+00> : vector<256x8xf32>
    %97 = tpu.matmul %3, %96, %cst_55 {dimension_numbers = #tpu.dot_dimension_numbers<[1], [0], [0], [1], [0, 0, 1, 1], [], []>} : vector<256x4xf32>, vector<4x8xf32>, vector<256x8xf32> -> vector<256x8xf32>
    %c3 = arith.constant 3 : index
    %c0_56 = arith.constant 0 : index
    %98 = vector.load %arg8[%c3, %c0_56] : memref<5x8xf32, #tpu.memory_space<vmem>>, vector<1x8xf32>
    %c3_57 = arith.constant 3 : index
    %c0_58 = arith.constant 0 : index
    %99 = vector.load %arg9[%c3_57, %c0_58] : memref<5x8xf32, #tpu.memory_space<vmem>>, vector<1x8xf32>
    %100 = vector.broadcast %98 : vector<1x8xf32> to vector<256x8xf32>
    %101 = arith.mulf %97, %100 : vector<256x8xf32>
    %102 = vector.broadcast %99 : vector<1x8xf32> to vector<256x8xf32>
    %103 = arith.addf %101, %102 : vector<256x8xf32>
    %cst_59 = arith.constant 0.000000e+00 : f32
    %104 = vector.broadcast %cst_59 : f32 to vector<256x8xf32>
    %105 = arith.cmpf oge, %103, %104 : vector<256x8xf32>
    %cst_60 = arith.constant 0.00999999977 : f32
    %106 = vector.broadcast %cst_60 : f32 to vector<256x8xf32>
    %107 = arith.mulf %106, %103 : vector<256x8xf32>
    %108 = arith.select %105, %103, %107 : vector<256x8xi1>, vector<256x8xf32>
    %c3_61 = arith.constant 3 : index
    %c0_62 = arith.constant 0 : index
    %c0_63 = arith.constant 0 : index
    %109 = vector.load %arg7[%c3_61, %c0_62, %c0_63] : memref<5x8x16xf32, #tpu.memory_space<vmem>>, vector<1x8x16xf32>
    %110 = vector.shape_cast %109 : vector<1x8x16xf32> to vector<8x16xf32>
    %cst_64 = arith.constant dense<0.000000e+00> : vector<256x16xf32>
    %111 = tpu.matmul %108, %110, %cst_64 {dimension_numbers = #tpu.dot_dimension_numbers<[1], [0], [0], [1], [0, 0, 1, 1], [], []>} : vector<256x8xf32>, vector<8x16xf32>, vector<256x16xf32> -> vector<256x16xf32>
    %112 = arith.addf %95, %111 : vector<256x16xf32>
    %c0_65 = arith.constant 0 : index
    %c0_66 = arith.constant 0 : index
    %113 = vector.load %arg6[%c0_65, %c0_66] : memref<4x8xf32, #tpu.memory_space<vmem>>, vector<4x8xf32>
    %cst_67 = arith.constant dense<0.000000e+00> : vector<256x8xf32>
    %114 = tpu.matmul %3, %113, %cst_67 {dimension_numbers = #tpu.dot_dimension_numbers<[1], [0], [0], [1], [0, 0, 1, 1], [], []>} : vector<256x4xf32>, vector<4x8xf32>, vector<256x8xf32> -> vector<256x8xf32>
    %c4 = arith.constant 4 : index
    %c0_68 = arith.constant 0 : index
    %115 = vector.load %arg8[%c4, %c0_68] : memref<5x8xf32, #tpu.memory_space<vmem>>, vector<1x8xf32>
    %c4_69 = arith.constant 4 : index
    %c0_70 = arith.constant 0 : index
    %116 = vector.load %arg9[%c4_69, %c0_70] : memref<5x8xf32, #tpu.memory_space<vmem>>, vector<1x8xf32>
    %117 = vector.broadcast %115 : vector<1x8xf32> to vector<256x8xf32>
    %118 = arith.mulf %114, %117 : vector<256x8xf32>
    %119 = vector.broadcast %116 : vector<1x8xf32> to vector<256x8xf32>
    %120 = arith.addf %118, %119 : vector<256x8xf32>
    %cst_71 = arith.constant 0.000000e+00 : f32
    %121 = vector.broadcast %cst_71 : f32 to vector<256x8xf32>
    %122 = arith.cmpf oge, %120, %121 : vector<256x8xf32>
    %cst_72 = arith.constant 0.00999999977 : f32
    %123 = vector.broadcast %cst_72 : f32 to vector<256x8xf32>
    %124 = arith.mulf %123, %120 : vector<256x8xf32>
    %125 = arith.select %122, %120, %124 : vector<256x8xi1>, vector<256x8xf32>
    %c4_73 = arith.constant 4 : index
    %c0_74 = arith.constant 0 : index
    %c0_75 = arith.constant 0 : index
    %126 = vector.load %arg7[%c4_73, %c0_74, %c0_75] : memref<5x8x16xf32, #tpu.memory_space<vmem>>, vector<1x8x16xf32>
    %127 = vector.shape_cast %126 : vector<1x8x16xf32> to vector<8x16xf32>
    %cst_76 = arith.constant dense<0.000000e+00> : vector<256x16xf32>
    %128 = tpu.matmul %125, %127, %cst_76 {dimension_numbers = #tpu.dot_dimension_numbers<[1], [0], [0], [1], [0, 0, 1, 1], [], []>} : vector<256x8xf32>, vector<8x16xf32>, vector<256x16xf32> -> vector<256x16xf32>
    %129 = arith.addf %112, %128 : vector<256x16xf32>
    %130 = vector.broadcast %21 : vector<1x16xf32> to vector<256x16xf32>
    %131 = arith.addf %129, %130 : vector<256x16xf32>
    %c0_77 = arith.constant 0 : index
    %c0_78 = arith.constant 0 : index
    %132 = vector.load %arg10[%c0_77, %c0_78] : memref<1x16xf32, #tpu.memory_space<vmem>>, vector<1x16xf32>
    %c0_79 = arith.constant 0 : index
    %c0_80 = arith.constant 0 : index
    %133 = vector.load %arg11[%c0_79, %c0_80] : memref<1x16xf32, #tpu.memory_space<vmem>>, vector<1x16xf32>
    %134 = vector.broadcast %132 : vector<1x16xf32> to vector<256x16xf32>
    %135 = arith.mulf %131, %134 : vector<256x16xf32>
    %136 = vector.broadcast %133 : vector<1x16xf32> to vector<256x16xf32>
    %137 = arith.addf %135, %136 : vector<256x16xf32>
    %cst_81 = arith.constant 0.000000e+00 : f32
    %138 = vector.broadcast %cst_81 : f32 to vector<256x16xf32>
    %139 = arith.cmpf oge, %137, %138 : vector<256x16xf32>
    %cst_82 = arith.constant 0.00999999977 : f32
    %140 = vector.broadcast %cst_82 : f32 to vector<256x16xf32>
    %141 = arith.mulf %140, %137 : vector<256x16xf32>
    %142 = arith.select %139, %137, %141 : vector<256x16xi1>, vector<256x16xf32>
    %143 = vector.shape_cast %142 : vector<256x16xf32> to vector<16x16x16xf32>
    %c0_83 = arith.constant 0 : index
    %c0_84 = arith.constant 0 : index
    %c0_85 = arith.constant 0 : index
    %c0_86 = arith.constant 0 : index
    %144 = vector.load %arg12[%c0_83, %c0_84, %c0_85, %c0_86] : memref<1x16x16x16xf32, #tpu.memory_space<vmem>>, vector<1x16x16x16xf32>
    %145 = vector.shape_cast %144 : vector<1x16x16x16xf32> to vector<16x16x16xf32>
    %146 = vector.shape_cast %143 : vector<16x16x16xf32> to vector<1x16x16x16xf32>
    tpu.vector_store %arg12[%c0_83, %c0_84, %c0_85, %c0_86], %146 {strides = array<i32>} : memref<1x16x16x16xf32, #tpu.memory_space<vmem>>, vector<1x16x16x16xf32>,
    return
  }
  func.func @transform_0(%arg0: i32) -> (i32, i32, i32, i32) {
    %c0_i32 = arith.constant 0 : i32
    %c0_i32_0 = arith.constant 0 : i32
    %c0_i32_1 = arith.constant 0 : i32
    %c0_i32_2 = arith.constant 0 : i32
    return %arg0, %c0_i32, %c0_i32_0, %c0_i32_1 : i32, i32, i32, i32
  }
  func.func @transform_1(%arg0: i32) -> (i32, i32) {
    %c0_i32 = arith.constant 0 : i32
    %c0_i32_0 = arith.constant 0 : i32
    %c0_i32_1 = arith.constant 0 : i32
    return %c0_i32, %c0_i32_0 : i32, i32
  }
  func.func @transform_2(%arg0: i32) -> (i32, i32) {
    %c0_i32 = arith.constant 0 : i32
    %c0_i32_0 = arith.constant 0 : i32
    %c0_i32_1 = arith.constant 0 : i32
    return %c0_i32, %c0_i32_0 : i32, i32
  }
  func.func @transform_3(%arg0: i32) -> (i32, i32) {
    %c0_i32 = arith.constant 0 : i32
    %c0_i32_0 = arith.constant 0 : i32
    %c0_i32_1 = arith.constant 0 : i32
    return %c0_i32, %c0_i32_0 : i32, i32
  }
  func.func @transform_4(%arg0: i32) -> (i32, i32) {
    %c0_i32 = arith.constant 0 : i32
    %c0_i32_0 = arith.constant 0 : i32
    %c0_i32_1 = arith.constant 0 : i32
    return %c0_i32, %c0_i32_0 : i32, i32
  }
  func.func @transform_5(%arg0: i32) -> (i32, i32) {
    %c0_i32 = arith.constant 0 : i32
    %c0_i32_0 = arith.constant 0 : i32
    %c0_i32_1 = arith.constant 0 : i32
    return %c0_i32, %c0_i32_0 : i32, i32
  }
  func.func @transform_6(%arg0: i32) -> (i32, i32, i32) {
    %c0_i32 = arith.constant 0 : i32
    %c0_i32_0 = arith.constant 0 : i32
    %c0_i32_1 = arith.constant 0 : i32
    %c0_i32_2 = arith.constant 0 : i32
    return %c0_i32, %c0_i32_0, %c0_i32_1 : i32, i32, i32
  }
  func.func @transform_7(%arg0: i32) -> (i32, i32) {
    %c0_i32 = arith.constant 0 : i32
    %c0_i32_0 = arith.constant 0 : i32
    %c0_i32_1 = arith.constant 0 : i32
    return %c0_i32, %c0_i32_0 : i32, i32
  }
  func.func @transform_8(%arg0: i32) -> (i32, i32) {
    %c0_i32 = arith.constant 0 : i32
    %c0_i32_0 = arith.constant 0 : i32
    %c0_i32_1 = arith.constant 0 : i32
    return %c0_i32, %c0_i32_0 : i32, i32
  }
  func.func @transform_9(%arg0: i32) -> (i32, i32) {
    %c0_i32 = arith.constant 0 : i32
    %c0_i32_0 = arith.constant 0 : i32
    %c0_i32_1 = arith.constant 0 : i32
    return %c0_i32, %c0_i32_0 : i32, i32
  }
  func.func @transform_10(%arg0: i32) -> (i32, i32) {
    %c0_i32 = arith.constant 0 : i32
    %c0_i32_0 = arith.constant 0 : i32
    %c0_i32_1 = arith.constant 0 : i32
    return %c0_i32, %c0_i32_0 : i32, i32
  }
  func.func @transform_11(%arg0: i32) -> (i32, i32, i32, i32) {
    %c0_i32 = arith.constant 0 : i32
    %c0_i32_0 = arith.constant 0 : i32
    %c0_i32_1 = arith.constant 0 : i32
    %c0_i32_2 = arith.constant 0 : i32
    return %arg0, %c0_i32, %c0_i32_0, %c0_i32_1 : i32, i32, i32, i32
  }
}

</mosaic_0001>

<llo_original>
// kernel: tpu_custom_call.1
$region0: #{tpu_custom_call.1}
  #allocation0 [shape = 'u32[]', space=smem, size = 0x4, offset = 0x4, fixed_abs, tag = 'smem constant byte address 0x4 - core index']
  #allocation1 [shape = 'u32[144,128]{1,0:T(1,128)}', space=vmem, size = 0x12000, scoped, tag = 'internal scratch']
  %s0 = inlined_call_operand.vmem [shape: f32[2,16,16,4], index: 0, kind: input, shape index: {}]
  %s1 = inlined_call_operand.vmem [shape: f32[4,8], index: 1, kind: input, shape index: {}]
  %s2 = inlined_call_operand.vmem [shape: f32[4,8], index: 2, kind: input, shape index: {}]
  %s3 = inlined_call_operand.vmem [shape: f32[36,8], index: 3, kind: input, shape index: {}]
  %s4 = inlined_call_operand.vmem [shape: f32[4,8], index: 4, kind: input, shape index: {}]
  %s5 = inlined_call_operand.vmem [shape: f32[4,8], index: 5, kind: input, shape index: {}]
  %s6 = inlined_call_operand.vmem [shape: f32[5,8,16], index: 6, kind: input, shape index: {}]
  %s7 = inlined_call_operand.vmem [shape: f32[5,8], index: 7, kind: input, shape index: {}]
  %s8 = inlined_call_operand.vmem [shape: f32[5,8], index: 8, kind: input, shape index: {}]
  %s9 = inlined_call_operand.vmem [shape: f32[1,16], index: 9, kind: input, shape index: {}]
  %s10 = inlined_call_operand.vmem [shape: f32[1,16], index: 10, kind: input, shape index: {}]
  %s11 = inlined_call_operand.hbm [shape: f32[2,16,16,16], index: 11, kind: output, shape index: {}]
  %s12 = sld [smem:[#allocation0]]
  $region77: #{tpu_custom_call.1} parent=0
    _
  %s14 = ssub.s32 1, %s12
  %s15 = scalar_select 0, %s14, %s12
  $region1: #{tpu_custom_call.1} parent=0
    #allocation2 [shape = 'u8[262144]{0}', space=vmem, size = 0x40000, scoped, tag = 'output window, operand 0']
    #allocation3 [shape = 's32[2]{0}', space=sflag, size = 0x8, scoped, tag = 'scoped memory for tpu_custom_call.1']
    %16 = vsyncpa [#allocation3], 0
    %s17 = scalar_lea.sflag [#allocation3], 1
    %18 = vsyncpa %s17, 0
    loop: start=0, step=1, limit=4
    $region2: #{tpu_custom_call.1} parent=1 // loop_pre_header
      _
    $region3: #{tpu_custom_call.1} parent=1 // loop_header
      %s20 = sphi 0, %s24
      %p21 = scmp.ge.s32.totalorder %s20, 4
      %s30 = sphi 0, %s32
      %s33 = sphi 0, %s30
      %s34 = sphi 0, %s33
      %s50 = sphi 0, %s34
      %s54 = sphi 0, %s54
      %s56 = sphi 0, %s54
      %s57 = sphi 0, %s56
      %s71 = sphi 0, %s57
      %s75 = sphi 0, %s75
      %s77 = sphi 0, %s75
      %s78 = sphi 0, %s77
      %s92 = sphi 0, %s78
      %s96 = sphi 0, %s96
      %s98 = sphi 0, %s96
      %s99 = sphi 0, %s98
      %s113 = sphi 0, %s99
      %s117 = sphi 0, %s117
      %s119 = sphi 0, %s117
      %s120 = sphi 0, %s119
      %s134 = sphi 0, %s120
      %s138 = sphi 0, %s138
      %s140 = sphi 0, %s138
      %s141 = sphi 0, %s140
      %s155 = sphi 0, %s141
      %s159 = sphi 0, %s159
      %s161 = sphi 0, %s159
      %s162 = sphi 0, %s161
      %s176 = sphi 0, %s162
      %s180 = sphi 0, %s180
      %s182 = sphi 0, %s180
      %s183 = sphi 0, %s182
      %s197 = sphi 0, %s183
      %s201 = sphi 0, %s201
      %s203 = sphi 0, %s201
      %s204 = sphi 0, %s203
      %s218 = sphi 0, %s204
      %s222 = sphi 0, %s222
      %s224 = sphi 0, %s222
      %s225 = sphi 0, %s224
      %s239 = sphi 0, %s225
      %s243 = sphi 0, %s243
      %s245 = sphi 0, %s243
      %s246 = sphi 0, %s245
      %s260 = sphi 0, %s246
      %s266 = sphi 0, %s268
      %s269 = sphi 0, %s266
      %s270 = sphi 0, %s269
      %s286 = sphi 0, %s270
    $region4: #{tpu_custom_call.1} parent=1 // loop_header_branch
      %23 = sbr.rel (%p21) target = $region8
    $region5: #{tpu_custom_call.1} parent=1 // loop_body
      %s25 = ssub.s32 %s20, 1
      %s26 = ssub.s32 %s20, 2
      %s27 = sadd.s32 %s20, 1
      %s28 = ssub.s32 %s20, %s27
      %p29 = scmp.eq.s32.totalorder %s28, 0
      %s31 = sadd.s32 %s30, 1
      %s32 = scalar_select %p29, %s30, %s31
      %p35 = pneg %p29
      %p36 = scmp.eq.s32.totalorder %s20, 1
      %p37 = por %p35, %p36
      %p38 = scmp.ne.s32.totalorder %s30, %s33
      %p39 = scmp.eq.s32.totalorder %s20, 0
      %p40 = por %p38, %p39
      %p41 = scmp.ne.s32.totalorder %s30, %s33
      %p42 = scmp.eq.s32.totalorder %s25, 1
      %p43 = por %p41, %p42
      %p44 = scmp.ne.s32.totalorder %s33, %s34
      %p45 = scmp.eq.s32.totalorder %s25, 0
      %p46 = por %p44, %p45
      %p47 = scmp.ne.s32.totalorder %s33, %s34
      %p48 = scmp.eq.s32.totalorder %s26, 1
      %p49 = por %p47, %p48
      %p51 = scmp.ne.s32.totalorder %s34, %s50
      %p52 = scmp.eq.s32.totalorder %s26, 0
      %p53 = por %p51, %p52
      %s55 = sadd.s32 %s54, 1
      %p58 = scmp.eq.s32.totalorder %s20, 1
      %p59 = scmp.ne.s32.totalorder %s54, %s56
      %p60 = scmp.eq.s32.totalorder %s20, 0
      %p61 = por %p59, %p60
      %p62 = scmp.ne.s32.totalorder %s54, %s56
      %p63 = scmp.eq.s32.totalorder %s25, 1
      %p64 = por %p62, %p63
      %p65 = scmp.ne.s32.totalorder %s56, %s57
      %p66 = scmp.eq.s32.totalorder %s25, 0
      %p67 = por %p65, %p66
      %p68 = scmp.ne.s32.totalorder %s56, %s57
      %p69 = scmp.eq.s32.totalorder %s26, 1
      %p70 = por %p68, %p69
      %p72 = scmp.ne.s32.totalorder %s57, %s71
      %p73 = scmp.eq.s32.totalorder %s26, 0
      %p74 = por %p72, %p73
      %s76 = sadd.s32 %s75, 1
      %p79 = scmp.eq.s32.totalorder %s20, 1
      %p80 = scmp.ne.s32.totalorder %s75, %s77
      %p81 = scmp.eq.s32.totalorder %s20, 0
      %p82 = por %p80, %p81
      %p83 = scmp.ne.s32.totalorder %s75, %s77
      %p84 = scmp.eq.s32.totalorder %s25, 1
      %p85 = por %p83, %p84
      %p86 = scmp.ne.s32.totalorder %s77, %s78
      %p87 = scmp.eq.s32.totalorder %s25, 0
      %p88 = por %p86, %p87
      %p89 = scmp.ne.s32.totalorder %s77, %s78
      %p90 = scmp.eq.s32.totalorder %s26, 1
      %p91 = por %p89, %p90
      %p93 = scmp.ne.s32.totalorder %s78, %s92
      %p94 = scmp.eq.s32.totalorder %s26, 0
      %p95 = por %p93, %p94
      %s97 = sadd.s32 %s96, 1
      %p100 = scmp.eq.s32.totalorder %s20, 1
      %p101 = scmp.ne.s32.totalorder %s96, %s98
      %p102 = scmp.eq.s32.totalorder %s20, 0
      %p103 = por %p101, %p102
      %p104 = scmp.ne.s32.totalorder %s96, %s98
      %p105 = scmp.eq.s32.totalorder %s25, 1
      %p106 = por %p104, %p105
      %p107 = scmp.ne.s32.totalorder %s98, %s99
      %p108 = scmp.eq.s32.totalorder %s25, 0
      %p109 = por %p107, %p108
      %p110 = scmp.ne.s32.totalorder %s98, %s99
      %p111 = scmp.eq.s32.totalorder %s26, 1
      %p112 = por %p110, %p111
      %p114 = scmp.ne.s32.totalorder %s99, %s113
      %p115 = scmp.eq.s32.totalorder %s26, 0
      %p116 = por %p114, %p115
      %s118 = sadd.s32 %s117, 1
      %p121 = scmp.eq.s32.totalorder %s20, 1
      %p122 = scmp.ne.s32.totalorder %s117, %s119
      %p123 = scmp.eq.s32.totalorder %s20, 0
      %p124 = por %p122, %p123
      %p125 = scmp.ne.s32.totalorder %s117, %s119
      %p126 = scmp.eq.s32.totalorder %s25, 1
      %p127 = por %p125, %p126
      %p128 = scmp.ne.s32.totalorder %s119, %s120
      %p129 = scmp.eq.s32.totalorder %s25, 0
      %p130 = por %p128, %p129
      %p131 = scmp.ne.s32.totalorder %s119, %s120
      %p132 = scmp.eq.s32.totalorder %s26, 1
      %p133 = por %p131, %p132
      %p135 = scmp.ne.s32.totalorder %s120, %s134
      %p136 = scmp.eq.s32.totalorder %s26, 0
      %p137 = por %p135, %p136
      %s139 = sadd.s32 %s138, 1
      %p142 = scmp.eq.s32.totalorder %s20, 1
      %p143 = scmp.ne.s32.totalorder %s138, %s140
      %p144 = scmp.eq.s32.totalorder %s20, 0
      %p145 = por %p143, %p144
      %p146 = scmp.ne.s32.totalorder %s138, %s140
      %p147 = scmp.eq.s32.totalorder %s25, 1
      %p148 = por %p146, %p147
      %p149 = scmp.ne.s32.totalorder %s140, %s141
      %p150 = scmp.eq.s32.totalorder %s25, 0
      %p151 = por %p149, %p150
      %p152 = scmp.ne.s32.totalorder %s140, %s141
      %p153 = scmp.eq.s32.totalorder %s26, 1
      %p154 = por %p152, %p153
      %p156 = scmp.ne.s32.totalorder %s141, %s155
      %p157 = scmp.eq.s32.totalorder %s26, 0
      %p158 = por %p156, %p157
      %s160 = sadd.s32 %s159, 1
      %p163 = scmp.eq.s32.totalorder %s20, 1
      %p164 = scmp.ne.s32.totalorder %s159, %s161
      %p165 = scmp.eq.s32.totalorder %s20, 0
      %p166 = por %p164, %p165
      %p167 = scmp.ne.s32.totalorder %s159, %s161
      %p168 = scmp.eq.s32.totalorder %s25, 1
      %p169 = por %p167, %p168
      %p170 = scmp.ne.s32.totalorder %s161, %s162
      %p171 = scmp.eq.s32.totalorder %s25, 0
      %p172 = por %p170, %p171
      %p173 = scmp.ne.s32.totalorder %s161, %s162
      %p174 = scmp.eq.s32.totalorder %s26, 1
      %p175 = por %p173, %p174
      %p177 = scmp.ne.s32.totalorder %s162, %s176
      %p178 = scmp.eq.s32.totalorder %s26, 0
      %p179 = por %p177, %p178
      %s181 = sadd.s32 %s180, 1
      %p184 = scmp.eq.s32.totalorder %s20, 1
      %p185 = scmp.ne.s32.totalorder %s180, %s182
      %p186 = scmp.eq.s32.totalorder %s20, 0
      %p187 = por %p185, %p186
      %p188 = scmp.ne.s32.totalorder %s180, %s182
      %p189 = scmp.eq.s32.totalorder %s25, 1
      %p190 = por %p188, %p189
      %p191 = scmp.ne.s32.totalorder %s182, %s183
      %p192 = scmp.eq.s32.totalorder %s25, 0
      %p193 = por %p191, %p192
      %p194 = scmp.ne.s32.totalorder %s182, %s183
      %p195 = scmp.eq.s32.totalorder %s26, 1
      %p196 = por %p194, %p195
      %p198 = scmp.ne.s32.totalorder %s183, %s197
      %p199 = scmp.eq.s32.totalorder %s26, 0
      %p200 = por %p198, %p199
      %s202 = sadd.s32 %s201, 1
      %p205 = scmp.eq.s32.totalorder %s20, 1
      %p206 = scmp.ne.s32.totalorder %s201, %s203
      %p207 = scmp.eq.s32.totalorder %s20, 0
      %p208 = por %p206, %p207
      %p209 = scmp.ne.s32.totalorder %s201, %s203
      %p210 = scmp.eq.s32.totalorder %s25, 1
      %p211 = por %p209, %p210
      %p212 = scmp.ne.s32.totalorder %s203, %s204
      %p213 = scmp.eq.s32.totalorder %s25, 0
      %p214 = por %p212, %p213
      %p215 = scmp.ne.s32.totalorder %s203, %s204
      %p216 = scmp.eq.s32.totalorder %s26, 1
      %p217 = por %p215, %p216
      %p219 = scmp.ne.s32.totalorder %s204, %s218
      %p220 = scmp.eq.s32.totalorder %s26, 0
      %p221 = por %p219, %p220
      %s223 = sadd.s32 %s222, 1
      %p226 = scmp.eq.s32.totalorder %s20, 1
      %p227 = scmp.ne.s32.totalorder %s222, %s224
      %p228 = scmp.eq.s32.totalorder %s20, 0
      %p229 = por %p227, %p228
      %p230 = scmp.ne.s32.totalorder %s222, %s224
      %p231 = scmp.eq.s32.totalorder %s25, 1
      %p232 = por %p230, %p231
      %p233 = scmp.ne.s32.totalorder %s224, %s225
      %p234 = scmp.eq.s32.totalorder %s25, 0
      %p235 = por %p233, %p234
      %p236 = scmp.ne.s32.totalorder %s224, %s225
      %p237 = scmp.eq.s32.totalorder %s26, 1
      %p238 = por %p236, %p237
      %p240 = scmp.ne.s32.totalorder %s225, %s239
      %p241 = scmp.eq.s32.totalorder %s26, 0
      %p242 = por %p240, %p241
      %s244 = sadd.s32 %s243, 1
      %p247 = scmp.eq.s32.totalorder %s20, 1
      %p248 = scmp.ne.s32.totalorder %s243, %s245
      %p249 = scmp.eq.s32.totalorder %s20, 0
      %p250 = por %p248, %p249
      %p251 = scmp.ne.s32.totalorder %s243, %s245
      %p252 = scmp.eq.s32.totalorder %s25, 1
      %p253 = por %p251, %p252
      %p254 = scmp.ne.s32.totalorder %s245, %s246
      %p255 = scmp.eq.s32.totalorder %s25, 0
      %p256 = por %p254, %p255
      %p257 = scmp.ne.s32.totalorder %s245, %s246
      %p258 = scmp.eq.s32.totalorder %s26, 1
      %p259 = por %p257, %p258
      %p261 = scmp.ne.s32.totalorder %s246, %s260
      %p262 = scmp.eq.s32.totalorder %s26, 0
      %p263 = por %p261, %p262
      %s264 = ssub.s32 %s20, %s27
      %p265 = scmp.eq.s32.totalorder %s264, 0
      %s267 = sadd.s32 %s266, 1
      %s268 = scalar_select %p265, %s266, %s267
      %p271 = pneg %p265
      %p272 = scmp.eq.s32.totalorder %s20, 1
      %p273 = por %p271, %p272
      %p274 = scmp.ne.s32.totalorder %s266, %s269
      %p275 = scmp.eq.s32.totalorder %s20, 0
      %p276 = por %p274, %p275
      %p277 = scmp.ne.s32.totalorder %s266, %s269
      %p278 = scmp.eq.s32.totalorder %s25, 1
      %p279 = por %p277, %p278
      %p280 = scmp.ne.s32.totalorder %s269, %s270
      %p281 = scmp.eq.s32.totalorder %s25, 0
      %p282 = por %p280, %p281
      %p283 = scmp.ne.s32.totalorder %s269, %s270
      %p284 = scmp.eq.s32.totalorder %s26, 1
      %p285 = por %p283, %p284
      %p287 = scmp.ne.s32.totalorder %s270, %s286
      %p288 = scmp.eq.s32.totalorder %s26, 0
      %p289 = por %p287, %p288
      %p290 = scmp.le.s32.totalorder 1, %s20
      %p291 = scmp.lt.s32.totalorder %s20, 3
      %p292 = pnand %p290, %p291
      %p293 = pneg %p292
      // Predicated region
      $region9: #{tpu_custom_call.1} parent=5 // pred_check
        _
      $region10: #{tpu_custom_call.1} parent=5 // pred_check_branch
        %295 = sbr.rel (%p292) target = $region12
      $region11: #{tpu_custom_call.1} parent=5 // pred_region
        %s296 = ssub.s32 %s20, 1
        // Predicated region
        $region13: #{tpu_custom_call.1} parent=11 // pred_check
          %p297 = pneg %p67
        $region14: #{tpu_custom_call.1} parent=11 // pred_check_branch
          %299 = sbr.rel (%p297) target = $region16
        $region15: #{tpu_custom_call.1} parent=11 // pred_region
          _
        $region16: #{tpu_custom_call.1} parent=11 // pred_fallthru
          _
        // Predicated region
        $region17: #{tpu_custom_call.1} parent=11 // pred_check
          %p300 = pneg %p88
        $region18: #{tpu_custom_call.1} parent=11 // pred_check_branch
          %302 = sbr.rel (%p300) target = $region20
        $region19: #{tpu_custom_call.1} parent=11 // pred_region
          _
        $region20: #{tpu_custom_call.1} parent=11 // pred_fallthru
          _
        // Predicated region
        $region21: #{tpu_custom_call.1} parent=11 // pred_check
          %p303 = pneg %p109
        $region22: #{tpu_custom_call.1} parent=11 // pred_check_branch
          %305 = sbr.rel (%p303) target = $region24
        $region23: #{tpu_custom_call.1} parent=11 // pred_region
          _
        $region24: #{tpu_custom_call.1} parent=11 // pred_fallthru
          _
        // Predicated region
        $region25: #{tpu_custom_call.1} parent=11 // pred_check
          %p306 = pneg %p130
        $region26: #{tpu_custom_call.1} parent=11 // pred_check_branch
          %308 = sbr.rel (%p306) target = $region28
        $region27: #{tpu_custom_call.1} parent=11 // pred_region
          _
        $region28: #{tpu_custom_call.1} parent=11 // pred_fallthru
          _
        // Predicated region
        $region29: #{tpu_custom_call.1} parent=11 // pred_check
          %p309 = pneg %p151
        $region30: #{tpu_custom_call.1} parent=11 // pred_check_branch
          %311 = sbr.rel (%p309) target = $region32
        $region31: #{tpu_custom_call.1} parent=11 // pred_region
          _
        $region32: #{tpu_custom_call.1} parent=11 // pred_fallthru
          _
        // Predicated region
        $region33: #{tpu_custom_call.1} parent=11 // pred_check
          %p312 = pneg %p172
        $region34: #{tpu_custom_call.1} parent=11 // pred_check_branch
          %314 = sbr.rel (%p312) target = $region36
        $region35: #{tpu_custom_call.1} parent=11 // pred_region
          _
        $region36: #{tpu_custom_call.1} parent=11 // pred_fallthru
          _
        // Predicated region
        $region37: #{tpu_custom_call.1} parent=11 // pred_check
          %p315 = pneg %p193
        $region38: #{tpu_custom_call.1} parent=11 // pred_check_branch
          %317 = sbr.rel (%p315) target = $region40
        $region39: #{tpu_custom_call.1} parent=11 // pred_region
          _
        $region40: #{tpu_custom_call.1} parent=11 // pred_fallthru
          _
        // Predicated region
        $region41: #{tpu_custom_call.1} parent=11 // pred_check
          %p318 = pneg %p214
        $region42: #{tpu_custom_call.1} parent=11 // pred_check_branch
          %320 = sbr.rel (%p318) target = $region44
        $region43: #{tpu_custom_call.1} parent=11 // pred_region
          _
        $region44: #{tpu_custom_call.1} parent=11 // pred_fallthru
          _
        // Predicated region
        $region45: #{tpu_custom_call.1} parent=11 // pred_check
          %p321 = pneg %p235
        $region46: #{tpu_custom_call.1} parent=11 // pred_check_branch
          %323 = sbr.rel (%p321) target = $region48
        $region47: #{tpu_custom_call.1} parent=11 // pred_region
          _
        $region48: #{tpu_custom_call.1} parent=11 // pred_fallthru
          _
        // Predicated region
        $region49: #{tpu_custom_call.1} parent=11 // pred_check
          %p324 = pneg %p256
        $region50: #{tpu_custom_call.1} parent=11 // pred_check_branch
          %326 = sbr.rel (%p324) target = $region52
        $region51: #{tpu_custom_call.1} parent=11 // pred_region
          _
        $region52: #{tpu_custom_call.1} parent=11 // pred_fallthru
          _
      $region12: #{tpu_custom_call.1} parent=5 // pred_fallthru
        _
      %p327 = scmp.lt.s32.totalorder %s20, 2
      // Predicated region
      $region53: #{tpu_custom_call.1} parent=5 // pred_check
        %p328 = pneg %p327
      $region54: #{tpu_custom_call.1} parent=5 // pred_check_branch
        %330 = sbr.rel (%p328) target = $region56
      $region55: #{tpu_custom_call.1} parent=5 // pred_region
        // Predicated region
        $region57: #{tpu_custom_call.1} parent=55 // pred_check
          %p331 = pneg %p40
        $region58: #{tpu_custom_call.1} parent=55 // pred_check_branch
          %333 = sbr.rel (%p331) target = $region60
        $region59: #{tpu_custom_call.1} parent=55 // pred_region
          %p334 = scmp.lt.s32.totalorder %s20, 1
          %s335 = scalar_select %p334, %s20, 1
          %s336 = smul.addr %s335, 32
          %s337 = smul.addr %s336, 8
          %s338 = scalar_lea.vmem %s0, %s337
        $region60: #{tpu_custom_call.1} parent=55 // pred_fallthru
          _
      $region56: #{tpu_custom_call.1} parent=5 // pred_fallthru
        _
      %p339 = scmp.le.s32.totalorder 1, %s20
      %p340 = scmp.lt.s32.totalorder %s20, 3
      %p341 = pnand %p339, %p340
      %p342 = pneg %p341
      // Predicated region
      $region61: #{tpu_custom_call.1} parent=5 // pred_check
        _
      $region62: #{tpu_custom_call.1} parent=5 // pred_check_branch
        %344 = sbr.rel (%p341) target = $region64
      $region63: #{tpu_custom_call.1} parent=5 // pred_region
        %s345 = ssub.s32 %s20, 1
        %p346 = scmp.lt.s32.totalorder %s25, 1
        %s347 = scalar_select %p346, %s25, 1
        %s348 = smul.addr %s347, 32
        %s349 = smul.addr %s348, 8
        %s350 = scalar_lea.vmem %s0, %s349
        %p351 = pneg %p46
        %p352 = pneg %p43
        %p353 = pneg %p67
        %p354 = pneg %p64
        %p355 = pneg %p88
        %p356 = pneg %p85
        %p357 = pneg %p109
        %p358 = pneg %p106
        %p359 = pneg %p130
        %p360 = pneg %p127
        %p361 = pneg %p151
        %p362 = pneg %p148
        %p363 = pneg %p172
        %p364 = pneg %p169
        %p365 = pneg %p193
        %p366 = pneg %p190
        %p367 = pneg %p214
        %p368 = pneg %p211
        %p369 = pneg %p235
        %p370 = pneg %p232
        %p371 = pneg %p256
        %p372 = pneg %p253
        %p373 = pneg %p282
        %p374 = pneg %p279
        %s375 = sand.u32 %s269, 1
        %s376 = scalar_lea.sflag [#allocation3], %s375
        %s377 = sand.u32 %s269, 1
        %s378 = smul.addr %s377, 256
        %s379 = scalar_lea.vmem [#allocation2], %s378
        %p380 = scmp.lt.s32.totalorder %s25, 1
        %s381 = scalar_select %p380, %s25, 1
        %s382 = smul.addr %s381, 32
        %s383 = smul.addr %s382, 8
        %s384 = scalar_lea.vmem %s0, %s383
        %v385 = vld [vmem:[%s384] sm:$0xff]
        %v386 = vld [vmem:[%s384 + $0x8] sm:$0xff]
        %v387 = vld [vmem:[%s384 + $0x10] sm:$0xff]
        %v388 = vld [vmem:[%s384 + $0x18] sm:$0xff]
        %v389 = vld [vmem:[%s384 + $0x20] sm:$0xff]
        %v390 = vld [vmem:[%s384 + $0x28] sm:$0xff]
        %v391 = vld [vmem:[%s384 + $0x30] sm:$0xff]
        %v392 = vld [vmem:[%s384 + $0x38] sm:$0xff]
        %v393 = vld [vmem:[%s384 + $0x40] sm:$0xff]
        %v394 = vld [vmem:[%s384 + $0x48] sm:$0xff]
        %v395 = vld [vmem:[%s384 + $0x50] sm:$0xff]
        %v396 = vld [vmem:[%s384 + $0x58] sm:$0xff]
        %v397 = vld [vmem:[%s384 + $0x60] sm:$0xff]
        %v398 = vld [vmem:[%s384 + $0x68] sm:$0xff]
        %v399 = vld [vmem:[%s384 + $0x70] sm:$0xff]
        %v400 = vld [vmem:[%s384 + $0x78] sm:$0xff]
        %v401 = vld [vmem:[%s384 + $0x80] sm:$0xff]
        %v402 = vld [vmem:[%s384 + $0x88] sm:$0xff]
        %v403 = vld [vmem:[%s384 + $0x90] sm:$0xff]
        %v404 = vld [vmem:[%s384 + $0x98] sm:$0xff]
        %v405 = vld [vmem:[%s384 + $0xa0] sm:$0xff]
        %v406 = vld [vmem:[%s384 + $0xa8] sm:$0xff]
        %v407 = vld [vmem:[%s384 + $0xb0] sm:$0xff]
        %v408 = vld [vmem:[%s384 + $0xb8] sm:$0xff]
        %v409 = vld [vmem:[%s384 + $0xc0] sm:$0xff]
        %v410 = vld [vmem:[%s384 + $0xc8] sm:$0xff]
        %v411 = vld [vmem:[%s384 + $0xd0] sm:$0xff]
        %v412 = vld [vmem:[%s384 + $0xd8] sm:$0xff]
        %v413 = vld [vmem:[%s384 + $0xe0] sm:$0xff]
        %v414 = vld [vmem:[%s384 + $0xe8] sm:$0xff]
        %v415 = vld [vmem:[%s384 + $0xf0] sm:$0xff]
        %v416 = vld [vmem:[%s384 + $0xf8] sm:$0xff]
        %vm417 = vcmask 31744
        %v418 = vsel %vm417, %v385, 0.0
        %v419 = vsel %vm417, %v386, 0.0
        %v420 = vadd.f32 %v418, %v419
        %v421 = vsel %vm417, %v387, 0.0
        %v422 = vadd.f32 %v420, %v421
        %v423 = vsel %vm417, %v388, 0.0
        %v424 = vadd.f32 %v422, %v423
        %v425 = vsel %vm417, %v389, 0.0
        %v426 = vadd.f32 %v424, %v425
        %v427 = vsel %vm417, %v390, 0.0
        %v428 = vadd.f32 %v426, %v427
        %v429 = vsel %vm417, %v391, 0.0
        %v430 = vadd.f32 %v428, %v429
        %v431 = vsel %vm417, %v392, 0.0
        %v432 = vadd.f32 %v430, %v431
        %v433 = vsel %vm417, %v393, 0.0
        %v434 = vadd.f32 %v432, %v433
        %v435 = vsel %vm417, %v394, 0.0
        %v436 = vadd.f32 %v434, %v435
        %v437 = vsel %vm417, %v395, 0.0
        %v438 = vadd.f32 %v436, %v437
        %v439 = vsel %vm417, %v396, 0.0
        %v440 = vadd.f32 %v438, %v439
        %v441 = vsel %vm417, %v397, 0.0
        %v442 = vadd.f32 %v440, %v441
        %v443 = vsel %vm417, %v398, 0.0
        %v444 = vadd.f32 %v442, %v443
        %v445 = vsel %vm417, %v399, 0.0
        %v446 = vadd.f32 %v444, %v445
        %v447 = vsel %vm417, %v400, 0.0
        %v448 = vadd.f32 %v446, %v447
        %v449 = vsel %vm417, %v401, 0.0
        %v450 = vadd.f32 %v448, %v449
        %v451 = vsel %vm417, %v402, 0.0
        %v452 = vadd.f32 %v450, %v451
        %v453 = vsel %vm417, %v403, 0.0
        %v454 = vadd.f32 %v452, %v453
        %v455 = vsel %vm417, %v404, 0.0
        %v456 = vadd.f32 %v454, %v455
        %v457 = vsel %vm417, %v405, 0.0
        %v458 = vadd.f32 %v456, %v457
        %v459 = vsel %vm417, %v406, 0.0
        %v460 = vadd.f32 %v458, %v459
        %v461 = vsel %vm417, %v407, 0.0
        %v462 = vadd.f32 %v460, %v461
        %v463 = vsel %vm417, %v408, 0.0
        %v464 = vadd.f32 %v462, %v463
        %v465 = vsel %vm417, %v409, 0.0
        %v466 = vadd.f32 %v464, %v465
        %v467 = vsel %vm417, %v410, 0.0
        %v468 = vadd.f32 %v466, %v467
        %v469 = vsel %vm417, %v411, 0.0
        %v470 = vadd.f32 %v468, %v469
        %v471 = vsel %vm417, %v412, 0.0
        %v472 = vadd.f32 %v470, %v471
        %v473 = vsel %vm417, %v413, 0.0
        %v474 = vadd.f32 %v472, %v473
        %v475 = vsel %vm417, %v414, 0.0
        %v476 = vadd.f32 %v474, %v475
        %v477 = vsel %vm417, %v415, 0.0
        %v478 = vadd.f32 %v476, %v477
        %v479 = vsel %vm417, %v416, 0.0
        %v480 = vadd.f32 %v478, %v479
        %v481 = vrot.slane %v480, 4
        %v482 = vadd.f32 %v480, %v481
        %v483 = vrot.slane %v482, 2
        %v484 = vadd.f32 %v482, %v483
        %v485 = vrot.slane %v484, 1
        %v486 = vadd.f32 %v484, %v485
        %v487 = vrcp.pop 256.0
        %v488 = vmul.f32 %v486, %v487
        %v489 = vld [vmem:[%s1] sm:$0xf]
        %v491 = vsel %vm417, %v488, 0
        %vm493 = vcmask 1043456
        %v495 = vsel %vm493, %v489, 0
        %497 = vmatprep.subr.mxu0 0.0
        %498 = vmatpush1.msra.mxu0 %v495
        %499 = vmatprep.subr.mxu0 0.0
        %500 = vmatpush1.msra.mxu0 0.0
        %501 = vmatprep.subr.mxu0 0.0
        %502 = vmatpush1.msra.mxu0 0.0
        %503 = vmatprep.subr.mxu0 0.0
        %504 = vmatpush1.msra.mxu0 0.0
        %505 = vmatprep.subr.mxu0 0.0
        %506 = vmatpush1.msra.mxu0 0.0
        %507 = vmatprep.subr.mxu0 0.0
        %508 = vmatpush1.msra.mxu0 0.0
        %509 = vmatprep.subr.mxu0 0.0
        %510 = vmatpush1.msra.mxu0 0.0
        %511 = vmatprep.subr.mxu0 0.0
        %512 = vmatpush1.msra.mxu0 0.0
        %513 = vmatprep.subr.mxu0 0.0
        %514 = vmatpush1.msra.mxu0 0.0
        %515 = vmatprep.subr.mxu0 0.0
        %516 = vmatpush1.msra.mxu0 0.0
        %517 = vmatprep.subr.mxu0 0.0
        %518 = vmatpush1.msra.mxu0 0.0
        %519 = vmatprep.subr.mxu0 0.0
        %520 = vmatpush1.msra.mxu0 0.0
        %521 = vmatprep.subr.mxu0 0.0
        %522 = vmatpush1.msra.mxu0 0.0
        %523 = vmatprep.subr.mxu0 0.0
        %524 = vmatpush1.msra.mxu0 0.0
        %525 = vmatprep.subr.mxu0 0.0
        %526 = vmatpush1.msra.mxu0 0.0
        %527 = vmatprep.subr.mxu0 0.0
        %528 = vmatpush1.msra.mxu0 0.0
        %529 = vmatprep.subr.mxu0 0.0
        %530 = vmatpush1.msra.mxu0 0.0
        %531 = vmatprep.subr.mxu0 0.0
        %532 = vmatpush1.msra.mxu0 0.0
        %533 = vmatprep.subr.mxu0 0.0
        %534 = vmatpush1.msra.mxu0 0.0
        %535 = vmatprep.subr.mxu0 0.0
        %536 = vmatpush1.msra.mxu0 0.0
        %537 = vmatprep.subr.mxu0 0.0
        %538 = vmatpush1.msra.mxu0 0.0
        %539 = vmatprep.subr.mxu0 0.0
        %540 = vmatpush1.msra.mxu0 0.0
        %541 = vmatprep.subr.mxu0 0.0
        %542 = vmatpush1.msra.mxu0 0.0
        %543 = vmatprep.subr.mxu0 0.0
        %544 = vmatpush1.msra.mxu0 0.0
        %545 = vmatprep.subr.mxu0 0.0
        %546 = vmatpush1.msra.mxu0 0.0
        %547 = vmatprep.subr.mxu0 0.0
        %548 = vmatpush1.msra.mxu0 0.0
        %549 = vmatprep.subr.mxu0 0.0
        %550 = vmatpush1.msra.mxu0 0.0
        %551 = vmatprep.subr.mxu0 0.0
        %552 = vmatpush1.msra.mxu0 0.0
        %553 = vmatprep.subr.mxu0 0.0
        %554 = vmatpush1.msra.mxu0 0.0
        %555 = vmatprep.subr.mxu0 0.0
        %556 = vmatpush1.msra.mxu0 0.0
        %557 = vmatprep.subr.mxu0 0.0
        %558 = vmatpush1.msra.mxu0 0.0
        %559 = vmatprep.subr.mxu0 0.0
        %560 = vmatpush1.msra.mxu0 0.0
        %561 = vmatprep.mubr.f32.mxu0 0.0
        %562 = vmatmul.mubr.f32.gmra.mrb[0].mxu0 %v491
        %v563 = vpop.f32.mrb[0].mxu0
        %v564 = vadd.f32 0.0, %v563
        %v565 = vpop.f32.mrb[0].mxu0
        %566 = vdwg.mxu0
        %v567 = vld [vmem:[%s7] sm:$0x1]
        %v568 = vld [vmem:[%s8] sm:$0x1]
        %v569 = vmul.f32 %v564, %v567
        %v570 = vadd.f32 %v569, %v568
        %vm571 = vcmp.ge.f32.partialorder %v570, 0.0
        %v572 = vmul.f32 %v570, 0.01
        %v573 = vsel %vm571, %v570, %v572
        %v574 = vld [vmem:[%s6] sm:$0xff]
        %vm575 = vcmask 64512
        %v577 = vsel %vm575, %v573, 0
        %579 = vmatprep.subr.mxu0 0.0
        %580 = vmatpush1.msra.mxu0 %v574
        %581 = vmatprep.subr.mxu0 0.0
        %582 = vmatpush1.msra.mxu0 0.0
        %583 = vmatprep.subr.mxu0 0.0
        %584 = vmatpush1.msra.mxu0 0.0
        %585 = vmatprep.subr.mxu0 0.0
        %586 = vmatpush1.msra.mxu0 0.0
        %587 = vmatprep.subr.mxu0 0.0
        %588 = vmatpush1.msra.mxu0 0.0
        %589 = vmatprep.subr.mxu0 0.0
        %590 = vmatpush1.msra.mxu0 0.0
        %591 = vmatprep.subr.mxu0 0.0
        %592 = vmatpush1.msra.mxu0 0.0
        %593 = vmatprep.subr.mxu0 0.0
        %594 = vmatpush1.msra.mxu0 0.0
        %595 = vmatprep.subr.mxu0 0.0
        %596 = vmatpush1.msra.mxu0 0.0
        %597 = vmatprep.subr.mxu0 0.0
        %598 = vmatpush1.msra.mxu0 0.0
        %599 = vmatprep.subr.mxu0 0.0
        %600 = vmatpush1.msra.mxu0 0.0
        %601 = vmatprep.subr.mxu0 0.0
        %602 = vmatpush1.msra.mxu0 0.0
        %603 = vmatprep.subr.mxu0 0.0
        %604 = vmatpush1.msra.mxu0 0.0
        %605 = vmatprep.subr.mxu0 0.0
        %606 = vmatpush1.msra.mxu0 0.0
        %607 = vmatprep.subr.mxu0 0.0
        %608 = vmatpush1.msra.mxu0 0.0
        %609 = vmatprep.subr.mxu0 0.0
        %610 = vmatpush1.msra.mxu0 0.0
        %611 = vmatprep.subr.mxu0 0.0
        %612 = vmatpush1.msra.mxu0 0.0
        %613 = vmatprep.subr.mxu0 0.0
        %614 = vmatpush1.msra.mxu0 0.0
        %615 = vmatprep.subr.mxu0 0.0
        %616 = vmatpush1.msra.mxu0 0.0
        %617 = vmatprep.subr.mxu0 0.0
        %618 = vmatpush1.msra.mxu0 0.0
        %619 = vmatprep.subr.mxu0 0.0
        %620 = vmatpush1.msra.mxu0 0.0
        %621 = vmatprep.subr.mxu0 0.0
        %622 = vmatpush1.msra.mxu0 0.0
        %623 = vmatprep.subr.mxu0 0.0
        %624 = vmatpush1.msra.mxu0 0.0
        %625 = vmatprep.subr.mxu0 0.0
        %626 = vmatpush1.msra.mxu0 0.0
        %627 = vmatprep.subr.mxu0 0.0
        %628 = vmatpush1.msra.mxu0 0.0
        %629 = vmatprep.subr.mxu0 0.0
        %630 = vmatpush1.msra.mxu0 0.0
        %631 = vmatprep.subr.mxu0 0.0
        %632 = vmatpush1.msra.mxu0 0.0
        %633 = vmatprep.subr.mxu0 0.0
        %634 = vmatpush1.msra.mxu0 0.0
        %635 = vmatprep.subr.mxu0 0.0
        %636 = vmatpush1.msra.mxu0 0.0
        %637 = vmatprep.subr.mxu0 0.0
        %638 = vmatpush1.msra.mxu0 0.0
        %639 = vmatprep.subr.mxu0 0.0
        %640 = vmatpush1.msra.mxu0 0.0
        %641 = vmatprep.subr.mxu0 0.0
        %642 = vmatpush1.msra.mxu0 0.0
        %643 = vmatprep.mubr.f32.mxu0 0.0
        %644 = vmatmul.mubr.f32.gmra.mrb[0].mxu0 %v577
        %v645 = vpop.f32.mrb[0].mxu0
        %v646 = vadd.f32 0.0, %v645
        %v647 = vpop.f32.mrb[0].mxu0
        %648 = vdwg.mxu0
        %v649 = vld [vmem:[%s2] sm:$0xf]
        %v651 = vsel %vm417, %v385, 0
        %v654 = vsel %vm417, %v386, 0
        %v657 = vsel %vm417, %v387, 0
        %v660 = vsel %vm417, %v388, 0
        %v663 = vsel %vm417, %v389, 0
        %v666 = vsel %vm417, %v390, 0
        %v669 = vsel %vm417, %v391, 0
        %v672 = vsel %vm417, %v392, 0
        %v675 = vsel %vm417, %v393, 0
        %v678 = vsel %vm417, %v394, 0
        %v681 = vsel %vm417, %v395, 0
        %v684 = vsel %vm417, %v396, 0
        %v687 = vsel %vm417, %v397, 0
        %v690 = vsel %vm417, %v398, 0
        %v693 = vsel %vm417, %v399, 0
        %v696 = vsel %vm417, %v400, 0
        %v699 = vsel %vm417, %v401, 0
        %v702 = vsel %vm417, %v402, 0
        %v705 = vsel %vm417, %v403, 0
        %v708 = vsel %vm417, %v404, 0
        %v711 = vsel %vm417, %v405, 0
        %v714 = vsel %vm417, %v406, 0
        %v717 = vsel %vm417, %v407, 0
        %v720 = vsel %vm417, %v408, 0
        %v723 = vsel %vm417, %v409, 0
        %v726 = vsel %vm417, %v410, 0
        %v729 = vsel %vm417, %v411, 0
        %v732 = vsel %vm417, %v412, 0
        %v735 = vsel %vm417, %v413, 0
        %v738 = vsel %vm417, %v414, 0
        %v741 = vsel %vm417, %v415, 0
        %v744 = vsel %vm417, %v416, 0
        %v747 = vsel %vm493, %v649, 0
        %749 = vmatprep.subr.mxu0 0.0
        %750 = vmatpush1.msra.mxu0 %v747
        %751 = vmatprep.subr.mxu0 0.0
        %752 = vmatpush1.msra.mxu0 0.0
        %753 = vmatprep.subr.mxu0 0.0
        %754 = vmatpush1.msra.mxu0 0.0
        %755 = vmatprep.subr.mxu0 0.0
        %756 = vmatpush1.msra.mxu0 0.0
        %757 = vmatprep.subr.mxu0 0.0
        %758 = vmatpush1.msra.mxu0 0.0
        %759 = vmatprep.subr.mxu0 0.0
        %760 = vmatpush1.msra.mxu0 0.0
        %761 = vmatprep.subr.mxu0 0.0
        %762 = vmatpush1.msra.mxu0 0.0
        %763 = vmatprep.subr.mxu0 0.0
        %764 = vmatpush1.msra.mxu0 0.0
        %765 = vmatprep.subr.mxu0 0.0
        %766 = vmatpush1.msra.mxu0 0.0
        %767 = vmatprep.subr.mxu0 0.0
        %768 = vmatpush1.msra.mxu0 0.0
        %769 = vmatprep.subr.mxu0 0.0
        %770 = vmatpush1.msra.mxu0 0.0
        %771 = vmatprep.subr.mxu0 0.0
        %772 = vmatpush1.msra.mxu0 0.0
        %773 = vmatprep.subr.mxu0 0.0
        %774 = vmatpush1.msra.mxu0 0.0
        %775 = vmatprep.subr.mxu0 0.0
        %776 = vmatpush1.msra.mxu0 0.0
        %777 = vmatprep.subr.mxu0 0.0
        %778 = vmatpush1.msra.mxu0 0.0
        %779 = vmatprep.subr.mxu0 0.0
        %780 = vmatpush1.msra.mxu0 0.0
        %781 = vmatprep.subr.mxu0 0.0
        %782 = vmatpush1.msra.mxu0 0.0
        %783 = vmatprep.subr.mxu0 0.0
        %784 = vmatpush1.msra.mxu0 0.0
        %785 = vmatprep.subr.mxu0 0.0
        %786 = vmatpush1.msra.mxu0 0.0
        %787 = vmatprep.subr.mxu0 0.0
        %788 = vmatpush1.msra.mxu0 0.0
        %789 = vmatprep.subr.mxu0 0.0
        %790 = vmatpush1.msra.mxu0 0.0
        %791 = vmatprep.subr.mxu0 0.0
        %792 = vmatpush1.msra.mxu0 0.0
        %793 = vmatprep.subr.mxu0 0.0
        %794 = vmatpush1.msra.mxu0 0.0
        %795 = vmatprep.subr.mxu0 0.0
        %796 = vmatpush1.msra.mxu0 0.0
        %797 = vmatprep.subr.mxu0 0.0
        %798 = vmatpush1.msra.mxu0 0.0
        %799 = vmatprep.subr.mxu0 0.0
        %800 = vmatpush1.msra.mxu0 0.0
        %801 = vmatprep.subr.mxu0 0.0
        %802 = vmatpush1.msra.mxu0 0.0
        %803 = vmatprep.subr.mxu0 0.0
        %804 = vmatpush1.msra.mxu0 0.0
        %805 = vmatprep.subr.mxu0 0.0
        %806 = vmatpush1.msra.mxu0 0.0
        %807 = vmatprep.subr.mxu0 0.0
        %808 = vmatpush1.msra.mxu0 0.0
        %809 = vmatprep.subr.mxu0 0.0
        %810 = vmatpush1.msra.mxu0 0.0
        %811 = vmatprep.subr.mxu0 0.0
        %812 = vmatpush1.msra.mxu0 0.0
        %813 = vmatprep.mubr.f32.mxu0 0.0
        %814 = vmatmul.mubr.f32.gmra.mrb[0].mxu0 %v651
        %v815 = vpop.f32.mrb[0].mxu0
        %v816 = vadd.f32 0.0, %v815
        %v817 = vpop.f32.mrb[0].mxu0
        %818 = vmatprep.mubr.f32.mxu0 0.0
        %819 = vmatmul.mubr.f32.gmra.mrb[0].mxu0 %v654
        %v820 = vpop.f32.mrb[0].mxu0
        %v821 = vadd.f32 0.0, %v820
        %v822 = vpop.f32.mrb[0].mxu0
        %823 = vmatprep.mubr.f32.mxu0 0.0
        %824 = vmatmul.mubr.f32.gmra.mrb[0].mxu0 %v657
        %v825 = vpop.f32.mrb[0].mxu0
        %v826 = vadd.f32 0.0, %v825
        %v827 = vpop.f32.mrb[0].mxu0
        %828 = vmatprep.mubr.f32.mxu0 0.0
        %829 = vmatmul.mubr.f32.gmra.mrb[0].mxu0 %v660
        %v830 = vpop.f32.mrb[0].mxu0
        %v831 = vadd.f32 0.0, %v830
        %v832 = vpop.f32.mrb[0].mxu0
        %833 = vmatprep.mubr.f32.mxu0 0.0
        %834 = vmatmul.mubr.f32.gmra.mrb[0].mxu0 %v663
        %v835 = vpop.f32.mrb[0].mxu0
        %v836 = vadd.f32 0.0, %v835
        %v837 = vpop.f32.mrb[0].mxu0
        %838 = vmatprep.mubr.f32.mxu0 0.0
        %839 = vmatmul.mubr.f32.gmra.mrb[0].mxu0 %v666
        %v840 = vpop.f32.mrb[0].mxu0
        %v841 = vadd.f32 0.0, %v840
        %v842 = vpop.f32.mrb[0].mxu0
        %843 = vmatprep.mubr.f32.mxu0 0.0
        %844 = vmatmul.mubr.f32.gmra.mrb[0].mxu0 %v669
        %v845 = vpop.f32.mrb[0].mxu0
        %v846 = vadd.f32 0.0, %v845
        %v847 = vpop.f32.mrb[0].mxu0
        %848 = vmatprep.mubr.f32.mxu0 0.0
        %849 = vmatmul.mubr.f32.gmra.mrb[0].mxu0 %v672
        %v850 = vpop.f32.mrb[0].mxu0
        %v851 = vadd.f32 0.0, %v850
        %v852 = vpop.f32.mrb[0].mxu0
        %853 = vmatprep.mubr.f32.mxu0 0.0
        %854 = vmatmul.mubr.f32.gmra.mrb[0].mxu0 %v675
        %v855 = vpop.f32.mrb[0].mxu0
        %v856 = vadd.f32 0.0, %v855
        %v857 = vpop.f32.mrb[0].mxu0
        %858 = vmatprep.mubr.f32.mxu0 0.0
        %859 = vmatmul.mubr.f32.gmra.mrb[0].mxu0 %v678
        %v860 = vpop.f32.mrb[0].mxu0
        %v861 = vadd.f32 0.0, %v860
        %v862 = vpop.f32.mrb[0].mxu0
        %863 = vmatprep.mubr.f32.mxu0 0.0
        %864 = vmatmul.mubr.f32.gmra.mrb[0].mxu0 %v681
        %v865 = vpop.f32.mrb[0].mxu0
        %v866 = vadd.f32 0.0, %v865
        %v867 = vpop.f32.mrb[0].mxu0
        %868 = vmatprep.mubr.f32.mxu0 0.0
        %869 = vmatmul.mubr.f32.gmra.mrb[0].mxu0 %v684
        %v870 = vpop.f32.mrb[0].mxu0
        %v871 = vadd.f32 0.0, %v870
        %v872 = vpop.f32.mrb[0].mxu0
        %873 = vmatprep.mubr.f32.mxu0 0.0
        %874 = vmatmul.mubr.f32.gmra.mrb[0].mxu0 %v687
        %v875 = vpop.f32.mrb[0].mxu0
        %v876 = vadd.f32 0.0, %v875
        %v877 = vpop.f32.mrb[0].mxu0
        %878 = vmatprep.mubr.f32.mxu0 0.0
        %879 = vmatmul.mubr.f32.gmra.mrb[0].mxu0 %v690
        %v880 = vpop.f32.mrb[0].mxu0
        %v881 = vadd.f32 0.0, %v880
        %v882 = vpop.f32.mrb[0].mxu0
        %883 = vmatprep.mubr.f32.mxu0 0.0
        %884 = vmatmul.mubr.f32.gmra.mrb[0].mxu0 %v693
        %v885 = vpop.f32.mrb[0].mxu0
        %v886 = vadd.f32 0.0, %v885
        %v887 = vpop.f32.mrb[0].mxu0
        %888 = vmatprep.mubr.f32.mxu0 0.0
        %889 = vmatmul.mubr.f32.gmra.mrb[0].mxu0 %v696
        %v890 = vpop.f32.mrb[0].mxu0
        %v891 = vadd.f32 0.0, %v890
        %v892 = vpop.f32.mrb[0].mxu0
        %893 = vmatprep.mubr.f32.mxu0 0.0
        %894 = vmatmul.mubr.f32.gmra.mrb[0].mxu0 %v699
        %v895 = vpop.f32.mrb[0].mxu0
        %v896 = vadd.f32 0.0, %v895
        %v897 = vpop.f32.mrb[0].mxu0
        %898 = vmatprep.mubr.f32.mxu0 0.0
        %899 = vmatmul.mubr.f32.gmra.mrb[0].mxu0 %v702
        %v900 = vpop.f32.mrb[0].mxu0
        %v901 = vadd.f32 0.0, %v900
        %v902 = vpop.f32.mrb[0].mxu0
        %903 = vmatprep.mubr.f32.mxu0 0.0
        %904 = vmatmul.mubr.f32.gmra.mrb[0].mxu0 %v705
        %v905 = vpop.f32.mrb[0].mxu0
        %v906 = vadd.f32 0.0, %v905
        %v907 = vpop.f32.mrb[0].mxu0
        %908 = vmatprep.mubr.f32.mxu0 0.0
        %909 = vmatmul.mubr.f32.gmra.mrb[0].mxu0 %v708
        %v910 = vpop.f32.mrb[0].mxu0
        %v911 = vadd.f32 0.0, %v910
        %v912 = vpop.f32.mrb[0].mxu0
        %913 = vmatprep.mubr.f32.mxu0 0.0
        %914 = vmatmul.mubr.f32.gmra.mrb[0].mxu0 %v711
        %v915 = vpop.f32.mrb[0].mxu0
        %v916 = vadd.f32 0.0, %v915
        %v917 = vpop.f32.mrb[0].mxu0
        %918 = vmatprep.mubr.f32.mxu0 0.0
        %919 = vmatmul.mubr.f32.gmra.mrb[0].mxu0 %v714
        %v920 = vpop.f32.mrb[0].mxu0
        %v921 = vadd.f32 0.0, %v920
        %v922 = vpop.f32.mrb[0].mxu0
        %923 = vmatprep.mubr.f32.mxu0 0.0
        %924 = vmatmul.mubr.f32.gmra.mrb[0].mxu0 %v717
        %v925 = vpop.f32.mrb[0].mxu0
        %v926 = vadd.f32 0.0, %v925
        %v927 = vpop.f32.mrb[0].mxu0
        %928 = vmatprep.mubr.f32.mxu0 0.0
        %929 = vmatmul.mubr.f32.gmra.mrb[0].mxu0 %v720
        %v930 = vpop.f32.mrb[0].mxu0
        %v931 = vadd.f32 0.0, %v930
        %v932 = vpop.f32.mrb[0].mxu0
        %933 = vmatprep.mubr.f32.mxu0 0.0
        %934 = vmatmul.mubr.f32.gmra.mrb[0].mxu0 %v723
        %v935 = vpop.f32.mrb[0].mxu0
        %v936 = vadd.f32 0.0, %v935
        %v937 = vpop.f32.mrb[0].mxu0
        %938 = vmatprep.mubr.f32.mxu0 0.0
        %939 = vmatmul.mubr.f32.gmra.mrb[0].mxu0 %v726
        %v940 = vpop.f32.mrb[0].mxu0
        %v941 = vadd.f32 0.0, %v940
        %v942 = vpop.f32.mrb[0].mxu0
        %943 = vmatprep.mubr.f32.mxu0 0.0
        %944 = vmatmul.mubr.f32.gmra.mrb[0].mxu0 %v729
        %v945 = vpop.f32.mrb[0].mxu0
        %v946 = vadd.f32 0.0, %v945
        %v947 = vpop.f32.mrb[0].mxu0
        %948 = vmatprep.mubr.f32.mxu0 0.0
        %949 = vmatmul.mubr.f32.gmra.mrb[0].mxu0 %v732
        %v950 = vpop.f32.mrb[0].mxu0
        %v951 = vadd.f32 0.0, %v950
        %v952 = vpop.f32.mrb[0].mxu0
        %953 = vmatprep.mubr.f32.mxu0 0.0
        %954 = vmatmul.mubr.f32.gmra.mrb[0].mxu0 %v735
        %v955 = vpop.f32.mrb[0].mxu0
        %v956 = vadd.f32 0.0, %v955
        %v957 = vpop.f32.mrb[0].mxu0
        %958 = vmatprep.mubr.f32.mxu0 0.0
        %959 = vmatmul.mubr.f32.gmra.mrb[0].mxu0 %v738
        %v960 = vpop.f32.mrb[0].mxu0
        %v961 = vadd.f32 0.0, %v960
        %v962 = vpop.f32.mrb[0].mxu0
        %963 = vmatprep.mubr.f32.mxu0 0.0
        %964 = vmatmul.mubr.f32.gmra.mrb[0].mxu0 %v741
        %v965 = vpop.f32.mrb[0].mxu0
        %v966 = vadd.f32 0.0, %v965
        %v967 = vpop.f32.mrb[0].mxu0
        %968 = vmatprep.mubr.f32.mxu0 0.0
        %969 = vmatmul.mubr.f32.gmra.mrb[0].mxu0 %v744
        %v970 = vpop.f32.mrb[0].mxu0
        %v971 = vadd.f32 0.0, %v970
        %v972 = vpop.f32.mrb[0].mxu0
        %973 = vdwg.mxu0
        %v974 = vld [vmem:[%s7 + $0x1] sm:$0x1]
        %v975 = vld [vmem:[%s8 + $0x1] sm:$0x1]
        %v976 = vlaneseq
        %v977 = vshrl.u32 %v976, 7
        %v978 = vsub.s32 0, %v977
        %v979 = vrot.slane %v974, %v978
        %v980 = vmul.f32 %v816, %v979
        %v981 = vmul.f32 %v821, %v979
        %v982 = vmul.f32 %v826, %v979
        %v983 = vmul.f32 %v831, %v979
        %v984 = vmul.f32 %v836, %v979
        %v985 = vmul.f32 %v841, %v979
        %v986 = vmul.f32 %v846, %v979
        %v987 = vmul.f32 %v851, %v979
        %v988 = vmul.f32 %v856, %v979
        %v989 = vmul.f32 %v861, %v979
        %v990 = vmul.f32 %v866, %v979
        %v991 = vmul.f32 %v871, %v979
        %v992 = vmul.f32 %v876, %v979
        %v993 = vmul.f32 %v881, %v979
        %v994 = vmul.f32 %v886, %v979
        %v995 = vmul.f32 %v891, %v979
        %v996 = vmul.f32 %v896, %v979
        %v997 = vmul.f32 %v901, %v979
        %v998 = vmul.f32 %v906, %v979
        %v999 = vmul.f32 %v911, %v979
        %v1000 = vmul.f32 %v916, %v979
        %v1001 = vmul.f32 %v921, %v979
        %v1002 = vmul.f32 %v926, %v979
        %v1003 = vmul.f32 %v931, %v979
        %v1004 = vmul.f32 %v936, %v979
        %v1005 = vmul.f32 %v941, %v979
        %v1006 = vmul.f32 %v946, %v979
        %v1007 = vmul.f32 %v951, %v979
        %v1008 = vmul.f32 %v956, %v979
        %v1009 = vmul.f32 %v961, %v979
        %v1010 = vmul.f32 %v966, %v979
        %v1011 = vmul.f32 %v971, %v979
        %v1012 = vlaneseq
        %v1013 = vshrl.u32 %v1012, 7
        %v1014 = vsub.s32 0, %v1013
        %v1015 = vrot.slane %v975, %v1014
        %v1016 = vadd.f32 %v980, %v1015
        %v1017 = vadd.f32 %v981, %v1015
        %v1018 = vadd.f32 %v982, %v1015
        %v1019 = vadd.f32 %v983, %v1015
        %v1020 = vadd.f32 %v984, %v1015
        %v1021 = vadd.f32 %v985, %v1015
        %v1022 = vadd.f32 %v986, %v1015
        %v1023 = vadd.f32 %v987, %v1015
        %v1024 = vadd.f32 %v988, %v1015
        %v1025 = vadd.f32 %v989, %v1015
        %v1026 = vadd.f32 %v990, %v1015
        %v1027 = vadd.f32 %v991, %v1015
        %v1028 = vadd.f32 %v992, %v1015
        %v1029 = vadd.f32 %v993, %v1015
        %v1030 = vadd.f32 %v994, %v1015
        %v1031 = vadd.f32 %v995, %v1015
        %v1032 = vadd.f32 %v996, %v1015
        %v1033 = vadd.f32 %v997, %v1015
        %v1034 = vadd.f32 %v998, %v1015
        %v1035 = vadd.f32 %v999, %v1015
        %v1036 = vadd.f32 %v1000, %v1015
        %v1037 = vadd.f32 %v1001, %v1015
        %v1038 = vadd.f32 %v1002, %v1015
        %v1039 = vadd.f32 %v1003, %v1015
        %v1040 = vadd.f32 %v1004, %v1015
        %v1041 = vadd.f32 %v1005, %v1015
        %v1042 = vadd.f32 %v1006, %v1015
        %v1043 = vadd.f32 %v1007, %v1015
        %v1044 = vadd.f32 %v1008, %v1015
        %v1045 = vadd.f32 %v1009, %v1015
        %v1046 = vadd.f32 %v1010, %v1015
        %v1047 = vadd.f32 %v1011, %v1015
        %vm1048 = vcmp.ge.f32.partialorder %v1016, 0.0
        %vm1049 = vcmp.ge.f32.partialorder %v1017, 0.0
        %vm1050 = vcmp.ge.f32.partialorder %v1018, 0.0
        %vm1051 = vcmp.ge.f32.partialorder %v1019, 0.0
        %vm1052 = vcmp.ge.f32.partialorder %v1020, 0.0
        %vm1053 = vcmp.ge.f32.partialorder %v1021, 0.0
        %vm1054 = vcmp.ge.f32.partialorder %v1022, 0.0
        %vm1055 = vcmp.ge.f32.partialorder %v1023, 0.0
        %vm1056 = vcmp.ge.f32.partialorder %v1024, 0.0
        %vm1057 = vcmp.ge.f32.partialorder %v1025, 0.0
        %vm1058 = vcmp.ge.f32.partialorder %v1026, 0.0
        %vm1059 = vcmp.ge.f32.partialorder %v1027, 0.0
        %vm1060 = vcmp.ge.f32.partialorder %v1028, 0.0
        %vm1061 = vcmp.ge.f32.partialorder %v1029, 0.0
        %vm1062 = vcmp.ge.f32.partialorder %v1030, 0.0
        %vm1063 = vcmp.ge.f32.partialorder %v1031, 0.0
        %vm1064 = vcmp.ge.f32.partialorder %v1032, 0.0
        %vm1065 = vcmp.ge.f32.partialorder %v1033, 0.0
        %vm1066 = vcmp.ge.f32.partialorder %v1034, 0.0
        %vm1067 = vcmp.ge.f32.partialorder %v1035, 0.0
        %vm1068 = vcmp.ge.f32.partialorder %v1036, 0.0
        %vm1069 = vcmp.ge.f32.partialorder %v1037, 0.0
        %vm1070 = vcmp.ge.f32.partialorder %v1038, 0.0
        %vm1071 = vcmp.ge.f32.partialorder %v1039, 0.0
        %vm1072 = vcmp.ge.f32.partialorder %v1040, 0.0
        %vm1073 = vcmp.ge.f32.partialorder %v1041, 0.0
        %vm1074 = vcmp.ge.f32.partialorder %v1042, 0.0
        %vm1075 = vcmp.ge.f32.partialorder %v1043, 0.0
        %vm1076 = vcmp.ge.f32.partialorder %v1044, 0.0
        %vm1077 = vcmp.ge.f32.partialorder %v1045, 0.0
        %vm1078 = vcmp.ge.f32.partialorder %v1046, 0.0
        %vm1079 = vcmp.ge.f32.partialorder %v1047, 0.0
        %v1080 = vmul.f32 %v1016, 0.01
        %v1081 = vmul.f32 %v1017, 0.01
        %v1082 = vmul.f32 %v1018, 0.01
        %v1083 = vmul.f32 %v1019, 0.01
        %v1084 = vmul.f32 %v1020, 0.01
        %v1085 = vmul.f32 %v1021, 0.01
        %v1086 = vmul.f32 %v1022, 0.01
        %v1087 = vmul.f32 %v1023, 0.01
        %v1088 = vmul.f32 %v1024, 0.01
        %v1089 = vmul.f32 %v1025, 0.01
        %v1090 = vmul.f32 %v1026, 0.01
        %v1091 = vmul.f32 %v1027, 0.01
        %v1092 = vmul.f32 %v1028, 0.01
        %v1093 = vmul.f32 %v1029, 0.01
        %v1094 = vmul.f32 %v1030, 0.01
        %v1095 = vmul.f32 %v1031, 0.01
        %v1096 = vmul.f32 %v1032, 0.01
        %v1097 = vmul.f32 %v1033, 0.01
        %v1098 = vmul.f32 %v1034, 0.01
        %v1099 = vmul.f32 %v1035, 0.01
        %v1100 = vmul.f32 %v1036, 0.01
        %v1101 = vmul.f32 %v1037, 0.01
        %v1102 = vmul.f32 %v1038, 0.01
        %v1103 = vmul.f32 %v1039, 0.01
        %v1104 = vmul.f32 %v1040, 0.01
        %v1105 = vmul.f32 %v1041, 0.01
        %v1106 = vmul.f32 %v1042, 0.01
        %v1107 = vmul.f32 %v1043, 0.01
        %v1108 = vmul.f32 %v1044, 0.01
        %v1109 = vmul.f32 %v1045, 0.01
        %v1110 = vmul.f32 %v1046, 0.01
        %v1111 = vmul.f32 %v1047, 0.01
        %v1112 = vsel %vm1048, %v1016, %v1080
        %v1113 = vsel %vm1049, %v1017, %v1081
        %v1114 = vsel %vm1050, %v1018, %v1082
        %v1115 = vsel %vm1051, %v1019, %v1083
        %v1116 = vsel %vm1052, %v1020, %v1084
        %v1117 = vsel %vm1053, %v1021, %v1085
        %v1118 = vsel %vm1054, %v1022, %v1086
        %v1119 = vsel %vm1055, %v1023, %v1087
        %v1120 = vsel %vm1056, %v1024, %v1088
        %v1121 = vsel %vm1057, %v1025, %v1089
        %v1122 = vsel %vm1058, %v1026, %v1090
        %v1123 = vsel %vm1059, %v1027, %v1091
        %v1124 = vsel %vm1060, %v1028, %v1092
        %v1125 = vsel %vm1061, %v1029, %v1093
        %v1126 = vsel %vm1062, %v1030, %v1094
        %v1127 = vsel %vm1063, %v1031, %v1095
        %v1128 = vsel %vm1064, %v1032, %v1096
        %v1129 = vsel %vm1065, %v1033, %v1097
        %v1130 = vsel %vm1066, %v1034, %v1098
        %v1131 = vsel %vm1067, %v1035, %v1099
        %v1132 = vsel %vm1068, %v1036, %v1100
        %v1133 = vsel %vm1069, %v1037, %v1101
        %v1134 = vsel %vm1070, %v1038, %v1102
        %v1135 = vsel %vm1071, %v1039, %v1103
        %v1136 = vsel %vm1072, %v1040, %v1104
        %v1137 = vsel %vm1073, %v1041, %v1105
        %v1138 = vsel %vm1074, %v1042, %v1106
        %v1139 = vsel %vm1075, %v1043, %v1107
        %v1140 = vsel %vm1076, %v1044, %v1108
        %v1141 = vsel %vm1077, %v1045, %v1109
        %v1142 = vsel %vm1078, %v1046, %v1110
        %v1143 = vsel %vm1079, %v1047, %v1111
        %s1144 = scalar_lea.vmem %s6, 8
        %v1145 = vld [vmem:[%s1144] sm:$0xff]
        %v1146 = vrot.slane %v385, 4
        %v1147 = vrot.slane %v387, 4
        %v1148 = vrot.slane %v389, 4
        %v1149 = vrot.slane %v391, 4
        %v1154 = vsel %vm493, 0.0, %v1146
        %v1155 = vsel %vm493, 0.0, %v1147
        %v1156 = vsel %vm493, 0.0, %v1148
        %v1157 = vsel %vm493, 0.0, %v1149
        %v1158 = vrot.slane %v386, 4
        %v1159 = vrot.slane %v388, 4
        %v1160 = vrot.slane %v390, 4
        %v1161 = vrot.slane %v392, 4
        %v1166 = vsel %vm493, %v1158, 0.0
        %v1167 = vsel %vm493, %v1159, 0.0
        %v1168 = vsel %vm493, %v1160, 0.0
        %v1169 = vsel %vm493, %v1161, 0.0
        %v1170 = vrot.slane %v393, 4
        %v1171 = vrot.slane %v395, 4
        %v1172 = vrot.slane %v397, 4
        %v1173 = vrot.slane %v399, 4
        %v1174 = vrot.slane %v401, 4
        %v1175 = vrot.slane %v403, 4
        %v1176 = vrot.slane %v405, 4
        %v1177 = vrot.slane %v407, 4
        %v1178 = vrot.slane %v409, 4
        %v1179 = vrot.slane %v411, 4
        %v1180 = vrot.slane %v413, 4
        %v1181 = vrot.slane %v415, 4
        %v1194 = vsel %vm493, 0.0, %v1170
        %v1195 = vsel %vm493, 0.0, %v1171
        %v1196 = vsel %vm493, 0.0, %v1172
        %v1197 = vsel %vm493, 0.0, %v1173
        %v1198 = vsel %vm493, 0.0, %v1174
        %v1199 = vsel %vm493, 0.0, %v1175
        %v1200 = vsel %vm493, 0.0, %v1176
        %v1201 = vsel %vm493, 0.0, %v1177
        %v1202 = vsel %vm493, 0.0, %v1178
        %v1203 = vsel %vm493, 0.0, %v1179
        %v1204 = vsel %vm493, 0.0, %v1180
        %v1205 = vsel %vm493, 0.0, %v1181
        %v1206 = vrot.slane %v394, 4
        %v1207 = vrot.slane %v396, 4
        %v1208 = vrot.slane %v398, 4
        %v1209 = vrot.slane %v400, 4
        %v1210 = vrot.slane %v402, 4
        %v1211 = vrot.slane %v404, 4
        %v1212 = vrot.slane %v406, 4
        %v1213 = vrot.slane %v408, 4
        %v1214 = vrot.slane %v410, 4
        %v1215 = vrot.slane %v412, 4
        %v1216 = vrot.slane %v414, 4
        %v1217 = vrot.slane %v416, 4
        %v1230 = vsel %vm493, %v1206, 0.0
        %v1231 = vsel %vm493, %v1207, 0.0
        %v1232 = vsel %vm493, %v1208, 0.0
        %v1233 = vsel %vm493, %v1209, 0.0
        %v1234 = vsel %vm493, %v1210, 0.0
        %v1235 = vsel %vm493, %v1211, 0.0
        %v1236 = vsel %vm493, %v1212, 0.0
        %v1237 = vsel %vm493, %v1213, 0.0
        %v1238 = vsel %vm493, %v1214, 0.0
        %v1239 = vsel %vm493, %v1215, 0.0
        %v1240 = vsel %vm493, %v1216, 0.0
        %v1241 = vsel %vm493, %v1217, 0.0
        %1243 = vrot.lane.b32.xlu0 0.0, 4
        %v1244 = vpop.permute.xlu0 %1243
        %1245 = vrot.lane.b32.xlu0 %v385, 4
        %v1246 = vpop.permute.xlu0 %1245
        %1247 = vrot.lane.b32.xlu0 %v386, 4
        %v1248 = vpop.permute.xlu0 %1247
        %1249 = vrot.lane.b32.xlu0 %v387, 4
        %v1250 = vpop.permute.xlu0 %1249
        %1251 = vrot.lane.b32.xlu0 %v388, 4
        %v1252 = vpop.permute.xlu0 %1251
        %1253 = vrot.lane.b32.xlu0 %v389, 4
        %v1254 = vpop.permute.xlu0 %1253
        %1255 = vrot.lane.b32.xlu0 %v390, 4
        %v1256 = vpop.permute.xlu0 %1255
        %1257 = vrot.lane.b32.xlu0 %v391, 4
        %v1258 = vpop.permute.xlu0 %1257
        %1259 = vrot.lane.b32.xlu0 %v392, 4
        %v1260 = vpop.permute.xlu0 %1259
        %1274 = vrot.lane.b32.xlu0 0.0, 8
        %v1275 = vpop.permute.xlu0 %1274
        %1276 = vrot.lane.b32.xlu0 %v1166, 8
        %v1277 = vpop.permute.xlu0 %1276
        %1278 = vrot.lane.b32.xlu0 %v1167, 8
        %v1279 = vpop.permute.xlu0 %1278
        %1280 = vrot.lane.b32.xlu0 %v1168, 8
        %v1281 = vpop.permute.xlu0 %1280
        %1282 = vrot.lane.b32.xlu0 %v1169, 8
        %v1283 = vpop.permute.xlu0 %1282
        %1305 = vrot.lane.b32.xlu0 0.0, 12
        %v1306 = vpop.permute.xlu0 %1305
        %1307 = vrot.lane.b32.xlu0 %v1154, 12
        %v1308 = vpop.permute.xlu0 %1307
        %1309 = vrot.lane.b32.xlu0 %v1155, 12
        %v1310 = vpop.permute.xlu0 %1309
        %1311 = vrot.lane.b32.xlu0 %v1156, 12
        %v1312 = vpop.permute.xlu0 %1311
        %1313 = vrot.lane.b32.xlu0 %v1157, 12
        %v1314 = vpop.permute.xlu0 %1313
        %1315 = vrot.lane.b32.xlu0 %v1194, 12
        %v1316 = vpop.permute.xlu0 %1315
        %1317 = vrot.lane.b32.xlu0 %v1195, 12
        %v1318 = vpop.permute.xlu0 %1317
        %1319 = vrot.lane.b32.xlu0 %v1196, 12
        %v1320 = vpop.permute.xlu0 %1319
        %1321 = vrot.lane.b32.xlu0 %v1197, 12
        %v1322 = vpop.permute.xlu0 %1321
        %1323 = vrot.lane.b32.xlu0 %v1198, 12
        %v1324 = vpop.permute.xlu0 %1323
        %1325 = vrot.lane.b32.xlu0 %v1199, 12
        %v1326 = vpop.permute.xlu0 %1325
        %1327 = vrot.lane.b32.xlu0 %v1200, 12
        %v1328 = vpop.permute.xlu0 %1327
        %1329 = vrot.lane.b32.xlu0 %v1201, 12
        %v1330 = vpop.permute.xlu0 %1329
        %1331 = vrot.lane.b32.xlu0 %v1202, 12
        %v1332 = vpop.permute.xlu0 %1331
        %1333 = vrot.lane.b32.xlu0 %v1203, 12
        %v1334 = vpop.permute.xlu0 %1333
        %1335 = vrot.lane.b32.xlu0 %v1204, 12
        %v1336 = vpop.permute.xlu0 %1335
        %1337 = vrot.lane.b32.xlu0 %v1205, 12
        %v1338 = vpop.permute.xlu0 %1337
        %1356 = vrot.lane.b32.xlu0 %v385, 16
        %v1357 = vpop.permute.xlu0 %1356
        %1358 = vrot.lane.b32.xlu0 %v386, 16
        %v1359 = vpop.permute.xlu0 %1358
        %1360 = vrot.lane.b32.xlu0 %v387, 16
        %v1361 = vpop.permute.xlu0 %1360
        %1362 = vrot.lane.b32.xlu0 %v388, 16
        %v1363 = vpop.permute.xlu0 %1362
        %1364 = vrot.lane.b32.xlu0 %v389, 16
        %v1365 = vpop.permute.xlu0 %1364
        %1366 = vrot.lane.b32.xlu0 %v390, 16
        %v1367 = vpop.permute.xlu0 %1366
        %1368 = vrot.lane.b32.xlu0 %v391, 16
        %v1369 = vpop.permute.xlu0 %1368
        %1370 = vrot.lane.b32.xlu0 %v392, 16
        %v1371 = vpop.permute.xlu0 %1370
        %1372 = vrot.lane.b32.xlu0 %v393, 16
        %v1373 = vpop.permute.xlu0 %1372
        %1374 = vrot.lane.b32.xlu0 %v394, 16
        %v1375 = vpop.permute.xlu0 %1374
        %1376 = vrot.lane.b32.xlu0 %v395, 16
        %v1377 = vpop.permute.xlu0 %1376
        %1378 = vrot.lane.b32.xlu0 %v396, 16
        %v1379 = vpop.permute.xlu0 %1378
        %1380 = vrot.lane.b32.xlu0 %v397, 16
        %v1381 = vpop.permute.xlu0 %1380
        %1382 = vrot.lane.b32.xlu0 %v398, 16
        %v1383 = vpop.permute.xlu0 %1382
        %1384 = vrot.lane.b32.xlu0 %v399, 16
        %v1385 = vpop.permute.xlu0 %1384
        %1386 = vrot.lane.b32.xlu0 %v400, 16
        %v1387 = vpop.permute.xlu0 %1386
        %1388 = vrot.lane.b32.xlu0 %v401, 16
        %v1389 = vpop.permute.xlu0 %1388
        %1390 = vrot.lane.b32.xlu0 %v402, 16
        %v1391 = vpop.permute.xlu0 %1390
        %1392 = vrot.lane.b32.xlu0 %v403, 16
        %v1393 = vpop.permute.xlu0 %1392
        %1394 = vrot.lane.b32.xlu0 %v404, 16
        %v1395 = vpop.permute.xlu0 %1394
        %1396 = vrot.lane.b32.xlu0 %v405, 16
        %v1397 = vpop.permute.xlu0 %1396
        %1398 = vrot.lane.b32.xlu0 %v406, 16
        %v1399 = vpop.permute.xlu0 %1398
        %1400 = vrot.lane.b32.xlu0 %v407, 16
        %v1401 = vpop.permute.xlu0 %1400
        %1402 = vrot.lane.b32.xlu0 %v408, 16
        %v1403 = vpop.permute.xlu0 %1402
        %1404 = vrot.lane.b32.xlu0 %v409, 16
        %v1405 = vpop.permute.xlu0 %1404
        %1406 = vrot.lane.b32.xlu0 %v410, 16
        %v1407 = vpop.permute.xlu0 %1406
        %1408 = vrot.lane.b32.xlu0 %v411, 16
        %v1409 = vpop.permute.xlu0 %1408
        %1410 = vrot.lane.b32.xlu0 %v412, 16
        %v1411 = vpop.permute.xlu0 %1410
        %1412 = vrot.lane.b32.xlu0 %v413, 16
        %v1413 = vpop.permute.xlu0 %1412
        %1414 = vrot.lane.b32.xlu0 %v414, 16
        %v1415 = vpop.permute.xlu0 %1414
        %1416 = vrot.lane.b32.xlu0 %v415, 16
        %v1417 = vpop.permute.xlu0 %1416
        %1418 = vrot.lane.b32.xlu0 %v416, 16
        %v1419 = vpop.permute.xlu0 %1418
        %1464 = vrot.lane.b32.xlu0 %v1166, 20
        %v1465 = vpop.permute.xlu0 %1464
        %1466 = vrot.lane.b32.xlu0 0.0, 20
        %v1467 = vpop.permute.xlu0 %1466
        %1468 = vrot.lane.b32.xlu0 %v1167, 20
        %v1469 = vpop.permute.xlu0 %1468
        %1470 = vrot.lane.b32.xlu0 %v1168, 20
        %v1471 = vpop.permute.xlu0 %1470
        %1472 = vrot.lane.b32.xlu0 %v1169, 20
        %v1473 = vpop.permute.xlu0 %1472
        %1474 = vrot.lane.b32.xlu0 %v1230, 20
        %v1475 = vpop.permute.xlu0 %1474
        %1476 = vrot.lane.b32.xlu0 %v1231, 20
        %v1477 = vpop.permute.xlu0 %1476
        %1478 = vrot.lane.b32.xlu0 %v1232, 20
        %v1479 = vpop.permute.xlu0 %1478
        %1480 = vrot.lane.b32.xlu0 %v1233, 20
        %v1481 = vpop.permute.xlu0 %1480
        %1482 = vrot.lane.b32.xlu0 %v1234, 20
        %v1483 = vpop.permute.xlu0 %1482
        %1484 = vrot.lane.b32.xlu0 %v1235, 20
        %v1485 = vpop.permute.xlu0 %1484
        %1486 = vrot.lane.b32.xlu0 %v1236, 20
        %v1487 = vpop.permute.xlu0 %1486
        %1488 = vrot.lane.b32.xlu0 %v1237, 20
        %v1489 = vpop.permute.xlu0 %1488
        %1490 = vrot.lane.b32.xlu0 %v1238, 20
        %v1491 = vpop.permute.xlu0 %1490
        %1492 = vrot.lane.b32.xlu0 %v1239, 20
        %v1493 = vpop.permute.xlu0 %1492
        %1494 = vrot.lane.b32.xlu0 %v1240, 20
        %v1495 = vpop.permute.xlu0 %1494
        %1496 = vrot.lane.b32.xlu0 %v1241, 20
        %v1497 = vpop.permute.xlu0 %1496
        %1515 = vrot.lane.b32.xlu0 0.0, 24
        %v1516 = vpop.permute.xlu0 %1515
        %1517 = vrot.lane.b32.xlu0 %v1202, 24
        %v1518 = vpop.permute.xlu0 %1517
        %1519 = vrot.lane.b32.xlu0 %v1203, 24
        %v1520 = vpop.permute.xlu0 %1519
        %1521 = vrot.lane.b32.xlu0 %v1204, 24
        %v1522 = vpop.permute.xlu0 %1521
        %1523 = vrot.lane.b32.xlu0 %v1205, 24
        %v1524 = vpop.permute.xlu0 %1523
        %1530 = vrot.lane.b32.xlu0 %v409, 28
        %v1531 = vpop.permute.xlu0 %1530
        %1532 = vrot.lane.b32.xlu0 %v410, 28
        %v1533 = vpop.permute.xlu0 %1532
        %1534 = vrot.lane.b32.xlu0 %v411, 28
        %v1535 = vpop.permute.xlu0 %1534
        %1536 = vrot.lane.b32.xlu0 %v412, 28
        %v1537 = vpop.permute.xlu0 %1536
        %1538 = vrot.lane.b32.xlu0 %v413, 28
        %v1539 = vpop.permute.xlu0 %1538
        %1540 = vrot.lane.b32.xlu0 %v414, 28
        %v1541 = vpop.permute.xlu0 %1540
        %1542 = vrot.lane.b32.xlu0 %v415, 28
        %v1543 = vpop.permute.xlu0 %1542
        %1544 = vrot.lane.b32.xlu0 %v416, 28
        %v1545 = vpop.permute.xlu0 %1544
        %1546 = vrot.lane.b32.xlu0 0.0, 28
        %v1547 = vpop.permute.xlu0 %1546
        %1557 = vrot.lane.b32.xlu0 %v1238, 32
        %v1558 = vpop.permute.xlu0 %1557
        %1559 = vrot.lane.b32.xlu0 0.0, 32
        %v1560 = vpop.permute.xlu0 %1559
        %1561 = vrot.lane.b32.xlu0 %v1239, 32
        %v1562 = vpop.permute.xlu0 %1561
        %1563 = vrot.lane.b32.xlu0 %v1240, 32
        %v1564 = vpop.permute.xlu0 %1563
        %1565 = vrot.lane.b32.xlu0 %v1241, 32
        %v1566 = vpop.permute.xlu0 %1565
        %v1572 = vsel %vm417, 0.0, %v1244
        %v1573 = vsel %vm417, 0.0, %v1246
        %v1574 = vsel %vm417, %v1154, %v1248
        %v1575 = vsel %vm417, 0.0, %v1250
        %v1576 = vsel %vm417, %v1155, %v1252
        %v1577 = vsel %vm417, 0.0, %v1254
        %v1578 = vsel %vm417, %v1156, %v1256
        %v1579 = vsel %vm417, 0.0, %v1258
        %v1580 = vsel %vm417, %v1157, %v1260
        %v1581 = vsel %vm575, %v1572, %v1275
        %v1582 = vsel %vm575, %v1573, %v1277
        %v1583 = vsel %vm575, %v1574, %v1275
        %v1584 = vsel %vm575, %v1575, %v1279
        %v1585 = vsel %vm575, %v1576, %v1275
        %v1586 = vsel %vm575, %v1577, %v1281
        %v1587 = vsel %vm575, %v1578, %v1275
        %v1588 = vsel %vm575, %v1579, %v1283
        %v1589 = vsel %vm575, %v1580, %v1275
        %vm1590 = vcmask 97280
        %v1591 = vsel %vm1590, %v1581, %v1306
        %v1592 = vsel %vm1590, %v1581, %v1308
        %v1593 = vsel %vm1590, %v1581, %v1310
        %v1594 = vsel %vm1590, %v1581, %v1312
        %v1595 = vsel %vm1590, %v1581, %v1314
        %v1596 = vsel %vm1590, %v1581, %v1316
        %v1597 = vsel %vm1590, %v1581, %v1318
        %v1598 = vsel %vm1590, %v1581, %v1320
        %v1599 = vsel %vm1590, %v1581, %v1322
        %v1600 = vsel %vm1590, %v1581, %v1324
        %v1601 = vsel %vm1590, %v1581, %v1326
        %v1602 = vsel %vm1590, %v1581, %v1328
        %v1603 = vsel %vm1590, %v1581, %v1330
        %v1604 = vsel %vm1590, %v1582, %v1306
        %v1605 = vsel %vm1590, %v1583, %v1332
        %v1606 = vsel %vm1590, %v1584, %v1306
        %v1607 = vsel %vm1590, %v1585, %v1334
        %v1608 = vsel %vm1590, %v1586, %v1306
        %v1609 = vsel %vm1590, %v1587, %v1336
        %v1610 = vsel %vm1590, %v1588, %v1306
        %v1611 = vsel %vm1590, %v1589, %v1338
        %vm1612 = vcmask 130048
        %v1613 = vsel %vm1612, %v1591, %v1357
        %v1614 = vsel %vm1612, %v1592, %v1359
        %v1615 = vsel %vm1612, %v1591, %v1361
        %v1616 = vsel %vm1612, %v1593, %v1363
        %v1617 = vsel %vm1612, %v1591, %v1365
        %v1618 = vsel %vm1612, %v1594, %v1367
        %v1619 = vsel %vm1612, %v1591, %v1369
        %v1620 = vsel %vm1612, %v1595, %v1371
        %v1621 = vsel %vm1612, %v1591, %v1373
        %v1622 = vsel %vm1612, %v1596, %v1375
        %v1623 = vsel %vm1612, %v1591, %v1377
        %v1624 = vsel %vm1612, %v1597, %v1379
        %v1625 = vsel %vm1612, %v1591, %v1381
        %v1626 = vsel %vm1612, %v1598, %v1383
        %v1627 = vsel %vm1612, %v1591, %v1385
        %v1628 = vsel %vm1612, %v1599, %v1387
        %v1629 = vsel %vm1612, %v1591, %v1389
        %v1630 = vsel %vm1612, %v1600, %v1391
        %v1631 = vsel %vm1612, %v1591, %v1393
        %v1632 = vsel %vm1612, %v1601, %v1395
        %v1633 = vsel %vm1612, %v1591, %v1397
        %v1634 = vsel %vm1612, %v1602, %v1399
        %v1635 = vsel %vm1612, %v1591, %v1401
        %v1636 = vsel %vm1612, %v1603, %v1403
        %v1637 = vsel %vm1612, %v1604, %v1405
        %v1638 = vsel %vm1612, %v1605, %v1407
        %v1639 = vsel %vm1612, %v1606, %v1409
        %v1640 = vsel %vm1612, %v1607, %v1411
        %v1641 = vsel %vm1612, %v1608, %v1413
        %v1642 = vsel %vm1612, %v1609, %v1415
        %v1643 = vsel %vm1612, %v1610, %v1417
        %v1644 = vsel %vm1612, %v1611, %v1419
        %vm1645 = vcmask 162816
        %v1646 = vsel %vm1645, %v1613, %v1465
        %v1647 = vsel %vm1645, %v1614, %v1467
        %v1648 = vsel %vm1645, %v1615, %v1469
        %v1649 = vsel %vm1645, %v1616, %v1467
        %v1650 = vsel %vm1645, %v1617, %v1471
        %v1651 = vsel %vm1645, %v1618, %v1467
        %v1652 = vsel %vm1645, %v1619, %v1473
        %v1653 = vsel %vm1645, %v1620, %v1467
        %v1654 = vsel %vm1645, %v1621, %v1475
        %v1655 = vsel %vm1645, %v1622, %v1467
        %v1656 = vsel %vm1645, %v1623, %v1477
        %v1657 = vsel %vm1645, %v1624, %v1467
        %v1658 = vsel %vm1645, %v1625, %v1479
        %v1659 = vsel %vm1645, %v1626, %v1467
        %v1660 = vsel %vm1645, %v1627, %v1481
        %v1661 = vsel %vm1645, %v1628, %v1467
        %v1662 = vsel %vm1645, %v1629, %v1483
        %v1663 = vsel %vm1645, %v1630, %v1467
        %v1664 = vsel %vm1645, %v1631, %v1485
        %v1665 = vsel %vm1645, %v1632, %v1467
        %v1666 = vsel %vm1645, %v1633, %v1487
        %v1667 = vsel %vm1645, %v1634, %v1467
        %v1668 = vsel %vm1645, %v1635, %v1489
        %v1669 = vsel %vm1645, %v1636, %v1467
        %v1670 = vsel %vm1645, %v1637, %v1491
        %v1671 = vsel %vm1645, %v1638, %v1467
        %v1672 = vsel %vm1645, %v1639, %v1493
        %v1673 = vsel %vm1645, %v1640, %v1467
        %v1674 = vsel %vm1645, %v1641, %v1495
        %v1675 = vsel %vm1645, %v1642, %v1467
        %v1676 = vsel %vm1645, %v1643, %v1497
        %v1677 = vsel %vm1645, %v1644, %v1467
        %vm1678 = vcmask 195584
        %v1679 = vsel %vm1678, %v1646, %v1516
        %v1680 = vsel %vm1678, %v1647, %v1518
        %v1681 = vsel %vm1678, %v1648, %v1516
        %v1682 = vsel %vm1678, %v1649, %v1520
        %v1683 = vsel %vm1678, %v1650, %v1516
        %v1684 = vsel %vm1678, %v1651, %v1522
        %v1685 = vsel %vm1678, %v1652, %v1516
        %v1686 = vsel %vm1678, %v1653, %v1524
        %v1687 = vsel %vm1678, %v1654, %v1516
        %v1688 = vsel %vm1678, %v1655, %v1516
        %v1689 = vsel %vm1678, %v1656, %v1516
        %v1690 = vsel %vm1678, %v1657, %v1516
        %v1691 = vsel %vm1678, %v1658, %v1516
        %v1692 = vsel %vm1678, %v1659, %v1516
        %v1693 = vsel %vm1678, %v1660, %v1516
        %v1694 = vsel %vm1678, %v1661, %v1516
        %v1695 = vsel %vm1678, %v1662, %v1516
        %v1696 = vsel %vm1678, %v1663, %v1516
        %v1697 = vsel %vm1678, %v1664, %v1516
        %v1698 = vsel %vm1678, %v1665, %v1516
        %v1699 = vsel %vm1678, %v1666, %v1516
        %v1700 = vsel %vm1678, %v1667, %v1516
        %v1701 = vsel %vm1678, %v1668, %v1516
        %v1702 = vsel %vm1678, %v1669, %v1516
        %v1703 = vsel %vm1678, %v1670, %v1516
        %v1704 = vsel %vm1678, %v1671, %v1516
        %v1705 = vsel %vm1678, %v1672, %v1516
        %v1706 = vsel %vm1678, %v1673, %v1516
        %v1707 = vsel %vm1678, %v1674, %v1516
        %v1708 = vsel %vm1678, %v1675, %v1516
        %v1709 = vsel %vm1678, %v1676, %v1516
        %v1710 = vsel %vm1678, %v1677, %v1516
        %vm1711 = vcmask 228352
        %v1712 = vsel %vm1711, %v1679, %v1531
        %v1713 = vsel %vm1711, %v1680, %v1533
        %v1714 = vsel %vm1711, %v1681, %v1535
        %v1715 = vsel %vm1711, %v1682, %v1537
        %v1716 = vsel %vm1711, %v1683, %v1539
        %v1717 = vsel %vm1711, %v1684, %v1541
        %v1718 = vsel %vm1711, %v1685, %v1543
        %v1719 = vsel %vm1711, %v1686, %v1545
        %v1720 = vsel %vm1711, %v1687, %v1547
        %v1721 = vsel %vm1711, %v1688, %v1547
        %v1722 = vsel %vm1711, %v1689, %v1547
        %v1723 = vsel %vm1711, %v1690, %v1547
        %v1724 = vsel %vm1711, %v1691, %v1547
        %v1725 = vsel %vm1711, %v1692, %v1547
        %v1726 = vsel %vm1711, %v1693, %v1547
        %v1727 = vsel %vm1711, %v1694, %v1547
        %v1728 = vsel %vm1711, %v1695, %v1547
        %v1729 = vsel %vm1711, %v1696, %v1547
        %v1730 = vsel %vm1711, %v1697, %v1547
        %v1731 = vsel %vm1711, %v1698, %v1547
        %v1732 = vsel %vm1711, %v1699, %v1547
        %v1733 = vsel %vm1711, %v1700, %v1547
        %v1734 = vsel %vm1711, %v1701, %v1547
        %v1735 = vsel %vm1711, %v1702, %v1547
        %v1736 = vsel %vm1711, %v1703, %v1547
        %v1737 = vsel %vm1711, %v1704, %v1547
        %v1738 = vsel %vm1711, %v1705, %v1547
        %v1739 = vsel %vm1711, %v1706, %v1547
        %v1740 = vsel %vm1711, %v1707, %v1547
        %v1741 = vsel %vm1711, %v1708, %v1547
        %v1742 = vsel %vm1711, %v1709, %v1547
        %v1743 = vsel %vm1711, %v1710, %v1547
        %vm1744 = vcmask 261120
        %v1745 = vsel %vm1744, %v1712, %v1558
        %v1746 = vsel %vm1744, %v1713, %v1560
        %v1747 = vsel %vm1744, %v1714, %v1562
        %v1748 = vsel %vm1744, %v1715, %v1560
        %v1749 = vsel %vm1744, %v1716, %v1564
        %v1750 = vsel %vm1744, %v1717, %v1560
        %v1751 = vsel %vm1744, %v1718, %v1566
        %v1752 = vsel %vm1744, %v1719, %v1560
        %v1753 = vsel %vm1744, %v1720, %v1560
        %v1754 = vsel %vm1744, %v1721, %v1560
        %v1755 = vsel %vm1744, %v1722, %v1560
        %v1756 = vsel %vm1744, %v1723, %v1560
        %v1757 = vsel %vm1744, %v1724, %v1560
        %v1758 = vsel %vm1744, %v1725, %v1560
        %v1759 = vsel %vm1744, %v1726, %v1560
        %v1760 = vsel %vm1744, %v1727, %v1560
        %v1761 = vsel %vm1744, %v1728, %v1560
        %v1762 = vsel %vm1744, %v1729, %v1560
        %v1763 = vsel %vm1744, %v1730, %v1560
        %v1764 = vsel %vm1744, %v1731, %v1560
        %v1765 = vsel %vm1744, %v1732, %v1560
        %v1766 = vsel %vm1744, %v1733, %v1560
        %v1767 = vsel %vm1744, %v1734, %v1560
        %v1768 = vsel %vm1744, %v1735, %v1560
        %v1769 = vsel %vm1744, %v1736, %v1560
        %v1770 = vsel %vm1744, %v1737, %v1560
        %v1771 = vsel %vm1744, %v1738, %v1560
        %v1772 = vsel %vm1744, %v1739, %v1560
        %v1773 = vsel %vm1744, %v1740, %v1560
        %v1774 = vsel %vm1744, %v1741, %v1560
        %v1775 = vsel %vm1744, %v1742, %v1560
        %v1776 = vsel %vm1744, %v1743, %v1560
        %v1777 = vld [vmem:[%s3] sm:$0xff]
        %v1778 = vld [vmem:[%s3 + $0x8] sm:$0xff]
        %v1779 = vld [vmem:[%s3 + $0x10] sm:$0xff]
        %v1780 = vld [vmem:[%s3 + $0x18] sm:$0xff]
        %v1781 = vld [vmem:[%s3 + $0x20] sm:$0xf]
        %vm1782 = vcmask 293888
        %v1784 = vsel %vm1782, %v1745, 0
        %v1787 = vsel %vm1782, %v1746, 0
        %v1790 = vsel %vm1782, %v1747, 0
        %v1793 = vsel %vm1782, %v1748, 0
        %v1796 = vsel %vm1782, %v1749, 0
        %v1799 = vsel %vm1782, %v1750, 0
        %v1802 = vsel %vm1782, %v1751, 0
        %v1805 = vsel %vm1782, %v1752, 0
        %v1808 = vsel %vm1782, %v1753, 0
        %v1811 = vsel %vm1782, %v1754, 0
        %v1814 = vsel %vm1782, %v1755, 0
        %v1817 = vsel %vm1782, %v1756, 0
        %v1820 = vsel %vm1782, %v1757, 0
        %v1823 = vsel %vm1782, %v1758, 0
        %v1826 = vsel %vm1782, %v1759, 0
        %v1829 = vsel %vm1782, %v1760, 0
        %v1832 = vsel %vm1782, %v1761, 0
        %v1835 = vsel %vm1782, %v1762, 0
        %v1838 = vsel %vm1782, %v1763, 0
        %v1841 = vsel %vm1782, %v1764, 0
        %v1844 = vsel %vm1782, %v1765, 0
        %v1847 = vsel %vm1782, %v1766, 0
        %v1850 = vsel %vm1782, %v1767, 0
        %v1853 = vsel %vm1782, %v1768, 0
        %v1856 = vsel %vm1782, %v1769, 0
        %v1859 = vsel %vm1782, %v1770, 0
        %v1862 = vsel %vm1782, %v1771, 0
        %v1865 = vsel %vm1782, %v1772, 0
        %v1868 = vsel %vm1782, %v1773, 0
        %v1871 = vsel %vm1782, %v1774, 0
        %v1874 = vsel %vm1782, %v1775, 0
        %v1877 = vsel %vm1782, %v1776, 0
        %v1880 = vsel %vm493, %v1781, 0
        %1882 = vmatprep.subr.mxu0 0.0
        %1883 = vmatpush1.msra.mxu0 %v1777
        %1884 = vmatprep.subr.mxu0 0.0
        %1885 = vmatpush1.msra.mxu0 %v1778
        %1886 = vmatprep.subr.mxu0 0.0
        %1887 = vmatpush1.msra.mxu0 %v1779
        %1888 = vmatprep.subr.mxu0 0.0
        %1889 = vmatpush1.msra.mxu0 %v1780
        %1890 = vmatprep.subr.mxu0 0.0
        %1891 = vmatpush1.msra.mxu0 %v1880
        %1892 = vmatprep.subr.mxu0 0.0
        %1893 = vmatpush1.msra.mxu0 0.0
        %1894 = vmatprep.subr.mxu0 0.0
        %1895 = vmatpush1.msra.mxu0 0.0
        %1896 = vmatprep.subr.mxu0 0.0
        %1897 = vmatpush1.msra.mxu0 0.0
        %1898 = vmatprep.subr.mxu0 0.0
        %1899 = vmatpush1.msra.mxu0 0.0
        %1900 = vmatprep.subr.mxu0 0.0
        %1901 = vmatpush1.msra.mxu0 0.0
        %1902 = vmatprep.subr.mxu0 0.0
        %1903 = vmatpush1.msra.mxu0 0.0
        %1904 = vmatprep.subr.mxu0 0.0
        %1905 = vmatpush1.msra.mxu0 0.0
        %1906 = vmatprep.subr.mxu0 0.0
        %1907 = vmatpush1.msra.mxu0 0.0
        %1908 = vmatprep.subr.mxu0 0.0
        %1909 = vmatpush1.msra.mxu0 0.0
        %1910 = vmatprep.subr.mxu0 0.0
        %1911 = vmatpush1.msra.mxu0 0.0
        %1912 = vmatprep.subr.mxu0 0.0
        %1913 = vmatpush1.msra.mxu0 0.0
        %1914 = vmatprep.subr.mxu0 0.0
        %1915 = vmatpush1.msra.mxu0 0.0
        %1916 = vmatprep.subr.mxu0 0.0
        %1917 = vmatpush1.msra.mxu0 0.0
        %1918 = vmatprep.subr.mxu0 0.0
        %1919 = vmatpush1.msra.mxu0 0.0
        %1920 = vmatprep.subr.mxu0 0.0
        %1921 = vmatpush1.msra.mxu0 0.0
        %1922 = vmatprep.subr.mxu0 0.0
        %1923 = vmatpush1.msra.mxu0 0.0
        %1924 = vmatprep.subr.mxu0 0.0
        %1925 = vmatpush1.msra.mxu0 0.0
        %1926 = vmatprep.subr.mxu0 0.0
        %1927 = vmatpush1.msra.mxu0 0.0
        %1928 = vmatprep.subr.mxu0 0.0
        %1929 = vmatpush1.msra.mxu0 0.0
        %1930 = vmatprep.subr.mxu0 0.0
        %1931 = vmatpush1.msra.mxu0 0.0
        %1932 = vmatprep.subr.mxu0 0.0
        %1933 = vmatpush1.msra.mxu0 0.0
        %1934 = vmatprep.subr.mxu0 0.0
        %1935 = vmatpush1.msra.mxu0 0.0
        %1936 = vmatprep.subr.mxu0 0.0
        %1937 = vmatpush1.msra.mxu0 0.0
        %1938 = vmatprep.subr.mxu0 0.0
        %1939 = vmatpush1.msra.mxu0 0.0
        %1940 = vmatprep.subr.mxu0 0.0
        %1941 = vmatpush1.msra.mxu0 0.0
        %1942 = vmatprep.subr.mxu0 0.0
        %1943 = vmatpush1.msra.mxu0 0.0
        %1944 = vmatprep.subr.mxu0 0.0
        %1945 = vmatpush1.msra.mxu0 0.0
        %1946 = vmatprep.mubr.f32.mxu0 0.0
        %1947 = vmatmul.mubr.f32.gmra.mrb[0].mxu0 %v1784
        %v1948 = vpop.f32.mrb[0].mxu0
        %v1949 = vadd.f32 0.0, %v1948
        %v1950 = vpop.f32.mrb[0].mxu0
        %1951 = vmatprep.mubr.f32.mxu0 0.0
        %1952 = vmatmul.mubr.f32.gmra.mrb[0].mxu0 %v1787
        %v1953 = vpop.f32.mrb[0].mxu0
        %v1954 = vadd.f32 0.0, %v1953
        %v1955 = vpop.f32.mrb[0].mxu0
        %1956 = vmatprep.mubr.f32.mxu0 0.0
        %1957 = vmatmul.mubr.f32.gmra.mrb[0].mxu0 %v1790
        %v1958 = vpop.f32.mrb[0].mxu0
        %v1959 = vadd.f32 0.0, %v1958
        %v1960 = vpop.f32.mrb[0].mxu0
        %1961 = vmatprep.mubr.f32.mxu0 0.0
        %1962 = vmatmul.mubr.f32.gmra.mrb[0].mxu0 %v1793
        %v1963 = vpop.f32.mrb[0].mxu0
        %v1964 = vadd.f32 0.0, %v1963
        %v1965 = vpop.f32.mrb[0].mxu0
        %1966 = vmatprep.mubr.f32.mxu0 0.0
        %1967 = vmatmul.mubr.f32.gmra.mrb[0].mxu0 %v1796
        %v1968 = vpop.f32.mrb[0].mxu0
        %v1969 = vadd.f32 0.0, %v1968
        %v1970 = vpop.f32.mrb[0].mxu0
        %1971 = vmatprep.mubr.f32.mxu0 0.0
        %1972 = vmatmul.mubr.f32.gmra.mrb[0].mxu0 %v1799
        %v1973 = vpop.f32.mrb[0].mxu0
        %v1974 = vadd.f32 0.0, %v1973
        %v1975 = vpop.f32.mrb[0].mxu0
        %1976 = vmatprep.mubr.f32.mxu0 0.0
        %1977 = vmatmul.mubr.f32.gmra.mrb[0].mxu0 %v1802
        %v1978 = vpop.f32.mrb[0].mxu0
        %v1979 = vadd.f32 0.0, %v1978
        %v1980 = vpop.f32.mrb[0].mxu0
        %1981 = vmatprep.mubr.f32.mxu0 0.0
        %1982 = vmatmul.mubr.f32.gmra.mrb[0].mxu0 %v1805
        %v1983 = vpop.f32.mrb[0].mxu0
        %v1984 = vadd.f32 0.0, %v1983
        %v1985 = vpop.f32.mrb[0].mxu0
        %1986 = vmatprep.mubr.f32.mxu0 0.0
        %1987 = vmatmul.mubr.f32.gmra.mrb[0].mxu0 %v1808
        %v1988 = vpop.f32.mrb[0].mxu0
        %v1989 = vadd.f32 0.0, %v1988
        %v1990 = vpop.f32.mrb[0].mxu0
        %1991 = vmatprep.mubr.f32.mxu0 0.0
        %1992 = vmatmul.mubr.f32.gmra.mrb[0].mxu0 %v1811
        %v1993 = vpop.f32.mrb[0].mxu0
        %v1994 = vadd.f32 0.0, %v1993
        %v1995 = vpop.f32.mrb[0].mxu0
        %1996 = vmatprep.mubr.f32.mxu0 0.0
        %1997 = vmatmul.mubr.f32.gmra.mrb[0].mxu0 %v1814
        %v1998 = vpop.f32.mrb[0].mxu0
        %v1999 = vadd.f32 0.0, %v1998
        %v2000 = vpop.f32.mrb[0].mxu0
        %2001 = vmatprep.mubr.f32.mxu0 0.0
        %2002 = vmatmul.mubr.f32.gmra.mrb[0].mxu0 %v1817
        %v2003 = vpop.f32.mrb[0].mxu0
        %v2004 = vadd.f32 0.0, %v2003
        %v2005 = vpop.f32.mrb[0].mxu0
        %2006 = vmatprep.mubr.f32.mxu0 0.0
        %2007 = vmatmul.mubr.f32.gmra.mrb[0].mxu0 %v1820
        %v2008 = vpop.f32.mrb[0].mxu0
        %v2009 = vadd.f32 0.0, %v2008
        %v2010 = vpop.f32.mrb[0].mxu0
        %2011 = vmatprep.mubr.f32.mxu0 0.0
        %2012 = vmatmul.mubr.f32.gmra.mrb[0].mxu0 %v1823
        %v2013 = vpop.f32.mrb[0].mxu0
        %v2014 = vadd.f32 0.0, %v2013
        %v2015 = vpop.f32.mrb[0].mxu0
        %2016 = vmatprep.mubr.f32.mxu0 0.0
        %2017 = vmatmul.mubr.f32.gmra.mrb[0].mxu0 %v1826
        %v2018 = vpop.f32.mrb[0].mxu0
        %v2019 = vadd.f32 0.0, %v2018
        %v2020 = vpop.f32.mrb[0].mxu0
        %2021 = vmatprep.mubr.f32.mxu0 0.0
        %2022 = vmatmul.mubr.f32.gmra.mrb[0].mxu0 %v1829
        %v2023 = vpop.f32.mrb[0].mxu0
        %v2024 = vadd.f32 0.0, %v2023
        %v2025 = vpop.f32.mrb[0].mxu0
        %2026 = vmatprep.mubr.f32.mxu0 0.0
        %2027 = vmatmul.mubr.f32.gmra.mrb[0].mxu0 %v1832
        %v2028 = vpop.f32.mrb[0].mxu0
        %v2029 = vadd.f32 0.0, %v2028
        %v2030 = vpop.f32.mrb[0].mxu0
        %2031 = vmatprep.mubr.f32.mxu0 0.0
        %2032 = vmatmul.mubr.f32.gmra.mrb[0].mxu0 %v1835
        %v2033 = vpop.f32.mrb[0].mxu0
        %v2034 = vadd.f32 0.0, %v2033
        %v2035 = vpop.f32.mrb[0].mxu0
        %2036 = vmatprep.mubr.f32.mxu0 0.0
        %2037 = vmatmul.mubr.f32.gmra.mrb[0].mxu0 %v1838
        %v2038 = vpop.f32.mrb[0].mxu0
        %v2039 = vadd.f32 0.0, %v2038
        %v2040 = vpop.f32.mrb[0].mxu0
        %2041 = vmatprep.mubr.f32.mxu0 0.0
        %2042 = vmatmul.mubr.f32.gmra.mrb[0].mxu0 %v1841
        %v2043 = vpop.f32.mrb[0].mxu0
        %v2044 = vadd.f32 0.0, %v2043
        %v2045 = vpop.f32.mrb[0].mxu0
        %2046 = vmatprep.mubr.f32.mxu0 0.0
        %2047 = vmatmul.mubr.f32.gmra.mrb[0].mxu0 %v1844
        %v2048 = vpop.f32.mrb[0].mxu0
        %v2049 = vadd.f32 0.0, %v2048
        %v2050 = vpop.f32.mrb[0].mxu0
        %2051 = vmatprep.mubr.f32.mxu0 0.0
        %2052 = vmatmul.mubr.f32.gmra.mrb[0].mxu0 %v1847
        %v2053 = vpop.f32.mrb[0].mxu0
        %v2054 = vadd.f32 0.0, %v2053
        %v2055 = vpop.f32.mrb[0].mxu0
        %2056 = vmatprep.mubr.f32.mxu0 0.0
        %2057 = vmatmul.mubr.f32.gmra.mrb[0].mxu0 %v1850
        %v2058 = vpop.f32.mrb[0].mxu0
        %v2059 = vadd.f32 0.0, %v2058
        %v2060 = vpop.f32.mrb[0].mxu0
        %2061 = vmatprep.mubr.f32.mxu0 0.0
        %2062 = vmatmul.mubr.f32.gmra.mrb[0].mxu0 %v1853
        %v2063 = vpop.f32.mrb[0].mxu0
        %v2064 = vadd.f32 0.0, %v2063
        %v2065 = vpop.f32.mrb[0].mxu0
        %2066 = vmatprep.mubr.f32.mxu0 0.0
        %2067 = vmatmul.mubr.f32.gmra.mrb[0].mxu0 %v1856
        %v2068 = vpop.f32.mrb[0].mxu0
        %v2069 = vadd.f32 0.0, %v2068
        %v2070 = vpop.f32.mrb[0].mxu0
        %2071 = vmatprep.mubr.f32.mxu0 0.0
        %2072 = vmatmul.mubr.f32.gmra.mrb[0].mxu0 %v1859
        %v2073 = vpop.f32.mrb[0].mxu0
        %v2074 = vadd.f32 0.0, %v2073
        %v2075 = vpop.f32.mrb[0].mxu0
        %2076 = vmatprep.mubr.f32.mxu0 0.0
        %2077 = vmatmul.mubr.f32.gmra.mrb[0].mxu0 %v1862
        %v2078 = vpop.f32.mrb[0].mxu0
        %v2079 = vadd.f32 0.0, %v2078
        %v2080 = vpop.f32.mrb[0].mxu0
        %2081 = vmatprep.mubr.f32.mxu0 0.0
        %2082 = vmatmul.mubr.f32.gmra.mrb[0].mxu0 %v1865
        %v2083 = vpop.f32.mrb[0].mxu0
        %v2084 = vadd.f32 0.0, %v2083
        %v2085 = vpop.f32.mrb[0].mxu0
        %2086 = vmatprep.mubr.f32.mxu0 0.0
        %2087 = vmatmul.mubr.f32.gmra.mrb[0].mxu0 %v1868
        %v2088 = vpop.f32.mrb[0].mxu0
        %v2089 = vadd.f32 0.0, %v2088
        %v2090 = vpop.f32.mrb[0].mxu0
        %2091 = vmatprep.mubr.f32.mxu0 0.0
        %2092 = vmatmul.mubr.f32.gmra.mrb[0].mxu0 %v1871
        %v2093 = vpop.f32.mrb[0].mxu0
        %v2094 = vadd.f32 0.0, %v2093
        %v2095 = vpop.f32.mrb[0].mxu0
        %2096 = vmatprep.mubr.f32.mxu0 0.0
        %2097 = vmatmul.mubr.f32.gmra.mrb[0].mxu0 %v1874
        %v2098 = vpop.f32.mrb[0].mxu0
        %v2099 = vadd.f32 0.0, %v2098
        %v2100 = vpop.f32.mrb[0].mxu0
        %2101 = vmatprep.mubr.f32.mxu0 0.0
        %2102 = vmatmul.mubr.f32.gmra.mrb[0].mxu0 %v1877
        %v2103 = vpop.f32.mrb[0].mxu0
        %v2104 = vadd.f32 0.0, %v2103
        %v2105 = vpop.f32.mrb[0].mxu0
        %2106 = vdwg.mxu0
        %v2107 = vld [vmem:[%s7 + $0x2] sm:$0x1]
        %v2108 = vld [vmem:[%s8 + $0x2] sm:$0x1]
        %v2109 = vlaneseq
        %v2110 = vshrl.u32 %v2109, 7
        %v2111 = vsub.s32 0, %v2110
        %v2112 = vrot.slane %v2107, %v2111
        %v2113 = vmul.f32 %v1949, %v2112
        %v2114 = vmul.f32 %v1954, %v2112
        %v2115 = vmul.f32 %v1959, %v2112
        %v2116 = vmul.f32 %v1964, %v2112
        %v2117 = vmul.f32 %v1969, %v2112
        %v2118 = vmul.f32 %v1974, %v2112
        %v2119 = vmul.f32 %v1979, %v2112
        %v2120 = vmul.f32 %v1984, %v2112
        %v2121 = vmul.f32 %v1989, %v2112
        %v2122 = vmul.f32 %v1994, %v2112
        %v2123 = vmul.f32 %v1999, %v2112
        %v2124 = vmul.f32 %v2004, %v2112
        %v2125 = vmul.f32 %v2009, %v2112
        %v2126 = vmul.f32 %v2014, %v2112
        %v2127 = vmul.f32 %v2019, %v2112
        %v2128 = vmul.f32 %v2024, %v2112
        %v2129 = vmul.f32 %v2029, %v2112
        %v2130 = vmul.f32 %v2034, %v2112
        %v2131 = vmul.f32 %v2039, %v2112
        %v2132 = vmul.f32 %v2044, %v2112
        %v2133 = vmul.f32 %v2049, %v2112
        %v2134 = vmul.f32 %v2054, %v2112
        %v2135 = vmul.f32 %v2059, %v2112
        %v2136 = vmul.f32 %v2064, %v2112
        %v2137 = vmul.f32 %v2069, %v2112
        %v2138 = vmul.f32 %v2074, %v2112
        %v2139 = vmul.f32 %v2079, %v2112
        %v2140 = vmul.f32 %v2084, %v2112
        %v2141 = vmul.f32 %v2089, %v2112
        %v2142 = vmul.f32 %v2094, %v2112
        %v2143 = vmul.f32 %v2099, %v2112
        %v2144 = vmul.f32 %v2104, %v2112
        %v2145 = vlaneseq
        %v2146 = vshrl.u32 %v2145, 7
        %v2147 = vsub.s32 0, %v2146
        %v2148 = vrot.slane %v2108, %v2147
        %v2149 = vadd.f32 %v2113, %v2148
        %v2150 = vadd.f32 %v2114, %v2148
        %v2151 = vadd.f32 %v2115, %v2148
        %v2152 = vadd.f32 %v2116, %v2148
        %v2153 = vadd.f32 %v2117, %v2148
        %v2154 = vadd.f32 %v2118, %v2148
        %v2155 = vadd.f32 %v2119, %v2148
        %v2156 = vadd.f32 %v2120, %v2148
        %v2157 = vadd.f32 %v2121, %v2148
        %v2158 = vadd.f32 %v2122, %v2148
        %v2159 = vadd.f32 %v2123, %v2148
        %v2160 = vadd.f32 %v2124, %v2148
        %v2161 = vadd.f32 %v2125, %v2148
        %v2162 = vadd.f32 %v2126, %v2148
        %v2163 = vadd.f32 %v2127, %v2148
        %v2164 = vadd.f32 %v2128, %v2148
        %v2165 = vadd.f32 %v2129, %v2148
        %v2166 = vadd.f32 %v2130, %v2148
        %v2167 = vadd.f32 %v2131, %v2148
        %v2168 = vadd.f32 %v2132, %v2148
        %v2169 = vadd.f32 %v2133, %v2148
        %v2170 = vadd.f32 %v2134, %v2148
        %v2171 = vadd.f32 %v2135, %v2148
        %v2172 = vadd.f32 %v2136, %v2148
        %v2173 = vadd.f32 %v2137, %v2148
        %v2174 = vadd.f32 %v2138, %v2148
        %v2175 = vadd.f32 %v2139, %v2148
        %v2176 = vadd.f32 %v2140, %v2148
        %v2177 = vadd.f32 %v2141, %v2148
        %v2178 = vadd.f32 %v2142, %v2148
        %v2179 = vadd.f32 %v2143, %v2148
        %v2180 = vadd.f32 %v2144, %v2148
        %vm2181 = vcmp.ge.f32.partialorder %v2149, 0.0
        %vm2182 = vcmp.ge.f32.partialorder %v2150, 0.0
        %vm2183 = vcmp.ge.f32.partialorder %v2151, 0.0
        %vm2184 = vcmp.ge.f32.partialorder %v2152, 0.0
        %vm2185 = vcmp.ge.f32.partialorder %v2153, 0.0
        %vm2186 = vcmp.ge.f32.partialorder %v2154, 0.0
        %vm2187 = vcmp.ge.f32.partialorder %v2155, 0.0
        %vm2188 = vcmp.ge.f32.partialorder %v2156, 0.0
        %vm2189 = vcmp.ge.f32.partialorder %v2157, 0.0
        %vm2190 = vcmp.ge.f32.partialorder %v2158, 0.0
        %vm2191 = vcmp.ge.f32.partialorder %v2159, 0.0
        %vm2192 = vcmp.ge.f32.partialorder %v2160, 0.0
        %vm2193 = vcmp.ge.f32.partialorder %v2161, 0.0
        %vm2194 = vcmp.ge.f32.partialorder %v2162, 0.0
        %vm2195 = vcmp.ge.f32.partialorder %v2163, 0.0
        %vm2196 = vcmp.ge.f32.partialorder %v2164, 0.0
        %vm2197 = vcmp.ge.f32.partialorder %v2165, 0.0
        %vm2198 = vcmp.ge.f32.partialorder %v2166, 0.0
        %vm2199 = vcmp.ge.f32.partialorder %v2167, 0.0
        %vm2200 = vcmp.ge.f32.partialorder %v2168, 0.0
        %vm2201 = vcmp.ge.f32.partialorder %v2169, 0.0
        %vm2202 = vcmp.ge.f32.partialorder %v2170, 0.0
        %vm2203 = vcmp.ge.f32.partialorder %v2171, 0.0
        %vm2204 = vcmp.ge.f32.partialorder %v2172, 0.0
        %vm2205 = vcmp.ge.f32.partialorder %v2173, 0.0
        %vm2206 = vcmp.ge.f32.partialorder %v2174, 0.0
        %vm2207 = vcmp.ge.f32.partialorder %v2175, 0.0
        %vm2208 = vcmp.ge.f32.partialorder %v2176, 0.0
        %vm2209 = vcmp.ge.f32.partialorder %v2177, 0.0
        %vm2210 = vcmp.ge.f32.partialorder %v2178, 0.0
        %vm2211 = vcmp.ge.f32.partialorder %v2179, 0.0
        %vm2212 = vcmp.ge.f32.partialorder %v2180, 0.0
        %v2213 = vmul.f32 %v2149, 0.01
        %v2214 = vmul.f32 %v2150, 0.01
        %v2215 = vmul.f32 %v2151, 0.01
        %v2216 = vmul.f32 %v2152, 0.01
        %v2217 = vmul.f32 %v2153, 0.01
        %v2218 = vmul.f32 %v2154, 0.01
        %v2219 = vmul.f32 %v2155, 0.01
        %v2220 = vmul.f32 %v2156, 0.01
        %v2221 = vmul.f32 %v2157, 0.01
        %v2222 = vmul.f32 %v2158, 0.01
        %v2223 = vmul.f32 %v2159, 0.01
        %v2224 = vmul.f32 %v2160, 0.01
        %v2225 = vmul.f32 %v2161, 0.01
        %v2226 = vmul.f32 %v2162, 0.01
        %v2227 = vmul.f32 %v2163, 0.01
        %v2228 = vmul.f32 %v2164, 0.01
        %v2229 = vmul.f32 %v2165, 0.01
        %v2230 = vmul.f32 %v2166, 0.01
        %v2231 = vmul.f32 %v2167, 0.01
        %v2232 = vmul.f32 %v2168, 0.01
        %v2233 = vmul.f32 %v2169, 0.01
        %v2234 = vmul.f32 %v2170, 0.01
        %v2235 = vmul.f32 %v2171, 0.01
        %v2236 = vmul.f32 %v2172, 0.01
        %v2237 = vmul.f32 %v2173, 0.01
        %v2238 = vmul.f32 %v2174, 0.01
        %v2239 = vmul.f32 %v2175, 0.01
        %v2240 = vmul.f32 %v2176, 0.01
        %v2241 = vmul.f32 %v2177, 0.01
        %v2242 = vmul.f32 %v2178, 0.01
        %v2243 = vmul.f32 %v2179, 0.01
        %v2244 = vmul.f32 %v2180, 0.01
        %v2245 = vsel %vm2181, %v2149, %v2213
        %v2246 = vsel %vm2182, %v2150, %v2214
        %v2247 = vsel %vm2183, %v2151, %v2215
        %v2248 = vsel %vm2184, %v2152, %v2216
        %v2249 = vsel %vm2185, %v2153, %v2217
        %v2250 = vsel %vm2186, %v2154, %v2218
        %v2251 = vsel %vm2187, %v2155, %v2219
        %v2252 = vsel %vm2188, %v2156, %v2220
        %v2253 = vsel %vm2189, %v2157, %v2221
        %v2254 = vsel %vm2190, %v2158, %v2222
        %v2255 = vsel %vm2191, %v2159, %v2223
        %v2256 = vsel %vm2192, %v2160, %v2224
        %v2257 = vsel %vm2193, %v2161, %v2225
        %v2258 = vsel %vm2194, %v2162, %v2226
        %v2259 = vsel %vm2195, %v2163, %v2227
        %v2260 = vsel %vm2196, %v2164, %v2228
        %v2261 = vsel %vm2197, %v2165, %v2229
        %v2262 = vsel %vm2198, %v2166, %v2230
        %v2263 = vsel %vm2199, %v2167, %v2231
        %v2264 = vsel %vm2200, %v2168, %v2232
        %v2265 = vsel %vm2201, %v2169, %v2233
        %v2266 = vsel %vm2202, %v2170, %v2234
        %v2267 = vsel %vm2203, %v2171, %v2235
        %v2268 = vsel %vm2204, %v2172, %v2236
        %v2269 = vsel %vm2205, %v2173, %v2237
        %v2270 = vsel %vm2206, %v2174, %v2238
        %v2271 = vsel %vm2207, %v2175, %v2239
        %v2272 = vsel %vm2208, %v2176, %v2240
        %v2273 = vsel %vm2209, %v2177, %v2241
        %v2274 = vsel %vm2210, %v2178, %v2242
        %v2275 = vsel %vm2211, %v2179, %v2243
        %v2276 = vsel %vm2212, %v2180, %v2244
        %s2277 = scalar_lea.vmem %s6, 16
        %v2278 = vld [vmem:[%s2277] sm:$0xff]
        %v2280 = vsel %vm575, %v2245, 0
        %v2283 = vsel %vm575, %v2246, 0
        %v2286 = vsel %vm575, %v2247, 0
        %v2289 = vsel %vm575, %v2248, 0
        %v2292 = vsel %vm575, %v2249, 0
        %v2295 = vsel %vm575, %v2250, 0
        %v2298 = vsel %vm575, %v2251, 0
        %v2301 = vsel %vm575, %v2252, 0
        %v2304 = vsel %vm575, %v2253, 0
        %v2307 = vsel %vm575, %v2254, 0
        %v2310 = vsel %vm575, %v2255, 0
        %v2313 = vsel %vm575, %v2256, 0
        %v2316 = vsel %vm575, %v2257, 0
        %v2319 = vsel %vm575, %v2258, 0
        %v2322 = vsel %vm575, %v2259, 0
        %v2325 = vsel %vm575, %v2260, 0
        %v2328 = vsel %vm575, %v2261, 0
        %v2331 = vsel %vm575, %v2262, 0
        %v2334 = vsel %vm575, %v2263, 0
        %v2337 = vsel %vm575, %v2264, 0
        %v2340 = vsel %vm575, %v2265, 0
        %v2343 = vsel %vm575, %v2266, 0
        %v2346 = vsel %vm575, %v2267, 0
        %v2349 = vsel %vm575, %v2268, 0
        %v2352 = vsel %vm575, %v2269, 0
        %v2355 = vsel %vm575, %v2270, 0
        %v2358 = vsel %vm575, %v2271, 0
        %v2361 = vsel %vm575, %v2272, 0
        %v2364 = vsel %vm575, %v2273, 0
        %v2367 = vsel %vm575, %v2274, 0
        %v2370 = vsel %vm575, %v2275, 0
        %v2373 = vsel %vm575, %v2276, 0
        %2375 = vmatprep.subr.mxu0 0.0
        %2376 = vmatpush1.msra.mxu0 %v2278
        %2377 = vmatprep.subr.mxu0 0.0
        %2378 = vmatpush1.msra.mxu0 0.0
        %2379 = vmatprep.subr.mxu0 0.0
        %2380 = vmatpush1.msra.mxu0 0.0
        %2381 = vmatprep.subr.mxu0 0.0
        %2382 = vmatpush1.msra.mxu0 0.0
        %2383 = vmatprep.subr.mxu0 0.0
        %2384 = vmatpush1.msra.mxu0 0.0
        %2385 = vmatprep.subr.mxu0 0.0
        %2386 = vmatpush1.msra.mxu0 0.0
        %2387 = vmatprep.subr.mxu0 0.0
        %2388 = vmatpush1.msra.mxu0 0.0
        %2389 = vmatprep.subr.mxu0 0.0
        %2390 = vmatpush1.msra.mxu0 0.0
        %2391 = vmatprep.subr.mxu0 0.0
        %2392 = vmatpush1.msra.mxu0 0.0
        %2393 = vmatprep.subr.mxu0 0.0
        %2394 = vmatpush1.msra.mxu0 0.0
        %2395 = vmatprep.subr.mxu0 0.0
        %2396 = vmatpush1.msra.mxu0 0.0
        %2397 = vmatprep.subr.mxu0 0.0
        %2398 = vmatpush1.msra.mxu0 0.0
        %2399 = vmatprep.subr.mxu0 0.0
        %2400 = vmatpush1.msra.mxu0 0.0
        %2401 = vmatprep.subr.mxu0 0.0
        %2402 = vmatpush1.msra.mxu0 0.0
        %2403 = vmatprep.subr.mxu0 0.0
        %2404 = vmatpush1.msra.mxu0 0.0
        %2405 = vmatprep.subr.mxu0 0.0
        %2406 = vmatpush1.msra.mxu0 0.0
        %2407 = vmatprep.subr.mxu0 0.0
        %2408 = vmatpush1.msra.mxu0 0.0
        %2409 = vmatprep.subr.mxu0 0.0
        %2410 = vmatpush1.msra.mxu0 0.0
        %2411 = vmatprep.subr.mxu0 0.0
        %2412 = vmatpush1.msra.mxu0 0.0
        %2413 = vmatprep.subr.mxu0 0.0
        %2414 = vmatpush1.msra.mxu0 0.0
        %2415 = vmatprep.subr.mxu0 0.0
        %2416 = vmatpush1.msra.mxu0 0.0
        %2417 = vmatprep.subr.mxu0 0.0
        %2418 = vmatpush1.msra.mxu0 0.0
        %2419 = vmatprep.subr.mxu0 0.0
        %2420 = vmatpush1.msra.mxu0 0.0
        %2421 = vmatprep.subr.mxu0 0.0
        %2422 = vmatpush1.msra.mxu0 0.0
        %2423 = vmatprep.subr.mxu0 0.0
        %2424 = vmatpush1.msra.mxu0 0.0
        %2425 = vmatprep.subr.mxu0 0.0
        %2426 = vmatpush1.msra.mxu0 0.0
        %2427 = vmatprep.subr.mxu0 0.0
        %2428 = vmatpush1.msra.mxu0 0.0
        %2429 = vmatprep.subr.mxu0 0.0
        %2430 = vmatpush1.msra.mxu0 0.0
        %2431 = vmatprep.subr.mxu0 0.0
        %2432 = vmatpush1.msra.mxu0 0.0
        %2433 = vmatprep.subr.mxu0 0.0
        %2434 = vmatpush1.msra.mxu0 0.0
        %2435 = vmatprep.subr.mxu0 0.0
        %2436 = vmatpush1.msra.mxu0 0.0
        %2437 = vmatprep.subr.mxu0 0.0
        %2438 = vmatpush1.msra.mxu0 0.0
        %2439 = vmatprep.mubr.f32.mxu0 0.0
        %2440 = vmatmul.mubr.f32.gmra.mrb[0].mxu0 %v2280
        %v2441 = vpop.f32.mrb[0].mxu0
        %v2442 = vadd.f32 0.0, %v2441
        %v2443 = vpop.f32.mrb[0].mxu0
        %2444 = vmatprep.mubr.f32.mxu0 0.0
        %2445 = vmatmul.mubr.f32.gmra.mrb[0].mxu0 %v2283
        %v2446 = vpop.f32.mrb[0].mxu0
        %v2447 = vadd.f32 0.0, %v2446
        %v2448 = vpop.f32.mrb[0].mxu0
        %2449 = vmatprep.mubr.f32.mxu0 0.0
        %2450 = vmatmul.mubr.f32.gmra.mrb[0].mxu0 %v2286
        %v2451 = vpop.f32.mrb[0].mxu0
        %v2452 = vadd.f32 0.0, %v2451
        %v2453 = vpop.f32.mrb[0].mxu0
        %2454 = vmatprep.mubr.f32.mxu0 0.0
        %2455 = vmatmul.mubr.f32.gmra.mrb[0].mxu0 %v2289
        %v2456 = vpop.f32.mrb[0].mxu0
        %v2457 = vadd.f32 0.0, %v2456
        %v2458 = vpop.f32.mrb[0].mxu0
        %2459 = vmatprep.mubr.f32.mxu0 0.0
        %2460 = vmatmul.mubr.f32.gmra.mrb[0].mxu0 %v2292
        %v2461 = vpop.f32.mrb[0].mxu0
        %v2462 = vadd.f32 0.0, %v2461
        %v2463 = vpop.f32.mrb[0].mxu0
        %2464 = vmatprep.mubr.f32.mxu0 0.0
        %2465 = vmatmul.mubr.f32.gmra.mrb[0].mxu0 %v2295
        %v2466 = vpop.f32.mrb[0].mxu0
        %v2467 = vadd.f32 0.0, %v2466
        %v2468 = vpop.f32.mrb[0].mxu0
        %2469 = vmatprep.mubr.f32.mxu0 0.0
        %2470 = vmatmul.mubr.f32.gmra.mrb[0].mxu0 %v2298
        %v2471 = vpop.f32.mrb[0].mxu0
        %v2472 = vadd.f32 0.0, %v2471
        %v2473 = vpop.f32.mrb[0].mxu0
        %2474 = vmatprep.mubr.f32.mxu0 0.0
        %2475 = vmatmul.mubr.f32.gmra.mrb[0].mxu0 %v2301
        %v2476 = vpop.f32.mrb[0].mxu0
        %v2477 = vadd.f32 0.0, %v2476
        %v2478 = vpop.f32.mrb[0].mxu0
        %2479 = vmatprep.mubr.f32.mxu0 0.0
        %2480 = vmatmul.mubr.f32.gmra.mrb[0].mxu0 %v2304
        %v2481 = vpop.f32.mrb[0].mxu0
        %v2482 = vadd.f32 0.0, %v2481
        %v2483 = vpop.f32.mrb[0].mxu0
        %2484 = vmatprep.mubr.f32.mxu0 0.0
        %2485 = vmatmul.mubr.f32.gmra.mrb[0].mxu0 %v2307
        %v2486 = vpop.f32.mrb[0].mxu0
        %v2487 = vadd.f32 0.0, %v2486
        %v2488 = vpop.f32.mrb[0].mxu0
        %2489 = vmatprep.mubr.f32.mxu0 0.0
        %2490 = vmatmul.mubr.f32.gmra.mrb[0].mxu0 %v2310
        %v2491 = vpop.f32.mrb[0].mxu0
        %v2492 = vadd.f32 0.0, %v2491
        %v2493 = vpop.f32.mrb[0].mxu0
        %2494 = vmatprep.mubr.f32.mxu0 0.0
        %2495 = vmatmul.mubr.f32.gmra.mrb[0].mxu0 %v2313
        %v2496 = vpop.f32.mrb[0].mxu0
        %v2497 = vadd.f32 0.0, %v2496
        %v2498 = vpop.f32.mrb[0].mxu0
        %2499 = vmatprep.mubr.f32.mxu0 0.0
        %2500 = vmatmul.mubr.f32.gmra.mrb[0].mxu0 %v2316
        %v2501 = vpop.f32.mrb[0].mxu0
        %v2502 = vadd.f32 0.0, %v2501
        %v2503 = vpop.f32.mrb[0].mxu0
        %2504 = vmatprep.mubr.f32.mxu0 0.0
        %2505 = vmatmul.mubr.f32.gmra.mrb[0].mxu0 %v2319
        %v2506 = vpop.f32.mrb[0].mxu0
        %v2507 = vadd.f32 0.0, %v2506
        %v2508 = vpop.f32.mrb[0].mxu0
        %2509 = vmatprep.mubr.f32.mxu0 0.0
        %2510 = vmatmul.mubr.f32.gmra.mrb[0].mxu0 %v2322
        %v2511 = vpop.f32.mrb[0].mxu0
        %v2512 = vadd.f32 0.0, %v2511
        %v2513 = vpop.f32.mrb[0].mxu0
        %2514 = vmatprep.mubr.f32.mxu0 0.0
        %2515 = vmatmul.mubr.f32.gmra.mrb[0].mxu0 %v2325
        %v2516 = vpop.f32.mrb[0].mxu0
        %v2517 = vadd.f32 0.0, %v2516
        %v2518 = vpop.f32.mrb[0].mxu0
        %2519 = vmatprep.mubr.f32.mxu0 0.0
        %2520 = vmatmul.mubr.f32.gmra.mrb[0].mxu0 %v2328
        %v2521 = vpop.f32.mrb[0].mxu0
        %v2522 = vadd.f32 0.0, %v2521
        %v2523 = vpop.f32.mrb[0].mxu0
        %2524 = vmatprep.mubr.f32.mxu0 0.0
        %2525 = vmatmul.mubr.f32.gmra.mrb[0].mxu0 %v2331
        %v2526 = vpop.f32.mrb[0].mxu0
        %v2527 = vadd.f32 0.0, %v2526
        %v2528 = vpop.f32.mrb[0].mxu0
        %2529 = vmatprep.mubr.f32.mxu0 0.0
        %2530 = vmatmul.mubr.f32.gmra.mrb[0].mxu0 %v2334
        %v2531 = vpop.f32.mrb[0].mxu0
        %v2532 = vadd.f32 0.0, %v2531
        %v2533 = vpop.f32.mrb[0].mxu0
        %2534 = vmatprep.mubr.f32.mxu0 0.0
        %2535 = vmatmul.mubr.f32.gmra.mrb[0].mxu0 %v2337
        %v2536 = vpop.f32.mrb[0].mxu0
        %v2537 = vadd.f32 0.0, %v2536
        %v2538 = vpop.f32.mrb[0].mxu0
        %2539 = vmatprep.mubr.f32.mxu0 0.0
        %2540 = vmatmul.mubr.f32.gmra.mrb[0].mxu0 %v2340
        %v2541 = vpop.f32.mrb[0].mxu0
        %v2542 = vadd.f32 0.0, %v2541
        %v2543 = vpop.f32.mrb[0].mxu0
        %2544 = vmatprep.mubr.f32.mxu0 0.0
        %2545 = vmatmul.mubr.f32.gmra.mrb[0].mxu0 %v2343
        %v2546 = vpop.f32.mrb[0].mxu0
        %v2547 = vadd.f32 0.0, %v2546
        %v2548 = vpop.f32.mrb[0].mxu0
        %2549 = vmatprep.mubr.f32.mxu0 0.0
        %2550 = vmatmul.mubr.f32.gmra.mrb[0].mxu0 %v2346
        %v2551 = vpop.f32.mrb[0].mxu0
        %v2552 = vadd.f32 0.0, %v2551
        %v2553 = vpop.f32.mrb[0].mxu0
        %2554 = vmatprep.mubr.f32.mxu0 0.0
        %2555 = vmatmul.mubr.f32.gmra.mrb[0].mxu0 %v2349
        %v2556 = vpop.f32.mrb[0].mxu0
        %v2557 = vadd.f32 0.0, %v2556
        %v2558 = vpop.f32.mrb[0].mxu0
        %2559 = vmatprep.mubr.f32.mxu0 0.0
        %2560 = vmatmul.mubr.f32.gmra.mrb[0].mxu0 %v2352
        %v2561 = vpop.f32.mrb[0].mxu0
        %v2562 = vadd.f32 0.0, %v2561
        %v2563 = vpop.f32.mrb[0].mxu0
        %2564 = vmatprep.mubr.f32.mxu0 0.0
        %2565 = vmatmul.mubr.f32.gmra.mrb[0].mxu0 %v2355
        %v2566 = vpop.f32.mrb[0].mxu0
        %v2567 = vadd.f32 0.0, %v2566
        %v2568 = vpop.f32.mrb[0].mxu0
        %2569 = vmatprep.mubr.f32.mxu0 0.0
        %2570 = vmatmul.mubr.f32.gmra.mrb[0].mxu0 %v2358
        %v2571 = vpop.f32.mrb[0].mxu0
        %v2572 = vadd.f32 0.0, %v2571
        %v2573 = vpop.f32.mrb[0].mxu0
        %2574 = vmatprep.mubr.f32.mxu0 0.0
        %2575 = vmatmul.mubr.f32.gmra.mrb[0].mxu0 %v2361
        %v2576 = vpop.f32.mrb[0].mxu0
        %v2577 = vadd.f32 0.0, %v2576
        %v2578 = vpop.f32.mrb[0].mxu0
        %2579 = vmatprep.mubr.f32.mxu0 0.0
        %2580 = vmatmul.mubr.f32.gmra.mrb[0].mxu0 %v2364
        %v2581 = vpop.f32.mrb[0].mxu0
        %v2582 = vadd.f32 0.0, %v2581
        %v2583 = vpop.f32.mrb[0].mxu0
        %2584 = vmatprep.mubr.f32.mxu0 0.0
        %2585 = vmatmul.mubr.f32.gmra.mrb[0].mxu0 %v2367
        %v2586 = vpop.f32.mrb[0].mxu0
        %v2587 = vadd.f32 0.0, %v2586
        %v2588 = vpop.f32.mrb[0].mxu0
        %2589 = vmatprep.mubr.f32.mxu0 0.0
        %2590 = vmatmul.mubr.f32.gmra.mrb[0].mxu0 %v2370
        %v2591 = vpop.f32.mrb[0].mxu0
        %v2592 = vadd.f32 0.0, %v2591
        %v2593 = vpop.f32.mrb[0].mxu0
        %2594 = vmatprep.mubr.f32.mxu0 0.0
        %2595 = vmatmul.mubr.f32.gmra.mrb[0].mxu0 %v2373
        %v2596 = vpop.f32.mrb[0].mxu0
        %v2597 = vadd.f32 0.0, %v2596
        %v2598 = vpop.f32.mrb[0].mxu0
        %2599 = vdwg.mxu0
        %v2601 = vsel %vm575, %v1112, 0
        %v2604 = vsel %vm575, %v1113, 0
        %v2607 = vsel %vm575, %v1114, 0
        %v2610 = vsel %vm575, %v1115, 0
        %v2613 = vsel %vm575, %v1116, 0
        %v2616 = vsel %vm575, %v1117, 0
        %v2619 = vsel %vm575, %v1118, 0
        %v2622 = vsel %vm575, %v1119, 0
        %v2625 = vsel %vm575, %v1120, 0
        %v2628 = vsel %vm575, %v1121, 0
        %v2631 = vsel %vm575, %v1122, 0
        %v2634 = vsel %vm575, %v1123, 0
        %v2637 = vsel %vm575, %v1124, 0
        %v2640 = vsel %vm575, %v1125, 0
        %v2643 = vsel %vm575, %v1126, 0
        %v2646 = vsel %vm575, %v1127, 0
        %v2649 = vsel %vm575, %v1128, 0
        %v2652 = vsel %vm575, %v1129, 0
        %v2655 = vsel %vm575, %v1130, 0
        %v2658 = vsel %vm575, %v1131, 0
        %v2661 = vsel %vm575, %v1132, 0
        %v2664 = vsel %vm575, %v1133, 0
        %v2667 = vsel %vm575, %v1134, 0
        %v2670 = vsel %vm575, %v1135, 0
        %v2673 = vsel %vm575, %v1136, 0
        %v2676 = vsel %vm575, %v1137, 0
        %v2679 = vsel %vm575, %v1138, 0
        %v2682 = vsel %vm575, %v1139, 0
        %v2685 = vsel %vm575, %v1140, 0
        %v2688 = vsel %vm575, %v1141, 0
        %v2691 = vsel %vm575, %v1142, 0
        %v2694 = vsel %vm575, %v1143, 0
        %2696 = vmatprep.subr.mxu0 0.0
        %2697 = vmatpush1.msra.mxu0 %v1145
        %2698 = vmatprep.subr.mxu0 0.0
        %2699 = vmatpush1.msra.mxu0 0.0
        %2700 = vmatprep.subr.mxu0 0.0
        %2701 = vmatpush1.msra.mxu0 0.0
        %2702 = vmatprep.subr.mxu0 0.0
        %2703 = vmatpush1.msra.mxu0 0.0
        %2704 = vmatprep.subr.mxu0 0.0
        %2705 = vmatpush1.msra.mxu0 0.0
        %2706 = vmatprep.subr.mxu0 0.0
        %2707 = vmatpush1.msra.mxu0 0.0
        %2708 = vmatprep.subr.mxu0 0.0
        %2709 = vmatpush1.msra.mxu0 0.0
        %2710 = vmatprep.subr.mxu0 0.0
        %2711 = vmatpush1.msra.mxu0 0.0
        %2712 = vmatprep.subr.mxu0 0.0
        %2713 = vmatpush1.msra.mxu0 0.0
        %2714 = vmatprep.subr.mxu0 0.0
        %2715 = vmatpush1.msra.mxu0 0.0
        %2716 = vmatprep.subr.mxu0 0.0
        %2717 = vmatpush1.msra.mxu0 0.0
        %2718 = vmatprep.subr.mxu0 0.0
        %2719 = vmatpush1.msra.mxu0 0.0
        %2720 = vmatprep.subr.mxu0 0.0
        %2721 = vmatpush1.msra.mxu0 0.0
        %2722 = vmatprep.subr.mxu0 0.0
        %2723 = vmatpush1.msra.mxu0 0.0
        %2724 = vmatprep.subr.mxu0 0.0
        %2725 = vmatpush1.msra.mxu0 0.0
        %2726 = vmatprep.subr.mxu0 0.0
        %2727 = vmatpush1.msra.mxu0 0.0
        %2728 = vmatprep.subr.mxu0 0.0
        %2729 = vmatpush1.msra.mxu0 0.0
        %2730 = vmatprep.subr.mxu0 0.0
        %2731 = vmatpush1.msra.mxu0 0.0
        %2732 = vmatprep.subr.mxu0 0.0
        %2733 = vmatpush1.msra.mxu0 0.0
        %2734 = vmatprep.subr.mxu0 0.0
        %2735 = vmatpush1.msra.mxu0 0.0
        %2736 = vmatprep.subr.mxu0 0.0
        %2737 = vmatpush1.msra.mxu0 0.0
        %2738 = vmatprep.subr.mxu0 0.0
        %2739 = vmatpush1.msra.mxu0 0.0
        %2740 = vmatprep.subr.mxu0 0.0
        %2741 = vmatpush1.msra.mxu0 0.0
        %2742 = vmatprep.subr.mxu0 0.0
        %2743 = vmatpush1.msra.mxu0 0.0
        %2744 = vmatprep.subr.mxu0 0.0
        %2745 = vmatpush1.msra.mxu0 0.0
        %2746 = vmatprep.subr.mxu0 0.0
        %2747 = vmatpush1.msra.mxu0 0.0
        %2748 = vmatprep.subr.mxu0 0.0
        %2749 = vmatpush1.msra.mxu0 0.0
        %2750 = vmatprep.subr.mxu0 0.0
        %2751 = vmatpush1.msra.mxu0 0.0
        %2752 = vmatprep.subr.mxu0 0.0
        %2753 = vmatpush1.msra.mxu0 0.0
        %2754 = vmatprep.subr.mxu0 0.0
        %2755 = vmatpush1.msra.mxu0 0.0
        %2756 = vmatprep.subr.mxu0 0.0
        %2757 = vmatpush1.msra.mxu0 0.0
        %2758 = vmatprep.subr.mxu0 0.0
        %2759 = vmatpush1.msra.mxu0 0.0
        %2760 = vmatprep.mubr.f32.mxu0 0.0
        %2761 = vmatmul.mubr.f32.gmra.mrb[0].mxu0 %v2601
        %v2762 = vpop.f32.mrb[0].mxu0
        %v2763 = vadd.f32 %v2442, %v2762
        %v2764 = vpop.f32.mrb[0].mxu0
        %2765 = vmatprep.mubr.f32.mxu0 0.0
        %2766 = vmatmul.mubr.f32.gmra.mrb[0].mxu0 %v2604
        %v2767 = vpop.f32.mrb[0].mxu0
        %v2768 = vadd.f32 %v2447, %v2767
        %v2769 = vpop.f32.mrb[0].mxu0
        %2770 = vmatprep.mubr.f32.mxu0 0.0
        %2771 = vmatmul.mubr.f32.gmra.mrb[0].mxu0 %v2607
        %v2772 = vpop.f32.mrb[0].mxu0
        %v2773 = vadd.f32 %v2452, %v2772
        %v2774 = vpop.f32.mrb[0].mxu0
        %2775 = vmatprep.mubr.f32.mxu0 0.0
        %2776 = vmatmul.mubr.f32.gmra.mrb[0].mxu0 %v2610
        %v2777 = vpop.f32.mrb[0].mxu0
        %v2778 = vadd.f32 %v2457, %v2777
        %v2779 = vpop.f32.mrb[0].mxu0
        %2780 = vmatprep.mubr.f32.mxu0 0.0
        %2781 = vmatmul.mubr.f32.gmra.mrb[0].mxu0 %v2613
        %v2782 = vpop.f32.mrb[0].mxu0
        %v2783 = vadd.f32 %v2462, %v2782
        %v2784 = vpop.f32.mrb[0].mxu0
        %2785 = vmatprep.mubr.f32.mxu0 0.0
        %2786 = vmatmul.mubr.f32.gmra.mrb[0].mxu0 %v2616
        %v2787 = vpop.f32.mrb[0].mxu0
        %v2788 = vadd.f32 %v2467, %v2787
        %v2789 = vpop.f32.mrb[0].mxu0
        %2790 = vmatprep.mubr.f32.mxu0 0.0
        %2791 = vmatmul.mubr.f32.gmra.mrb[0].mxu0 %v2619
        %v2792 = vpop.f32.mrb[0].mxu0
        %v2793 = vadd.f32 %v2472, %v2792
        %v2794 = vpop.f32.mrb[0].mxu0
        %2795 = vmatprep.mubr.f32.mxu0 0.0
        %2796 = vmatmul.mubr.f32.gmra.mrb[0].mxu0 %v2622
        %v2797 = vpop.f32.mrb[0].mxu0
        %v2798 = vadd.f32 %v2477, %v2797
        %v2799 = vpop.f32.mrb[0].mxu0
        %2800 = vmatprep.mubr.f32.mxu0 0.0
        %2801 = vmatmul.mubr.f32.gmra.mrb[0].mxu0 %v2625
        %v2802 = vpop.f32.mrb[0].mxu0
        %v2803 = vadd.f32 %v2482, %v2802
        %v2804 = vpop.f32.mrb[0].mxu0
        %2805 = vmatprep.mubr.f32.mxu0 0.0
        %2806 = vmatmul.mubr.f32.gmra.mrb[0].mxu0 %v2628
        %v2807 = vpop.f32.mrb[0].mxu0
        %v2808 = vadd.f32 %v2487, %v2807
        %v2809 = vpop.f32.mrb[0].mxu0
        %2810 = vmatprep.mubr.f32.mxu0 0.0
        %2811 = vmatmul.mubr.f32.gmra.mrb[0].mxu0 %v2631
        %v2812 = vpop.f32.mrb[0].mxu0
        %v2813 = vadd.f32 %v2492, %v2812
        %v2814 = vpop.f32.mrb[0].mxu0
        %2815 = vmatprep.mubr.f32.mxu0 0.0
        %2816 = vmatmul.mubr.f32.gmra.mrb[0].mxu0 %v2634
        %v2817 = vpop.f32.mrb[0].mxu0
        %v2818 = vadd.f32 %v2497, %v2817
        %v2819 = vpop.f32.mrb[0].mxu0
        %2820 = vmatprep.mubr.f32.mxu0 0.0
        %2821 = vmatmul.mubr.f32.gmra.mrb[0].mxu0 %v2637
        %v2822 = vpop.f32.mrb[0].mxu0
        %v2823 = vadd.f32 %v2502, %v2822
        %v2824 = vpop.f32.mrb[0].mxu0
        %2825 = vmatprep.mubr.f32.mxu0 0.0
        %2826 = vmatmul.mubr.f32.gmra.mrb[0].mxu0 %v2640
        %v2827 = vpop.f32.mrb[0].mxu0
        %v2828 = vadd.f32 %v2507, %v2827
        %v2829 = vpop.f32.mrb[0].mxu0
        %2830 = vmatprep.mubr.f32.mxu0 0.0
        %2831 = vmatmul.mubr.f32.gmra.mrb[0].mxu0 %v2643
        %v2832 = vpop.f32.mrb[0].mxu0
        %v2833 = vadd.f32 %v2512, %v2832
        %v2834 = vpop.f32.mrb[0].mxu0
        %2835 = vmatprep.mubr.f32.mxu0 0.0
        %2836 = vmatmul.mubr.f32.gmra.mrb[0].mxu0 %v2646
        %v2837 = vpop.f32.mrb[0].mxu0
        %v2838 = vadd.f32 %v2517, %v2837
        %v2839 = vpop.f32.mrb[0].mxu0
        %2840 = vmatprep.mubr.f32.mxu0 0.0
        %2841 = vmatmul.mubr.f32.gmra.mrb[0].mxu0 %v2649
        %v2842 = vpop.f32.mrb[0].mxu0
        %v2843 = vadd.f32 %v2522, %v2842
        %v2844 = vpop.f32.mrb[0].mxu0
        %2845 = vmatprep.mubr.f32.mxu0 0.0
        %2846 = vmatmul.mubr.f32.gmra.mrb[0].mxu0 %v2652
        %v2847 = vpop.f32.mrb[0].mxu0
        %v2848 = vadd.f32 %v2527, %v2847
        %v2849 = vpop.f32.mrb[0].mxu0
        %2850 = vmatprep.mubr.f32.mxu0 0.0
        %2851 = vmatmul.mubr.f32.gmra.mrb[0].mxu0 %v2655
        %v2852 = vpop.f32.mrb[0].mxu0
        %v2853 = vadd.f32 %v2532, %v2852
        %v2854 = vpop.f32.mrb[0].mxu0
        %2855 = vmatprep.mubr.f32.mxu0 0.0
        %2856 = vmatmul.mubr.f32.gmra.mrb[0].mxu0 %v2658
        %v2857 = vpop.f32.mrb[0].mxu0
        %v2858 = vadd.f32 %v2537, %v2857
        %v2859 = vpop.f32.mrb[0].mxu0
        %2860 = vmatprep.mubr.f32.mxu0 0.0
        %2861 = vmatmul.mubr.f32.gmra.mrb[0].mxu0 %v2661
        %v2862 = vpop.f32.mrb[0].mxu0
        %v2863 = vadd.f32 %v2542, %v2862
        %v2864 = vpop.f32.mrb[0].mxu0
        %2865 = vmatprep.mubr.f32.mxu0 0.0
        %2866 = vmatmul.mubr.f32.gmra.mrb[0].mxu0 %v2664
        %v2867 = vpop.f32.mrb[0].mxu0
        %v2868 = vadd.f32 %v2547, %v2867
        %v2869 = vpop.f32.mrb[0].mxu0
        %2870 = vmatprep.mubr.f32.mxu0 0.0
        %2871 = vmatmul.mubr.f32.gmra.mrb[0].mxu0 %v2667
        %v2872 = vpop.f32.mrb[0].mxu0
        %v2873 = vadd.f32 %v2552, %v2872
        %v2874 = vpop.f32.mrb[0].mxu0
        %2875 = vmatprep.mubr.f32.mxu0 0.0
        %2876 = vmatmul.mubr.f32.gmra.mrb[0].mxu0 %v2670
        %v2877 = vpop.f32.mrb[0].mxu0
        %v2878 = vadd.f32 %v2557, %v2877
        %v2879 = vpop.f32.mrb[0].mxu0
        %2880 = vmatprep.mubr.f32.mxu0 0.0
        %2881 = vmatmul.mubr.f32.gmra.mrb[0].mxu0 %v2673
        %v2882 = vpop.f32.mrb[0].mxu0
        %v2883 = vadd.f32 %v2562, %v2882
        %v2884 = vpop.f32.mrb[0].mxu0
        %2885 = vmatprep.mubr.f32.mxu0 0.0
        %2886 = vmatmul.mubr.f32.gmra.mrb[0].mxu0 %v2676
        %v2887 = vpop.f32.mrb[0].mxu0
        %v2888 = vadd.f32 %v2567, %v2887
        %v2889 = vpop.f32.mrb[0].mxu0
        %2890 = vmatprep.mubr.f32.mxu0 0.0
        %2891 = vmatmul.mubr.f32.gmra.mrb[0].mxu0 %v2679
        %v2892 = vpop.f32.mrb[0].mxu0
        %v2893 = vadd.f32 %v2572, %v2892
        %v2894 = vpop.f32.mrb[0].mxu0
        %2895 = vmatprep.mubr.f32.mxu0 0.0
        %2896 = vmatmul.mubr.f32.gmra.mrb[0].mxu0 %v2682
        %v2897 = vpop.f32.mrb[0].mxu0
        %v2898 = vadd.f32 %v2577, %v2897
        %v2899 = vpop.f32.mrb[0].mxu0
        %2900 = vmatprep.mubr.f32.mxu0 0.0
        %2901 = vmatmul.mubr.f32.gmra.mrb[0].mxu0 %v2685
        %v2902 = vpop.f32.mrb[0].mxu0
        %v2903 = vadd.f32 %v2582, %v2902
        %v2904 = vpop.f32.mrb[0].mxu0
        %2905 = vmatprep.mubr.f32.mxu0 0.0
        %2906 = vmatmul.mubr.f32.gmra.mrb[0].mxu0 %v2688
        %v2907 = vpop.f32.mrb[0].mxu0
        %v2908 = vadd.f32 %v2587, %v2907
        %v2909 = vpop.f32.mrb[0].mxu0
        %2910 = vmatprep.mubr.f32.mxu0 0.0
        %2911 = vmatmul.mubr.f32.gmra.mrb[0].mxu0 %v2691
        %v2912 = vpop.f32.mrb[0].mxu0
        %v2913 = vadd.f32 %v2592, %v2912
        %v2914 = vpop.f32.mrb[0].mxu0
        %2915 = vmatprep.mubr.f32.mxu0 0.0
        %2916 = vmatmul.mubr.f32.gmra.mrb[0].mxu0 %v2694
        %v2917 = vpop.f32.mrb[0].mxu0
        %v2918 = vadd.f32 %v2597, %v2917
        %v2919 = vpop.f32.mrb[0].mxu0
        %2920 = vdwg.mxu0
        %v2921 = vld [vmem:[%s4] sm:$0xf]
        %v2923 = vsel %vm493, %v2921, 0
        %2925 = vmatprep.subr.mxu0 0.0
        %2926 = vmatpush1.msra.mxu0 %v2923
        %2927 = vmatprep.subr.mxu0 0.0
        %2928 = vmatpush1.msra.mxu0 0.0
        %2929 = vmatprep.subr.mxu0 0.0
        %2930 = vmatpush1.msra.mxu0 0.0
        %2931 = vmatprep.subr.mxu0 0.0
        %2932 = vmatpush1.msra.mxu0 0.0
        %2933 = vmatprep.subr.mxu0 0.0
        %2934 = vmatpush1.msra.mxu0 0.0
        %2935 = vmatprep.subr.mxu0 0.0
        %2936 = vmatpush1.msra.mxu0 0.0
        %2937 = vmatprep.subr.mxu0 0.0
        %2938 = vmatpush1.msra.mxu0 0.0
        %2939 = vmatprep.subr.mxu0 0.0
        %2940 = vmatpush1.msra.mxu0 0.0
        %2941 = vmatprep.subr.mxu0 0.0
        %2942 = vmatpush1.msra.mxu0 0.0
        %2943 = vmatprep.subr.mxu0 0.0
        %2944 = vmatpush1.msra.mxu0 0.0
        %2945 = vmatprep.subr.mxu0 0.0
        %2946 = vmatpush1.msra.mxu0 0.0
        %2947 = vmatprep.subr.mxu0 0.0
        %2948 = vmatpush1.msra.mxu0 0.0
        %2949 = vmatprep.subr.mxu0 0.0
        %2950 = vmatpush1.msra.mxu0 0.0
        %2951 = vmatprep.subr.mxu0 0.0
        %2952 = vmatpush1.msra.mxu0 0.0
        %2953 = vmatprep.subr.mxu0 0.0
        %2954 = vmatpush1.msra.mxu0 0.0
        %2955 = vmatprep.subr.mxu0 0.0
        %2956 = vmatpush1.msra.mxu0 0.0
        %2957 = vmatprep.subr.mxu0 0.0
        %2958 = vmatpush1.msra.mxu0 0.0
        %2959 = vmatprep.subr.mxu0 0.0
        %2960 = vmatpush1.msra.mxu0 0.0
        %2961 = vmatprep.subr.mxu0 0.0
        %2962 = vmatpush1.msra.mxu0 0.0
        %2963 = vmatprep.subr.mxu0 0.0
        %2964 = vmatpush1.msra.mxu0 0.0
        %2965 = vmatprep.subr.mxu0 0.0
        %2966 = vmatpush1.msra.mxu0 0.0
        %2967 = vmatprep.subr.mxu0 0.0
        %2968 = vmatpush1.msra.mxu0 0.0
        %2969 = vmatprep.subr.mxu0 0.0
        %2970 = vmatpush1.msra.mxu0 0.0
        %2971 = vmatprep.subr.mxu0 0.0
        %2972 = vmatpush1.msra.mxu0 0.0
        %2973 = vmatprep.subr.mxu0 0.0
        %2974 = vmatpush1.msra.mxu0 0.0
        %2975 = vmatprep.subr.mxu0 0.0
        %2976 = vmatpush1.msra.mxu0 0.0
        %2977 = vmatprep.subr.mxu0 0.0
        %2978 = vmatpush1.msra.mxu0 0.0
        %2979 = vmatprep.subr.mxu0 0.0
        %2980 = vmatpush1.msra.mxu0 0.0
        %2981 = vmatprep.subr.mxu0 0.0
        %2982 = vmatpush1.msra.mxu0 0.0
        %2983 = vmatprep.subr.mxu0 0.0
        %2984 = vmatpush1.msra.mxu0 0.0
        %2985 = vmatprep.subr.mxu0 0.0
        %2986 = vmatpush1.msra.mxu0 0.0
        %2987 = vmatprep.subr.mxu0 0.0
        %2988 = vmatpush1.msra.mxu0 0.0
        %2989 = vmatprep.mubr.f32.mxu0 0.0
        %2990 = vmatmul.mubr.f32.gmra.mrb[0].mxu0 %v651
        %v2991 = vpop.f32.mrb[0].mxu0
        %v2992 = vadd.f32 0.0, %v2991
        %v2993 = vpop.f32.mrb[0].mxu0
        %2994 = vmatprep.mubr.f32.mxu0 0.0
        %2995 = vmatmul.mubr.f32.gmra.mrb[0].mxu0 %v654
        %v2996 = vpop.f32.mrb[0].mxu0
        %v2997 = vadd.f32 0.0, %v2996
        %v2998 = vpop.f32.mrb[0].mxu0
        %2999 = vmatprep.mubr.f32.mxu0 0.0
        %3000 = vmatmul.mubr.f32.gmra.mrb[0].mxu0 %v657
        %v3001 = vpop.f32.mrb[0].mxu0
        %v3002 = vadd.f32 0.0, %v3001
        %v3003 = vpop.f32.mrb[0].mxu0
        %3004 = vmatprep.mubr.f32.mxu0 0.0
        %3005 = vmatmul.mubr.f32.gmra.mrb[0].mxu0 %v660
        %v3006 = vpop.f32.mrb[0].mxu0
        %v3007 = vadd.f32 0.0, %v3006
        %v3008 = vpop.f32.mrb[0].mxu0
        %3009 = vmatprep.mubr.f32.mxu0 0.0
        %3010 = vmatmul.mubr.f32.gmra.mrb[0].mxu0 %v663
        %v3011 = vpop.f32.mrb[0].mxu0
        %v3012 = vadd.f32 0.0, %v3011
        %v3013 = vpop.f32.mrb[0].mxu0
        %3014 = vmatprep.mubr.f32.mxu0 0.0
        %3015 = vmatmul.mubr.f32.gmra.mrb[0].mxu0 %v666
        %v3016 = vpop.f32.mrb[0].mxu0
        %v3017 = vadd.f32 0.0, %v3016
        %v3018 = vpop.f32.mrb[0].mxu0
        %3019 = vmatprep.mubr.f32.mxu0 0.0
        %3020 = vmatmul.mubr.f32.gmra.mrb[0].mxu0 %v669
        %v3021 = vpop.f32.mrb[0].mxu0
        %v3022 = vadd.f32 0.0, %v3021
        %v3023 = vpop.f32.mrb[0].mxu0
        %3024 = vmatprep.mubr.f32.mxu0 0.0
        %3025 = vmatmul.mubr.f32.gmra.mrb[0].mxu0 %v672
        %v3026 = vpop.f32.mrb[0].mxu0
        %v3027 = vadd.f32 0.0, %v3026
        %v3028 = vpop.f32.mrb[0].mxu0
        %3029 = vmatprep.mubr.f32.mxu0 0.0
        %3030 = vmatmul.mubr.f32.gmra.mrb[0].mxu0 %v675
        %v3031 = vpop.f32.mrb[0].mxu0
        %v3032 = vadd.f32 0.0, %v3031
        %v3033 = vpop.f32.mrb[0].mxu0
        %3034 = vmatprep.mubr.f32.mxu0 0.0
        %3035 = vmatmul.mubr.f32.gmra.mrb[0].mxu0 %v678
        %v3036 = vpop.f32.mrb[0].mxu0
        %v3037 = vadd.f32 0.0, %v3036
        %v3038 = vpop.f32.mrb[0].mxu0
        %3039 = vmatprep.mubr.f32.mxu0 0.0
        %3040 = vmatmul.mubr.f32.gmra.mrb[0].mxu0 %v681
        %v3041 = vpop.f32.mrb[0].mxu0
        %v3042 = vadd.f32 0.0, %v3041
        %v3043 = vpop.f32.mrb[0].mxu0
        %3044 = vmatprep.mubr.f32.mxu0 0.0
        %3045 = vmatmul.mubr.f32.gmra.mrb[0].mxu0 %v684
        %v3046 = vpop.f32.mrb[0].mxu0
        %v3047 = vadd.f32 0.0, %v3046
        %v3048 = vpop.f32.mrb[0].mxu0
        %3049 = vmatprep.mubr.f32.mxu0 0.0
        %3050 = vmatmul.mubr.f32.gmra.mrb[0].mxu0 %v687
        %v3051 = vpop.f32.mrb[0].mxu0
        %v3052 = vadd.f32 0.0, %v3051
        %v3053 = vpop.f32.mrb[0].mxu0
        %3054 = vmatprep.mubr.f32.mxu0 0.0
        %3055 = vmatmul.mubr.f32.gmra.mrb[0].mxu0 %v690
        %v3056 = vpop.f32.mrb[0].mxu0
        %v3057 = vadd.f32 0.0, %v3056
        %v3058 = vpop.f32.mrb[0].mxu0
        %3059 = vmatprep.mubr.f32.mxu0 0.0
        %3060 = vmatmul.mubr.f32.gmra.mrb[0].mxu0 %v693
        %v3061 = vpop.f32.mrb[0].mxu0
        %v3062 = vadd.f32 0.0, %v3061
        %v3063 = vpop.f32.mrb[0].mxu0
        %3064 = vmatprep.mubr.f32.mxu0 0.0
        %3065 = vmatmul.mubr.f32.gmra.mrb[0].mxu0 %v696
        %v3066 = vpop.f32.mrb[0].mxu0
        %v3067 = vadd.f32 0.0, %v3066
        %v3068 = vpop.f32.mrb[0].mxu0
        %3069 = vmatprep.mubr.f32.mxu0 0.0
        %3070 = vmatmul.mubr.f32.gmra.mrb[0].mxu0 %v699
        %v3071 = vpop.f32.mrb[0].mxu0
        %v3072 = vadd.f32 0.0, %v3071
        %v3073 = vpop.f32.mrb[0].mxu0
        %3074 = vmatprep.mubr.f32.mxu0 0.0
        %3075 = vmatmul.mubr.f32.gmra.mrb[0].mxu0 %v702
        %v3076 = vpop.f32.mrb[0].mxu0
        %v3077 = vadd.f32 0.0, %v3076
        %v3078 = vpop.f32.mrb[0].mxu0
        %3079 = vmatprep.mubr.f32.mxu0 0.0
        %3080 = vmatmul.mubr.f32.gmra.mrb[0].mxu0 %v705
        %v3081 = vpop.f32.mrb[0].mxu0
        %v3082 = vadd.f32 0.0, %v3081
        %v3083 = vpop.f32.mrb[0].mxu0
        %3084 = vmatprep.mubr.f32.mxu0 0.0
        %3085 = vmatmul.mubr.f32.gmra.mrb[0].mxu0 %v708
        %v3086 = vpop.f32.mrb[0].mxu0
        %v3087 = vadd.f32 0.0, %v3086
        %v3088 = vpop.f32.mrb[0].mxu0
        %3089 = vmatprep.mubr.f32.mxu0 0.0
        %3090 = vmatmul.mubr.f32.gmra.mrb[0].mxu0 %v711
        %v3091 = vpop.f32.mrb[0].mxu0
        %v3092 = vadd.f32 0.0, %v3091
        %v3093 = vpop.f32.mrb[0].mxu0
        %3094 = vmatprep.mubr.f32.mxu0 0.0
        %3095 = vmatmul.mubr.f32.gmra.mrb[0].mxu0 %v714
        %v3096 = vpop.f32.mrb[0].mxu0
        %v3097 = vadd.f32 0.0, %v3096
        %v3098 = vpop.f32.mrb[0].mxu0
        %3099 = vmatprep.mubr.f32.mxu0 0.0
        %3100 = vmatmul.mubr.f32.gmra.mrb[0].mxu0 %v717
        %v3101 = vpop.f32.mrb[0].mxu0
        %v3102 = vadd.f32 0.0, %v3101
        %v3103 = vpop.f32.mrb[0].mxu0
        %3104 = vmatprep.mubr.f32.mxu0 0.0
        %3105 = vmatmul.mubr.f32.gmra.mrb[0].mxu0 %v720
        %v3106 = vpop.f32.mrb[0].mxu0
        %v3107 = vadd.f32 0.0, %v3106
        %v3108 = vpop.f32.mrb[0].mxu0
        %3109 = vmatprep.mubr.f32.mxu0 0.0
        %3110 = vmatmul.mubr.f32.gmra.mrb[0].mxu0 %v723
        %v3111 = vpop.f32.mrb[0].mxu0
        %v3112 = vadd.f32 0.0, %v3111
        %v3113 = vpop.f32.mrb[0].mxu0
        %3114 = vmatprep.mubr.f32.mxu0 0.0
        %3115 = vmatmul.mubr.f32.gmra.mrb[0].mxu0 %v726
        %v3116 = vpop.f32.mrb[0].mxu0
        %v3117 = vadd.f32 0.0, %v3116
        %v3118 = vpop.f32.mrb[0].mxu0
        %3119 = vmatprep.mubr.f32.mxu0 0.0
        %3120 = vmatmul.mubr.f32.gmra.mrb[0].mxu0 %v729
        %v3121 = vpop.f32.mrb[0].mxu0
        %v3122 = vadd.f32 0.0, %v3121
        %v3123 = vpop.f32.mrb[0].mxu0
        %3124 = vmatprep.mubr.f32.mxu0 0.0
        %3125 = vmatmul.mubr.f32.gmra.mrb[0].mxu0 %v732
        %v3126 = vpop.f32.mrb[0].mxu0
        %v3127 = vadd.f32 0.0, %v3126
        %v3128 = vpop.f32.mrb[0].mxu0
        %3129 = vmatprep.mubr.f32.mxu0 0.0
        %3130 = vmatmul.mubr.f32.gmra.mrb[0].mxu0 %v735
        %v3131 = vpop.f32.mrb[0].mxu0
        %v3132 = vadd.f32 0.0, %v3131
        %v3133 = vpop.f32.mrb[0].mxu0
        %3134 = vmatprep.mubr.f32.mxu0 0.0
        %3135 = vmatmul.mubr.f32.gmra.mrb[0].mxu0 %v738
        %v3136 = vpop.f32.mrb[0].mxu0
        %v3137 = vadd.f32 0.0, %v3136
        %v3138 = vpop.f32.mrb[0].mxu0
        %3139 = vmatprep.mubr.f32.mxu0 0.0
        %3140 = vmatmul.mubr.f32.gmra.mrb[0].mxu0 %v741
        %v3141 = vpop.f32.mrb[0].mxu0
        %v3142 = vadd.f32 0.0, %v3141
        %v3143 = vpop.f32.mrb[0].mxu0
        %3144 = vmatprep.mubr.f32.mxu0 0.0
        %3145 = vmatmul.mubr.f32.gmra.mrb[0].mxu0 %v744
        %v3146 = vpop.f32.mrb[0].mxu0
        %v3147 = vadd.f32 0.0, %v3146
        %v3148 = vpop.f32.mrb[0].mxu0
        %3149 = vdwg.mxu0
        %v3150 = vld [vmem:[%s7 + $0x3] sm:$0x1]
        %v3151 = vld [vmem:[%s8 + $0x3] sm:$0x1]
        %v3152 = vlaneseq
        %v3153 = vshrl.u32 %v3152, 7
        %v3154 = vsub.s32 0, %v3153
        %v3155 = vrot.slane %v3150, %v3154
        %v3156 = vmul.f32 %v2992, %v3155
        %v3157 = vmul.f32 %v2997, %v3155
        %v3158 = vmul.f32 %v3002, %v3155
        %v3159 = vmul.f32 %v3007, %v3155
        %v3160 = vmul.f32 %v3012, %v3155
        %v3161 = vmul.f32 %v3017, %v3155
        %v3162 = vmul.f32 %v3022, %v3155
        %v3163 = vmul.f32 %v3027, %v3155
        %v3164 = vmul.f32 %v3032, %v3155
        %v3165 = vmul.f32 %v3037, %v3155
        %v3166 = vmul.f32 %v3042, %v3155
        %v3167 = vmul.f32 %v3047, %v3155
        %v3168 = vmul.f32 %v3052, %v3155
        %v3169 = vmul.f32 %v3057, %v3155
        %v3170 = vmul.f32 %v3062, %v3155
        %v3171 = vmul.f32 %v3067, %v3155
        %v3172 = vmul.f32 %v3072, %v3155
        %v3173 = vmul.f32 %v3077, %v3155
        %v3174 = vmul.f32 %v3082, %v3155
        %v3175 = vmul.f32 %v3087, %v3155
        %v3176 = vmul.f32 %v3092, %v3155
        %v3177 = vmul.f32 %v3097, %v3155
        %v3178 = vmul.f32 %v3102, %v3155
        %v3179 = vmul.f32 %v3107, %v3155
        %v3180 = vmul.f32 %v3112, %v3155
        %v3181 = vmul.f32 %v3117, %v3155
        %v3182 = vmul.f32 %v3122, %v3155
        %v3183 = vmul.f32 %v3127, %v3155
        %v3184 = vmul.f32 %v3132, %v3155
        %v3185 = vmul.f32 %v3137, %v3155
        %v3186 = vmul.f32 %v3142, %v3155
        %v3187 = vmul.f32 %v3147, %v3155
        %v3188 = vlaneseq
        %v3189 = vshrl.u32 %v3188, 7
        %v3190 = vsub.s32 0, %v3189
        %v3191 = vrot.slane %v3151, %v3190
        %v3192 = vadd.f32 %v3156, %v3191
        %v3193 = vadd.f32 %v3157, %v3191
        %v3194 = vadd.f32 %v3158, %v3191
        %v3195 = vadd.f32 %v3159, %v3191
        %v3196 = vadd.f32 %v3160, %v3191
        %v3197 = vadd.f32 %v3161, %v3191
        %v3198 = vadd.f32 %v3162, %v3191
        %v3199 = vadd.f32 %v3163, %v3191
        %v3200 = vadd.f32 %v3164, %v3191
        %v3201 = vadd.f32 %v3165, %v3191
        %v3202 = vadd.f32 %v3166, %v3191
        %v3203 = vadd.f32 %v3167, %v3191
        %v3204 = vadd.f32 %v3168, %v3191
        %v3205 = vadd.f32 %v3169, %v3191
        %v3206 = vadd.f32 %v3170, %v3191
        %v3207 = vadd.f32 %v3171, %v3191
        %v3208 = vadd.f32 %v3172, %v3191
        %v3209 = vadd.f32 %v3173, %v3191
        %v3210 = vadd.f32 %v3174, %v3191
        %v3211 = vadd.f32 %v3175, %v3191
        %v3212 = vadd.f32 %v3176, %v3191
        %v3213 = vadd.f32 %v3177, %v3191
        %v3214 = vadd.f32 %v3178, %v3191
        %v3215 = vadd.f32 %v3179, %v3191
        %v3216 = vadd.f32 %v3180, %v3191
        %v3217 = vadd.f32 %v3181, %v3191
        %v3218 = vadd.f32 %v3182, %v3191
        %v3219 = vadd.f32 %v3183, %v3191
        %v3220 = vadd.f32 %v3184, %v3191
        %v3221 = vadd.f32 %v3185, %v3191
        %v3222 = vadd.f32 %v3186, %v3191
        %v3223 = vadd.f32 %v3187, %v3191
        %vm3224 = vcmp.ge.f32.partialorder %v3192, 0.0
        %vm3225 = vcmp.ge.f32.partialorder %v3193, 0.0
        %vm3226 = vcmp.ge.f32.partialorder %v3194, 0.0
        %vm3227 = vcmp.ge.f32.partialorder %v3195, 0.0
        %vm3228 = vcmp.ge.f32.partialorder %v3196, 0.0
        %vm3229 = vcmp.ge.f32.partialorder %v3197, 0.0
        %vm3230 = vcmp.ge.f32.partialorder %v3198, 0.0
        %vm3231 = vcmp.ge.f32.partialorder %v3199, 0.0
        %vm3232 = vcmp.ge.f32.partialorder %v3200, 0.0
        %vm3233 = vcmp.ge.f32.partialorder %v3201, 0.0
        %vm3234 = vcmp.ge.f32.partialorder %v3202, 0.0
        %vm3235 = vcmp.ge.f32.partialorder %v3203, 0.0
        %vm3236 = vcmp.ge.f32.partialorder %v3204, 0.0
        %vm3237 = vcmp.ge.f32.partialorder %v3205, 0.0
        %vm3238 = vcmp.ge.f32.partialorder %v3206, 0.0
        %vm3239 = vcmp.ge.f32.partialorder %v3207, 0.0
        %vm3240 = vcmp.ge.f32.partialorder %v3208, 0.0
        %vm3241 = vcmp.ge.f32.partialorder %v3209, 0.0
        %vm3242 = vcmp.ge.f32.partialorder %v3210, 0.0
        %vm3243 = vcmp.ge.f32.partialorder %v3211, 0.0
        %vm3244 = vcmp.ge.f32.partialorder %v3212, 0.0
        %vm3245 = vcmp.ge.f32.partialorder %v3213, 0.0
        %vm3246 = vcmp.ge.f32.partialorder %v3214, 0.0
        %vm3247 = vcmp.ge.f32.partialorder %v3215, 0.0
        %vm3248 = vcmp.ge.f32.partialorder %v3216, 0.0
        %vm3249 = vcmp.ge.f32.partialorder %v3217, 0.0
        %vm3250 = vcmp.ge.f32.partialorder %v3218, 0.0
        %vm3251 = vcmp.ge.f32.partialorder %v3219, 0.0
        %vm3252 = vcmp.ge.f32.partialorder %v3220, 0.0
        %vm3253 = vcmp.ge.f32.partialorder %v3221, 0.0
        %vm3254 = vcmp.ge.f32.partialorder %v3222, 0.0
        %vm3255 = vcmp.ge.f32.partialorder %v3223, 0.0
        %v3256 = vmul.f32 %v3192, 0.01
        %v3257 = vmul.f32 %v3193, 0.01
        %v3258 = vmul.f32 %v3194, 0.01
        %v3259 = vmul.f32 %v3195, 0.01
        %v3260 = vmul.f32 %v3196, 0.01
        %v3261 = vmul.f32 %v3197, 0.01
        %v3262 = vmul.f32 %v3198, 0.01
        %v3263 = vmul.f32 %v3199, 0.01
        %v3264 = vmul.f32 %v3200, 0.01
        %v3265 = vmul.f32 %v3201, 0.01
        %v3266 = vmul.f32 %v3202, 0.01
        %v3267 = vmul.f32 %v3203, 0.01
        %v3268 = vmul.f32 %v3204, 0.01
        %v3269 = vmul.f32 %v3205, 0.01
        %v3270 = vmul.f32 %v3206, 0.01
        %v3271 = vmul.f32 %v3207, 0.01
        %v3272 = vmul.f32 %v3208, 0.01
        %v3273 = vmul.f32 %v3209, 0.01
        %v3274 = vmul.f32 %v3210, 0.01
        %v3275 = vmul.f32 %v3211, 0.01
        %v3276 = vmul.f32 %v3212, 0.01
        %v3277 = vmul.f32 %v3213, 0.01
        %v3278 = vmul.f32 %v3214, 0.01
        %v3279 = vmul.f32 %v3215, 0.01
        %v3280 = vmul.f32 %v3216, 0.01
        %v3281 = vmul.f32 %v3217, 0.01
        %v3282 = vmul.f32 %v3218, 0.01
        %v3283 = vmul.f32 %v3219, 0.01
        %v3284 = vmul.f32 %v3220, 0.01
        %v3285 = vmul.f32 %v3221, 0.01
        %v3286 = vmul.f32 %v3222, 0.01
        %v3287 = vmul.f32 %v3223, 0.01
        %v3288 = vsel %vm3224, %v3192, %v3256
        %v3289 = vsel %vm3225, %v3193, %v3257
        %v3290 = vsel %vm3226, %v3194, %v3258
        %v3291 = vsel %vm3227, %v3195, %v3259
        %v3292 = vsel %vm3228, %v3196, %v3260
        %v3293 = vsel %vm3229, %v3197, %v3261
        %v3294 = vsel %vm3230, %v3198, %v3262
        %v3295 = vsel %vm3231, %v3199, %v3263
        %v3296 = vsel %vm3232, %v3200, %v3264
        %v3297 = vsel %vm3233, %v3201, %v3265
        %v3298 = vsel %vm3234, %v3202, %v3266
        %v3299 = vsel %vm3235, %v3203, %v3267
        %v3300 = vsel %vm3236, %v3204, %v3268
        %v3301 = vsel %vm3237, %v3205, %v3269
        %v3302 = vsel %vm3238, %v3206, %v3270
        %v3303 = vsel %vm3239, %v3207, %v3271
        %v3304 = vsel %vm3240, %v3208, %v3272
        %v3305 = vsel %vm3241, %v3209, %v3273
        %v3306 = vsel %vm3242, %v3210, %v3274
        %v3307 = vsel %vm3243, %v3211, %v3275
        %v3308 = vsel %vm3244, %v3212, %v3276
        %v3309 = vsel %vm3245, %v3213, %v3277
        %v3310 = vsel %vm3246, %v3214, %v3278
        %v3311 = vsel %vm3247, %v3215, %v3279
        %v3312 = vsel %vm3248, %v3216, %v3280
        %v3313 = vsel %vm3249, %v3217, %v3281
        %v3314 = vsel %vm3250, %v3218, %v3282
        %v3315 = vsel %vm3251, %v3219, %v3283
        %v3316 = vsel %vm3252, %v3220, %v3284
        %v3317 = vsel %vm3253, %v3221, %v3285
        %v3318 = vsel %vm3254, %v3222, %v3286
        %v3319 = vsel %vm3255, %v3223, %v3287
        %s3320 = scalar_lea.vmem %s6, 24
        %v3321 = vld [vmem:[%s3320] sm:$0xff]
        %v3323 = vsel %vm575, %v3288, 0
        %v3326 = vsel %vm575, %v3289, 0
        %v3329 = vsel %vm575, %v3290, 0
        %v3332 = vsel %vm575, %v3291, 0
        %v3335 = vsel %vm575, %v3292, 0
        %v3338 = vsel %vm575, %v3293, 0
        %v3341 = vsel %vm575, %v3294, 0
        %v3344 = vsel %vm575, %v3295, 0
        %v3347 = vsel %vm575, %v3296, 0
        %v3350 = vsel %vm575, %v3297, 0
        %v3353 = vsel %vm575, %v3298, 0
        %v3356 = vsel %vm575, %v3299, 0
        %v3359 = vsel %vm575, %v3300, 0
        %v3362 = vsel %vm575, %v3301, 0
        %v3365 = vsel %vm575, %v3302, 0
        %v3368 = vsel %vm575, %v3303, 0
        %v3371 = vsel %vm575, %v3304, 0
        %v3374 = vsel %vm575, %v3305, 0
        %v3377 = vsel %vm575, %v3306, 0
        %v3380 = vsel %vm575, %v3307, 0
        %v3383 = vsel %vm575, %v3308, 0
        %v3386 = vsel %vm575, %v3309, 0
        %v3389 = vsel %vm575, %v3310, 0
        %v3392 = vsel %vm575, %v3311, 0
        %v3395 = vsel %vm575, %v3312, 0
        %v3398 = vsel %vm575, %v3313, 0
        %v3401 = vsel %vm575, %v3314, 0
        %v3404 = vsel %vm575, %v3315, 0
        %v3407 = vsel %vm575, %v3316, 0
        %v3410 = vsel %vm575, %v3317, 0
        %v3413 = vsel %vm575, %v3318, 0
        %v3416 = vsel %vm575, %v3319, 0
        %3418 = vmatprep.subr.mxu0 0.0
        %3419 = vmatpush1.msra.mxu0 %v3321
        %3420 = vmatprep.subr.mxu0 0.0
        %3421 = vmatpush1.msra.mxu0 0.0
        %3422 = vmatprep.subr.mxu0 0.0
        %3423 = vmatpush1.msra.mxu0 0.0
        %3424 = vmatprep.subr.mxu0 0.0
        %3425 = vmatpush1.msra.mxu0 0.0
        %3426 = vmatprep.subr.mxu0 0.0
        %3427 = vmatpush1.msra.mxu0 0.0
        %3428 = vmatprep.subr.mxu0 0.0
        %3429 = vmatpush1.msra.mxu0 0.0
        %3430 = vmatprep.subr.mxu0 0.0
        %3431 = vmatpush1.msra.mxu0 0.0
        %3432 = vmatprep.subr.mxu0 0.0
        %3433 = vmatpush1.msra.mxu0 0.0
        %3434 = vmatprep.subr.mxu0 0.0
        %3435 = vmatpush1.msra.mxu0 0.0
        %3436 = vmatprep.subr.mxu0 0.0
        %3437 = vmatpush1.msra.mxu0 0.0
        %3438 = vmatprep.subr.mxu0 0.0
        %3439 = vmatpush1.msra.mxu0 0.0
        %3440 = vmatprep.subr.mxu0 0.0
        %3441 = vmatpush1.msra.mxu0 0.0
        %3442 = vmatprep.subr.mxu0 0.0
        %3443 = vmatpush1.msra.mxu0 0.0
        %3444 = vmatprep.subr.mxu0 0.0
        %3445 = vmatpush1.msra.mxu0 0.0
        %3446 = vmatprep.subr.mxu0 0.0
        %3447 = vmatpush1.msra.mxu0 0.0
        %3448 = vmatprep.subr.mxu0 0.0
        %3449 = vmatpush1.msra.mxu0 0.0
        %3450 = vmatprep.subr.mxu0 0.0
        %3451 = vmatpush1.msra.mxu0 0.0
        %3452 = vmatprep.subr.mxu0 0.0
        %3453 = vmatpush1.msra.mxu0 0.0
        %3454 = vmatprep.subr.mxu0 0.0
        %3455 = vmatpush1.msra.mxu0 0.0
        %3456 = vmatprep.subr.mxu0 0.0
        %3457 = vmatpush1.msra.mxu0 0.0
        %3458 = vmatprep.subr.mxu0 0.0
        %3459 = vmatpush1.msra.mxu0 0.0
        %3460 = vmatprep.subr.mxu0 0.0
        %3461 = vmatpush1.msra.mxu0 0.0
        %3462 = vmatprep.subr.mxu0 0.0
        %3463 = vmatpush1.msra.mxu0 0.0
        %3464 = vmatprep.subr.mxu0 0.0
        %3465 = vmatpush1.msra.mxu0 0.0
        %3466 = vmatprep.subr.mxu0 0.0
        %3467 = vmatpush1.msra.mxu0 0.0
        %3468 = vmatprep.subr.mxu0 0.0
        %3469 = vmatpush1.msra.mxu0 0.0
        %3470 = vmatprep.subr.mxu0 0.0
        %3471 = vmatpush1.msra.mxu0 0.0
        %3472 = vmatprep.subr.mxu0 0.0
        %3473 = vmatpush1.msra.mxu0 0.0
        %3474 = vmatprep.subr.mxu0 0.0
        %3475 = vmatpush1.msra.mxu0 0.0
        %3476 = vmatprep.subr.mxu0 0.0
        %3477 = vmatpush1.msra.mxu0 0.0
        %3478 = vmatprep.subr.mxu0 0.0
        %3479 = vmatpush1.msra.mxu0 0.0
        %3480 = vmatprep.subr.mxu0 0.0
        %3481 = vmatpush1.msra.mxu0 0.0
        %3482 = vmatprep.mubr.f32.mxu0 0.0
        %3483 = vmatmul.mubr.f32.gmra.mrb[0].mxu0 %v3323
        %v3484 = vpop.f32.mrb[0].mxu0
        %v3485 = vadd.f32 0.0, %v3484
        %v3486 = vpop.f32.mrb[0].mxu0
        %3487 = vmatprep.mubr.f32.mxu0 0.0
        %3488 = vmatmul.mubr.f32.gmra.mrb[0].mxu0 %v3326
        %v3489 = vpop.f32.mrb[0].mxu0
        %v3490 = vadd.f32 0.0, %v3489
        %v3491 = vpop.f32.mrb[0].mxu0
        %3492 = vmatprep.mubr.f32.mxu0 0.0
        %3493 = vmatmul.mubr.f32.gmra.mrb[0].mxu0 %v3329
        %v3494 = vpop.f32.mrb[0].mxu0
        %v3495 = vadd.f32 0.0, %v3494
        %v3496 = vpop.f32.mrb[0].mxu0
        %3497 = vmatprep.mubr.f32.mxu0 0.0
        %3498 = vmatmul.mubr.f32.gmra.mrb[0].mxu0 %v3332
        %v3499 = vpop.f32.mrb[0].mxu0
        %v3500 = vadd.f32 0.0, %v3499
        %v3501 = vpop.f32.mrb[0].mxu0
        %3502 = vmatprep.mubr.f32.mxu0 0.0
        %3503 = vmatmul.mubr.f32.gmra.mrb[0].mxu0 %v3335
        %v3504 = vpop.f32.mrb[0].mxu0
        %v3505 = vadd.f32 0.0, %v3504
        %v3506 = vpop.f32.mrb[0].mxu0
        %3507 = vmatprep.mubr.f32.mxu0 0.0
        %3508 = vmatmul.mubr.f32.gmra.mrb[0].mxu0 %v3338
        %v3509 = vpop.f32.mrb[0].mxu0
        %v3510 = vadd.f32 0.0, %v3509
        %v3511 = vpop.f32.mrb[0].mxu0
        %3512 = vmatprep.mubr.f32.mxu0 0.0
        %3513 = vmatmul.mubr.f32.gmra.mrb[0].mxu0 %v3341
        %v3514 = vpop.f32.mrb[0].mxu0
        %v3515 = vadd.f32 0.0, %v3514
        %v3516 = vpop.f32.mrb[0].mxu0
        %3517 = vmatprep.mubr.f32.mxu0 0.0
        %3518 = vmatmul.mubr.f32.gmra.mrb[0].mxu0 %v3344
        %v3519 = vpop.f32.mrb[0].mxu0
        %v3520 = vadd.f32 0.0, %v3519
        %v3521 = vpop.f32.mrb[0].mxu0
        %3522 = vmatprep.mubr.f32.mxu0 0.0
        %3523 = vmatmul.mubr.f32.gmra.mrb[0].mxu0 %v3347
        %v3524 = vpop.f32.mrb[0].mxu0
        %v3525 = vadd.f32 0.0, %v3524
        %v3526 = vpop.f32.mrb[0].mxu0
        %3527 = vmatprep.mubr.f32.mxu0 0.0
        %3528 = vmatmul.mubr.f32.gmra.mrb[0].mxu0 %v3350
        %v3529 = vpop.f32.mrb[0].mxu0
        %v3530 = vadd.f32 0.0, %v3529
        %v3531 = vpop.f32.mrb[0].mxu0
        %3532 = vmatprep.mubr.f32.mxu0 0.0
        %3533 = vmatmul.mubr.f32.gmra.mrb[0].mxu0 %v3353
        %v3534 = vpop.f32.mrb[0].mxu0
        %v3535 = vadd.f32 0.0, %v3534
        %v3536 = vpop.f32.mrb[0].mxu0
        %3537 = vmatprep.mubr.f32.mxu0 0.0
        %3538 = vmatmul.mubr.f32.gmra.mrb[0].mxu0 %v3356
        %v3539 = vpop.f32.mrb[0].mxu0
        %v3540 = vadd.f32 0.0, %v3539
        %v3541 = vpop.f32.mrb[0].mxu0
        %3542 = vmatprep.mubr.f32.mxu0 0.0
        %3543 = vmatmul.mubr.f32.gmra.mrb[0].mxu0 %v3359
        %v3544 = vpop.f32.mrb[0].mxu0
        %v3545 = vadd.f32 0.0, %v3544
        %v3546 = vpop.f32.mrb[0].mxu0
        %3547 = vmatprep.mubr.f32.mxu0 0.0
        %3548 = vmatmul.mubr.f32.gmra.mrb[0].mxu0 %v3362
        %v3549 = vpop.f32.mrb[0].mxu0
        %v3550 = vadd.f32 0.0, %v3549
        %v3551 = vpop.f32.mrb[0].mxu0
        %3552 = vmatprep.mubr.f32.mxu0 0.0
        %3553 = vmatmul.mubr.f32.gmra.mrb[0].mxu0 %v3365
        %v3554 = vpop.f32.mrb[0].mxu0
        %v3555 = vadd.f32 0.0, %v3554
        %v3556 = vpop.f32.mrb[0].mxu0
        %3557 = vmatprep.mubr.f32.mxu0 0.0
        %3558 = vmatmul.mubr.f32.gmra.mrb[0].mxu0 %v3368
        %v3559 = vpop.f32.mrb[0].mxu0
        %v3560 = vadd.f32 0.0, %v3559
        %v3561 = vpop.f32.mrb[0].mxu0
        %3562 = vmatprep.mubr.f32.mxu0 0.0
        %3563 = vmatmul.mubr.f32.gmra.mrb[0].mxu0 %v3371
        %v3564 = vpop.f32.mrb[0].mxu0
        %v3565 = vadd.f32 0.0, %v3564
        %v3566 = vpop.f32.mrb[0].mxu0
        %3567 = vmatprep.mubr.f32.mxu0 0.0
        %3568 = vmatmul.mubr.f32.gmra.mrb[0].mxu0 %v3374
        %v3569 = vpop.f32.mrb[0].mxu0
        %v3570 = vadd.f32 0.0, %v3569
        %v3571 = vpop.f32.mrb[0].mxu0
        %3572 = vmatprep.mubr.f32.mxu0 0.0
        %3573 = vmatmul.mubr.f32.gmra.mrb[0].mxu0 %v3377
        %v3574 = vpop.f32.mrb[0].mxu0
        %v3575 = vadd.f32 0.0, %v3574
        %v3576 = vpop.f32.mrb[0].mxu0
        %3577 = vmatprep.mubr.f32.mxu0 0.0
        %3578 = vmatmul.mubr.f32.gmra.mrb[0].mxu0 %v3380
        %v3579 = vpop.f32.mrb[0].mxu0
        %v3580 = vadd.f32 0.0, %v3579
        %v3581 = vpop.f32.mrb[0].mxu0
        %3582 = vmatprep.mubr.f32.mxu0 0.0
        %3583 = vmatmul.mubr.f32.gmra.mrb[0].mxu0 %v3383
        %v3584 = vpop.f32.mrb[0].mxu0
        %v3585 = vadd.f32 0.0, %v3584
        %v3586 = vpop.f32.mrb[0].mxu0
        %3587 = vmatprep.mubr.f32.mxu0 0.0
        %3588 = vmatmul.mubr.f32.gmra.mrb[0].mxu0 %v3386
        %v3589 = vpop.f32.mrb[0].mxu0
        %v3590 = vadd.f32 0.0, %v3589
        %v3591 = vpop.f32.mrb[0].mxu0
        %3592 = vmatprep.mubr.f32.mxu0 0.0
        %3593 = vmatmul.mubr.f32.gmra.mrb[0].mxu0 %v3389
        %v3594 = vpop.f32.mrb[0].mxu0
        %v3595 = vadd.f32 0.0, %v3594
        %v3596 = vpop.f32.mrb[0].mxu0
        %3597 = vmatprep.mubr.f32.mxu0 0.0
        %3598 = vmatmul.mubr.f32.gmra.mrb[0].mxu0 %v3392
        %v3599 = vpop.f32.mrb[0].mxu0
        %v3600 = vadd.f32 0.0, %v3599
        %v3601 = vpop.f32.mrb[0].mxu0
        %3602 = vmatprep.mubr.f32.mxu0 0.0
        %3603 = vmatmul.mubr.f32.gmra.mrb[0].mxu0 %v3395
        %v3604 = vpop.f32.mrb[0].mxu0
        %v3605 = vadd.f32 0.0, %v3604
        %v3606 = vpop.f32.mrb[0].mxu0
        %3607 = vmatprep.mubr.f32.mxu0 0.0
        %3608 = vmatmul.mubr.f32.gmra.mrb[0].mxu0 %v3398
        %v3609 = vpop.f32.mrb[0].mxu0
        %v3610 = vadd.f32 0.0, %v3609
        %v3611 = vpop.f32.mrb[0].mxu0
        %3612 = vmatprep.mubr.f32.mxu0 0.0
        %3613 = vmatmul.mubr.f32.gmra.mrb[0].mxu0 %v3401
        %v3614 = vpop.f32.mrb[0].mxu0
        %v3615 = vadd.f32 0.0, %v3614
        %v3616 = vpop.f32.mrb[0].mxu0
        %3617 = vmatprep.mubr.f32.mxu0 0.0
        %3618 = vmatmul.mubr.f32.gmra.mrb[0].mxu0 %v3404
        %v3619 = vpop.f32.mrb[0].mxu0
        %v3620 = vadd.f32 0.0, %v3619
        %v3621 = vpop.f32.mrb[0].mxu0
        %3622 = vmatprep.mubr.f32.mxu0 0.0
        %3623 = vmatmul.mubr.f32.gmra.mrb[0].mxu0 %v3407
        %v3624 = vpop.f32.mrb[0].mxu0
        %v3625 = vadd.f32 0.0, %v3624
        %v3626 = vpop.f32.mrb[0].mxu0
        %3627 = vmatprep.mubr.f32.mxu0 0.0
        %3628 = vmatmul.mubr.f32.gmra.mrb[0].mxu0 %v3410
        %v3629 = vpop.f32.mrb[0].mxu0
        %v3630 = vadd.f32 0.0, %v3629
        %v3631 = vpop.f32.mrb[0].mxu0
        %3632 = vmatprep.mubr.f32.mxu0 0.0
        %3633 = vmatmul.mubr.f32.gmra.mrb[0].mxu0 %v3413
        %v3634 = vpop.f32.mrb[0].mxu0
        %v3635 = vadd.f32 0.0, %v3634
        %v3636 = vpop.f32.mrb[0].mxu0
        %3637 = vmatprep.mubr.f32.mxu0 0.0
        %3638 = vmatmul.mubr.f32.gmra.mrb[0].mxu0 %v3416
        %v3639 = vpop.f32.mrb[0].mxu0
        %v3640 = vadd.f32 0.0, %v3639
        %v3641 = vpop.f32.mrb[0].mxu0
        %3642 = vdwg.mxu0
        %v3643 = vadd.f32 %v2763, %v3485
        %v3644 = vadd.f32 %v2768, %v3490
        %v3645 = vadd.f32 %v2773, %v3495
        %v3646 = vadd.f32 %v2778, %v3500
        %v3647 = vadd.f32 %v2783, %v3505
        %v3648 = vadd.f32 %v2788, %v3510
        %v3649 = vadd.f32 %v2793, %v3515
        %v3650 = vadd.f32 %v2798, %v3520
        %v3651 = vadd.f32 %v2803, %v3525
        %v3652 = vadd.f32 %v2808, %v3530
        %v3653 = vadd.f32 %v2813, %v3535
        %v3654 = vadd.f32 %v2818, %v3540
        %v3655 = vadd.f32 %v2823, %v3545
        %v3656 = vadd.f32 %v2828, %v3550
        %v3657 = vadd.f32 %v2833, %v3555
        %v3658 = vadd.f32 %v2838, %v3560
        %v3659 = vadd.f32 %v2843, %v3565
        %v3660 = vadd.f32 %v2848, %v3570
        %v3661 = vadd.f32 %v2853, %v3575
        %v3662 = vadd.f32 %v2858, %v3580
        %v3663 = vadd.f32 %v2863, %v3585
        %v3664 = vadd.f32 %v2868, %v3590
        %v3665 = vadd.f32 %v2873, %v3595
        %v3666 = vadd.f32 %v2878, %v3600
        %v3667 = vadd.f32 %v2883, %v3605
        %v3668 = vadd.f32 %v2888, %v3610
        %v3669 = vadd.f32 %v2893, %v3615
        %v3670 = vadd.f32 %v2898, %v3620
        %v3671 = vadd.f32 %v2903, %v3625
        %v3672 = vadd.f32 %v2908, %v3630
        %v3673 = vadd.f32 %v2913, %v3635
        %v3674 = vadd.f32 %v2918, %v3640
        %v3675 = vld [vmem:[%s5] sm:$0xf]
        %v3677 = vsel %vm493, %v3675, 0
        %3679 = vmatprep.subr.mxu0 0.0
        %3680 = vmatpush1.msra.mxu0 %v3677
        %3681 = vmatprep.subr.mxu0 0.0
        %3682 = vmatpush1.msra.mxu0 0.0
        %3683 = vmatprep.subr.mxu0 0.0
        %3684 = vmatpush1.msra.mxu0 0.0
        %3685 = vmatprep.subr.mxu0 0.0
        %3686 = vmatpush1.msra.mxu0 0.0
        %3687 = vmatprep.subr.mxu0 0.0
        %3688 = vmatpush1.msra.mxu0 0.0
        %3689 = vmatprep.subr.mxu0 0.0
        %3690 = vmatpush1.msra.mxu0 0.0
        %3691 = vmatprep.subr.mxu0 0.0
        %3692 = vmatpush1.msra.mxu0 0.0
        %3693 = vmatprep.subr.mxu0 0.0
        %3694 = vmatpush1.msra.mxu0 0.0
        %3695 = vmatprep.subr.mxu0 0.0
        %3696 = vmatpush1.msra.mxu0 0.0
        %3697 = vmatprep.subr.mxu0 0.0
        %3698 = vmatpush1.msra.mxu0 0.0
        %3699 = vmatprep.subr.mxu0 0.0
        %3700 = vmatpush1.msra.mxu0 0.0
        %3701 = vmatprep.subr.mxu0 0.0
        %3702 = vmatpush1.msra.mxu0 0.0
        %3703 = vmatprep.subr.mxu0 0.0
        %3704 = vmatpush1.msra.mxu0 0.0
        %3705 = vmatprep.subr.mxu0 0.0
        %3706 = vmatpush1.msra.mxu0 0.0
        %3707 = vmatprep.subr.mxu0 0.0
        %3708 = vmatpush1.msra.mxu0 0.0
        %3709 = vmatprep.subr.mxu0 0.0
        %3710 = vmatpush1.msra.mxu0 0.0
        %3711 = vmatprep.subr.mxu0 0.0
        %3712 = vmatpush1.msra.mxu0 0.0
        %3713 = vmatprep.subr.mxu0 0.0
        %3714 = vmatpush1.msra.mxu0 0.0
        %3715 = vmatprep.subr.mxu0 0.0
        %3716 = vmatpush1.msra.mxu0 0.0
        %3717 = vmatprep.subr.mxu0 0.0
        %3718 = vmatpush1.msra.mxu0 0.0
        %3719 = vmatprep.subr.mxu0 0.0
        %3720 = vmatpush1.msra.mxu0 0.0
        %3721 = vmatprep.subr.mxu0 0.0
        %3722 = vmatpush1.msra.mxu0 0.0
        %3723 = vmatprep.subr.mxu0 0.0
        %3724 = vmatpush1.msra.mxu0 0.0
        %3725 = vmatprep.subr.mxu0 0.0
        %3726 = vmatpush1.msra.mxu0 0.0
        %3727 = vmatprep.subr.mxu0 0.0
        %3728 = vmatpush1.msra.mxu0 0.0
        %3729 = vmatprep.subr.mxu0 0.0
        %3730 = vmatpush1.msra.mxu0 0.0
        %3731 = vmatprep.subr.mxu0 0.0
        %3732 = vmatpush1.msra.mxu0 0.0
        %3733 = vmatprep.subr.mxu0 0.0
        %3734 = vmatpush1.msra.mxu0 0.0
        %3735 = vmatprep.subr.mxu0 0.0
        %3736 = vmatpush1.msra.mxu0 0.0
        %3737 = vmatprep.subr.mxu0 0.0
        %3738 = vmatpush1.msra.mxu0 0.0
        %3739 = vmatprep.subr.mxu0 0.0
        %3740 = vmatpush1.msra.mxu0 0.0
        %3741 = vmatprep.subr.mxu0 0.0
        %3742 = vmatpush1.msra.mxu0 0.0
        %3743 = vmatprep.mubr.f32.mxu0 0.0
        %3744 = vmatmul.mubr.f32.gmra.mrb[0].mxu0 %v651
        %v3745 = vpop.f32.mrb[0].mxu0
        %v3746 = vadd.f32 0.0, %v3745
        %v3747 = vpop.f32.mrb[0].mxu0
        %3748 = vmatprep.mubr.f32.mxu0 0.0
        %3749 = vmatmul.mubr.f32.gmra.mrb[0].mxu0 %v654
        %v3750 = vpop.f32.mrb[0].mxu0
        %v3751 = vadd.f32 0.0, %v3750
        %v3752 = vpop.f32.mrb[0].mxu0
        %3753 = vmatprep.mubr.f32.mxu0 0.0
        %3754 = vmatmul.mubr.f32.gmra.mrb[0].mxu0 %v657
        %v3755 = vpop.f32.mrb[0].mxu0
        %v3756 = vadd.f32 0.0, %v3755
        %v3757 = vpop.f32.mrb[0].mxu0
        %3758 = vmatprep.mubr.f32.mxu0 0.0
        %3759 = vmatmul.mubr.f32.gmra.mrb[0].mxu0 %v660
        %v3760 = vpop.f32.mrb[0].mxu0
        %v3761 = vadd.f32 0.0, %v3760
        %v3762 = vpop.f32.mrb[0].mxu0
        %3763 = vmatprep.mubr.f32.mxu0 0.0
        %3764 = vmatmul.mubr.f32.gmra.mrb[0].mxu0 %v663
        %v3765 = vpop.f32.mrb[0].mxu0
        %v3766 = vadd.f32 0.0, %v3765
        %v3767 = vpop.f32.mrb[0].mxu0
        %3768 = vmatprep.mubr.f32.mxu0 0.0
        %3769 = vmatmul.mubr.f32.gmra.mrb[0].mxu0 %v666
        %v3770 = vpop.f32.mrb[0].mxu0
        %v3771 = vadd.f32 0.0, %v3770
        %v3772 = vpop.f32.mrb[0].mxu0
        %3773 = vmatprep.mubr.f32.mxu0 0.0
        %3774 = vmatmul.mubr.f32.gmra.mrb[0].mxu0 %v669
        %v3775 = vpop.f32.mrb[0].mxu0
        %v3776 = vadd.f32 0.0, %v3775
        %v3777 = vpop.f32.mrb[0].mxu0
        %3778 = vmatprep.mubr.f32.mxu0 0.0
        %3779 = vmatmul.mubr.f32.gmra.mrb[0].mxu0 %v672
        %v3780 = vpop.f32.mrb[0].mxu0
        %v3781 = vadd.f32 0.0, %v3780
        %v3782 = vpop.f32.mrb[0].mxu0
        %3783 = vmatprep.mubr.f32.mxu0 0.0
        %3784 = vmatmul.mubr.f32.gmra.mrb[0].mxu0 %v675
        %v3785 = vpop.f32.mrb[0].mxu0
        %v3786 = vadd.f32 0.0, %v3785
        %v3787 = vpop.f32.mrb[0].mxu0
        %3788 = vmatprep.mubr.f32.mxu0 0.0
        %3789 = vmatmul.mubr.f32.gmra.mrb[0].mxu0 %v678
        %v3790 = vpop.f32.mrb[0].mxu0
        %v3791 = vadd.f32 0.0, %v3790
        %v3792 = vpop.f32.mrb[0].mxu0
        %3793 = vmatprep.mubr.f32.mxu0 0.0
        %3794 = vmatmul.mubr.f32.gmra.mrb[0].mxu0 %v681
        %v3795 = vpop.f32.mrb[0].mxu0
        %v3796 = vadd.f32 0.0, %v3795
        %v3797 = vpop.f32.mrb[0].mxu0
        %3798 = vmatprep.mubr.f32.mxu0 0.0
        %3799 = vmatmul.mubr.f32.gmra.mrb[0].mxu0 %v684
        %v3800 = vpop.f32.mrb[0].mxu0
        %v3801 = vadd.f32 0.0, %v3800
        %v3802 = vpop.f32.mrb[0].mxu0
        %3803 = vmatprep.mubr.f32.mxu0 0.0
        %3804 = vmatmul.mubr.f32.gmra.mrb[0].mxu0 %v687
        %v3805 = vpop.f32.mrb[0].mxu0
        %v3806 = vadd.f32 0.0, %v3805
        %v3807 = vpop.f32.mrb[0].mxu0
        %3808 = vmatprep.mubr.f32.mxu0 0.0
        %3809 = vmatmul.mubr.f32.gmra.mrb[0].mxu0 %v690
        %v3810 = vpop.f32.mrb[0].mxu0
        %v3811 = vadd.f32 0.0, %v3810
        %v3812 = vpop.f32.mrb[0].mxu0
        %3813 = vmatprep.mubr.f32.mxu0 0.0
        %3814 = vmatmul.mubr.f32.gmra.mrb[0].mxu0 %v693
        %v3815 = vpop.f32.mrb[0].mxu0
        %v3816 = vadd.f32 0.0, %v3815
        %v3817 = vpop.f32.mrb[0].mxu0
        %3818 = vmatprep.mubr.f32.mxu0 0.0
        %3819 = vmatmul.mubr.f32.gmra.mrb[0].mxu0 %v696
        %v3820 = vpop.f32.mrb[0].mxu0
        %v3821 = vadd.f32 0.0, %v3820
        %v3822 = vpop.f32.mrb[0].mxu0
        %3823 = vmatprep.mubr.f32.mxu0 0.0
        %3824 = vmatmul.mubr.f32.gmra.mrb[0].mxu0 %v699
        %v3825 = vpop.f32.mrb[0].mxu0
        %v3826 = vadd.f32 0.0, %v3825
        %v3827 = vpop.f32.mrb[0].mxu0
        %3828 = vmatprep.mubr.f32.mxu0 0.0
        %3829 = vmatmul.mubr.f32.gmra.mrb[0].mxu0 %v702
        %v3830 = vpop.f32.mrb[0].mxu0
        %v3831 = vadd.f32 0.0, %v3830
        %v3832 = vpop.f32.mrb[0].mxu0
        %3833 = vmatprep.mubr.f32.mxu0 0.0
        %3834 = vmatmul.mubr.f32.gmra.mrb[0].mxu0 %v705
        %v3835 = vpop.f32.mrb[0].mxu0
        %v3836 = vadd.f32 0.0, %v3835
        %v3837 = vpop.f32.mrb[0].mxu0
        %3838 = vmatprep.mubr.f32.mxu0 0.0
        %3839 = vmatmul.mubr.f32.gmra.mrb[0].mxu0 %v708
        %v3840 = vpop.f32.mrb[0].mxu0
        %v3841 = vadd.f32 0.0, %v3840
        %v3842 = vpop.f32.mrb[0].mxu0
        %3843 = vmatprep.mubr.f32.mxu0 0.0
        %3844 = vmatmul.mubr.f32.gmra.mrb[0].mxu0 %v711
        %v3845 = vpop.f32.mrb[0].mxu0
        %v3846 = vadd.f32 0.0, %v3845
        %v3847 = vpop.f32.mrb[0].mxu0
        %3848 = vmatprep.mubr.f32.mxu0 0.0
        %3849 = vmatmul.mubr.f32.gmra.mrb[0].mxu0 %v714
        %v3850 = vpop.f32.mrb[0].mxu0
        %v3851 = vadd.f32 0.0, %v3850
        %v3852 = vpop.f32.mrb[0].mxu0
        %3853 = vmatprep.mubr.f32.mxu0 0.0
        %3854 = vmatmul.mubr.f32.gmra.mrb[0].mxu0 %v717
        %v3855 = vpop.f32.mrb[0].mxu0
        %v3856 = vadd.f32 0.0, %v3855
        %v3857 = vpop.f32.mrb[0].mxu0
        %3858 = vmatprep.mubr.f32.mxu0 0.0
        %3859 = vmatmul.mubr.f32.gmra.mrb[0].mxu0 %v720
        %v3860 = vpop.f32.mrb[0].mxu0
        %v3861 = vadd.f32 0.0, %v3860
        %v3862 = vpop.f32.mrb[0].mxu0
        %3863 = vmatprep.mubr.f32.mxu0 0.0
        %3864 = vmatmul.mubr.f32.gmra.mrb[0].mxu0 %v723
        %v3865 = vpop.f32.mrb[0].mxu0
        %v3866 = vadd.f32 0.0, %v3865
        %v3867 = vpop.f32.mrb[0].mxu0
        %3868 = vmatprep.mubr.f32.mxu0 0.0
        %3869 = vmatmul.mubr.f32.gmra.mrb[0].mxu0 %v726
        %v3870 = vpop.f32.mrb[0].mxu0
        %v3871 = vadd.f32 0.0, %v3870
        %v3872 = vpop.f32.mrb[0].mxu0
        %3873 = vmatprep.mubr.f32.mxu0 0.0
        %3874 = vmatmul.mubr.f32.gmra.mrb[0].mxu0 %v729
        %v3875 = vpop.f32.mrb[0].mxu0
        %v3876 = vadd.f32 0.0, %v3875
        %v3877 = vpop.f32.mrb[0].mxu0
        %3878 = vmatprep.mubr.f32.mxu0 0.0
        %3879 = vmatmul.mubr.f32.gmra.mrb[0].mxu0 %v732
        %v3880 = vpop.f32.mrb[0].mxu0
        %v3881 = vadd.f32 0.0, %v3880
        %v3882 = vpop.f32.mrb[0].mxu0
        %3883 = vmatprep.mubr.f32.mxu0 0.0
        %3884 = vmatmul.mubr.f32.gmra.mrb[0].mxu0 %v735
        %v3885 = vpop.f32.mrb[0].mxu0
        %v3886 = vadd.f32 0.0, %v3885
        %v3887 = vpop.f32.mrb[0].mxu0
        %3888 = vmatprep.mubr.f32.mxu0 0.0
        %3889 = vmatmul.mubr.f32.gmra.mrb[0].mxu0 %v738
        %v3890 = vpop.f32.mrb[0].mxu0
        %v3891 = vadd.f32 0.0, %v3890
        %v3892 = vpop.f32.mrb[0].mxu0
        %3893 = vmatprep.mubr.f32.mxu0 0.0
        %3894 = vmatmul.mubr.f32.gmra.mrb[0].mxu0 %v741
        %v3895 = vpop.f32.mrb[0].mxu0
        %v3896 = vadd.f32 0.0, %v3895
        %v3897 = vpop.f32.mrb[0].mxu0
        %3898 = vmatprep.mubr.f32.mxu0 0.0
        %3899 = vmatmul.mubr.f32.gmra.mrb[0].mxu0 %v744
        %v3900 = vpop.f32.mrb[0].mxu0
        %v3901 = vadd.f32 0.0, %v3900
        %v3902 = vpop.f32.mrb[0].mxu0
        %3903 = vdwg.mxu0
        %v3904 = vld [vmem:[%s7 + $0x4] sm:$0x1]
        %v3905 = vld [vmem:[%s8 + $0x4] sm:$0x1]
        %v3906 = vlaneseq
        %v3907 = vshrl.u32 %v3906, 7
        %v3908 = vsub.s32 0, %v3907
        %v3909 = vrot.slane %v3904, %v3908
        %v3910 = vmul.f32 %v3746, %v3909
        %v3911 = vmul.f32 %v3751, %v3909
        %v3912 = vmul.f32 %v3756, %v3909
        %v3913 = vmul.f32 %v3761, %v3909
        %v3914 = vmul.f32 %v3766, %v3909
        %v3915 = vmul.f32 %v3771, %v3909
        %v3916 = vmul.f32 %v3776, %v3909
        %v3917 = vmul.f32 %v3781, %v3909
        %v3918 = vmul.f32 %v3786, %v3909
        %v3919 = vmul.f32 %v3791, %v3909
        %v3920 = vmul.f32 %v3796, %v3909
        %v3921 = vmul.f32 %v3801, %v3909
        %v3922 = vmul.f32 %v3806, %v3909
        %v3923 = vmul.f32 %v3811, %v3909
        %v3924 = vmul.f32 %v3816, %v3909
        %v3925 = vmul.f32 %v3821, %v3909
        %v3926 = vmul.f32 %v3826, %v3909
        %v3927 = vmul.f32 %v3831, %v3909
        %v3928 = vmul.f32 %v3836, %v3909
        %v3929 = vmul.f32 %v3841, %v3909
        %v3930 = vmul.f32 %v3846, %v3909
        %v3931 = vmul.f32 %v3851, %v3909
        %v3932 = vmul.f32 %v3856, %v3909
        %v3933 = vmul.f32 %v3861, %v3909
        %v3934 = vmul.f32 %v3866, %v3909
        %v3935 = vmul.f32 %v3871, %v3909
        %v3936 = vmul.f32 %v3876, %v3909
        %v3937 = vmul.f32 %v3881, %v3909
        %v3938 = vmul.f32 %v3886, %v3909
        %v3939 = vmul.f32 %v3891, %v3909
        %v3940 = vmul.f32 %v3896, %v3909
        %v3941 = vmul.f32 %v3901, %v3909
        %v3942 = vlaneseq
        %v3943 = vshrl.u32 %v3942, 7
        %v3944 = vsub.s32 0, %v3943
        %v3945 = vrot.slane %v3905, %v3944
        %v3946 = vadd.f32 %v3910, %v3945
        %v3947 = vadd.f32 %v3911, %v3945
        %v3948 = vadd.f32 %v3912, %v3945
        %v3949 = vadd.f32 %v3913, %v3945
        %v3950 = vadd.f32 %v3914, %v3945
        %v3951 = vadd.f32 %v3915, %v3945
        %v3952 = vadd.f32 %v3916, %v3945
        %v3953 = vadd.f32 %v3917, %v3945
        %v3954 = vadd.f32 %v3918, %v3945
        %v3955 = vadd.f32 %v3919, %v3945
        %v3956 = vadd.f32 %v3920, %v3945
        %v3957 = vadd.f32 %v3921, %v3945
        %v3958 = vadd.f32 %v3922, %v3945
        %v3959 = vadd.f32 %v3923, %v3945
        %v3960 = vadd.f32 %v3924, %v3945
        %v3961 = vadd.f32 %v3925, %v3945
        %v3962 = vadd.f32 %v3926, %v3945
        %v3963 = vadd.f32 %v3927, %v3945
        %v3964 = vadd.f32 %v3928, %v3945
        %v3965 = vadd.f32 %v3929, %v3945
        %v3966 = vadd.f32 %v3930, %v3945
        %v3967 = vadd.f32 %v3931, %v3945
        %v3968 = vadd.f32 %v3932, %v3945
        %v3969 = vadd.f32 %v3933, %v3945
        %v3970 = vadd.f32 %v3934, %v3945
        %v3971 = vadd.f32 %v3935, %v3945
        %v3972 = vadd.f32 %v3936, %v3945
        %v3973 = vadd.f32 %v3937, %v3945
        %v3974 = vadd.f32 %v3938, %v3945
        %v3975 = vadd.f32 %v3939, %v3945
        %v3976 = vadd.f32 %v3940, %v3945
        %v3977 = vadd.f32 %v3941, %v3945
        %vm3978 = vcmp.ge.f32.partialorder %v3946, 0.0
        %vm3979 = vcmp.ge.f32.partialorder %v3947, 0.0
        %vm3980 = vcmp.ge.f32.partialorder %v3948, 0.0
        %vm3981 = vcmp.ge.f32.partialorder %v3949, 0.0
        %vm3982 = vcmp.ge.f32.partialorder %v3950, 0.0
        %vm3983 = vcmp.ge.f32.partialorder %v3951, 0.0
        %vm3984 = vcmp.ge.f32.partialorder %v3952, 0.0
        %vm3985 = vcmp.ge.f32.partialorder %v3953, 0.0
        %vm3986 = vcmp.ge.f32.partialorder %v3954, 0.0
        %vm3987 = vcmp.ge.f32.partialorder %v3955, 0.0
        %vm3988 = vcmp.ge.f32.partialorder %v3956, 0.0
        %vm3989 = vcmp.ge.f32.partialorder %v3957, 0.0
        %vm3990 = vcmp.ge.f32.partialorder %v3958, 0.0
        %vm3991 = vcmp.ge.f32.partialorder %v3959, 0.0
        %vm3992 = vcmp.ge.f32.partialorder %v3960, 0.0
        %vm3993 = vcmp.ge.f32.partialorder %v3961, 0.0
        %vm3994 = vcmp.ge.f32.partialorder %v3962, 0.0
        %vm3995 = vcmp.ge.f32.partialorder %v3963, 0.0
        %vm3996 = vcmp.ge.f32.partialorder %v3964, 0.0
        %vm3997 = vcmp.ge.f32.partialorder %v3965, 0.0
        %vm3998 = vcmp.ge.f32.partialorder %v3966, 0.0
        %vm3999 = vcmp.ge.f32.partialorder %v3967, 0.0
        %vm4000 = vcmp.ge.f32.partialorder %v3968, 0.0
        %vm4001 = vcmp.ge.f32.partialorder %v3969, 0.0
        %vm4002 = vcmp.ge.f32.partialorder %v3970, 0.0
        %vm4003 = vcmp.ge.f32.partialorder %v3971, 0.0
        %vm4004 = vcmp.ge.f32.partialorder %v3972, 0.0
        %vm4005 = vcmp.ge.f32.partialorder %v3973, 0.0
        %vm4006 = vcmp.ge.f32.partialorder %v3974, 0.0
        %vm4007 = vcmp.ge.f32.partialorder %v3975, 0.0
        %vm4008 = vcmp.ge.f32.partialorder %v3976, 0.0
        %vm4009 = vcmp.ge.f32.partialorder %v3977, 0.0
        %v4010 = vmul.f32 %v3946, 0.01
        %v4011 = vmul.f32 %v3947, 0.01
        %v4012 = vmul.f32 %v3948, 0.01
        %v4013 = vmul.f32 %v3949, 0.01
        %v4014 = vmul.f32 %v3950, 0.01
        %v4015 = vmul.f32 %v3951, 0.01
        %v4016 = vmul.f32 %v3952, 0.01
        %v4017 = vmul.f32 %v3953, 0.01
        %v4018 = vmul.f32 %v3954, 0.01
        %v4019 = vmul.f32 %v3955, 0.01
        %v4020 = vmul.f32 %v3956, 0.01
        %v4021 = vmul.f32 %v3957, 0.01
        %v4022 = vmul.f32 %v3958, 0.01
        %v4023 = vmul.f32 %v3959, 0.01
        %v4024 = vmul.f32 %v3960, 0.01
        %v4025 = vmul.f32 %v3961, 0.01
        %v4026 = vmul.f32 %v3962, 0.01
        %v4027 = vmul.f32 %v3963, 0.01
        %v4028 = vmul.f32 %v3964, 0.01
        %v4029 = vmul.f32 %v3965, 0.01
        %v4030 = vmul.f32 %v3966, 0.01
        %v4031 = vmul.f32 %v3967, 0.01
        %v4032 = vmul.f32 %v3968, 0.01
        %v4033 = vmul.f32 %v3969, 0.01
        %v4034 = vmul.f32 %v3970, 0.01
        %v4035 = vmul.f32 %v3971, 0.01
        %v4036 = vmul.f32 %v3972, 0.01
        %v4037 = vmul.f32 %v3973, 0.01
        %v4038 = vmul.f32 %v3974, 0.01
        %v4039 = vmul.f32 %v3975, 0.01
        %v4040 = vmul.f32 %v3976, 0.01
        %v4041 = vmul.f32 %v3977, 0.01
        %v4042 = vsel %vm3978, %v3946, %v4010
        %v4043 = vsel %vm3979, %v3947, %v4011
        %v4044 = vsel %vm3980, %v3948, %v4012
        %v4045 = vsel %vm3981, %v3949, %v4013
        %v4046 = vsel %vm3982, %v3950, %v4014
        %v4047 = vsel %vm3983, %v3951, %v4015
        %v4048 = vsel %vm3984, %v3952, %v4016
        %v4049 = vsel %vm3985, %v3953, %v4017
        %v4050 = vsel %vm3986, %v3954, %v4018
        %v4051 = vsel %vm3987, %v3955, %v4019
        %v4052 = vsel %vm3988, %v3956, %v4020
        %v4053 = vsel %vm3989, %v3957, %v4021
        %v4054 = vsel %vm3990, %v3958, %v4022
        %v4055 = vsel %vm3991, %v3959, %v4023
        %v4056 = vsel %vm3992, %v3960, %v4024
        %v4057 = vsel %vm3993, %v3961, %v4025
        %v4058 = vsel %vm3994, %v3962, %v4026
        %v4059 = vsel %vm3995, %v3963, %v4027
        %v4060 = vsel %vm3996, %v3964, %v4028
        %v4061 = vsel %vm3997, %v3965, %v4029
        %v4062 = vsel %vm3998, %v3966, %v4030
        %v4063 = vsel %vm3999, %v3967, %v4031
        %v4064 = vsel %vm4000, %v3968, %v4032
        %v4065 = vsel %vm4001, %v3969, %v4033
        %v4066 = vsel %vm4002, %v3970, %v4034
        %v4067 = vsel %vm4003, %v3971, %v4035
        %v4068 = vsel %vm4004, %v3972, %v4036
        %v4069 = vsel %vm4005, %v3973, %v4037
        %v4070 = vsel %vm4006, %v3974, %v4038
        %v4071 = vsel %vm4007, %v3975, %v4039
        %v4072 = vsel %vm4008, %v3976, %v4040
        %v4073 = vsel %vm4009, %v3977, %v4041
        %s4074 = scalar_lea.vmem %s6, 32
        %v4075 = vld [vmem:[%s4074] sm:$0xff]
        %v4077 = vsel %vm575, %v4042, 0
        %v4080 = vsel %vm575, %v4043, 0
        %v4083 = vsel %vm575, %v4044, 0
        %v4086 = vsel %vm575, %v4045, 0
        %v4089 = vsel %vm575, %v4046, 0
        %v4092 = vsel %vm575, %v4047, 0
        %v4095 = vsel %vm575, %v4048, 0
        %v4098 = vsel %vm575, %v4049, 0
        %v4101 = vsel %vm575, %v4050, 0
        %v4104 = vsel %vm575, %v4051, 0
        %v4107 = vsel %vm575, %v4052, 0
        %v4110 = vsel %vm575, %v4053, 0
        %v4113 = vsel %vm575, %v4054, 0
        %v4116 = vsel %vm575, %v4055, 0
        %v4119 = vsel %vm575, %v4056, 0
        %v4122 = vsel %vm575, %v4057, 0
        %v4125 = vsel %vm575, %v4058, 0
        %v4128 = vsel %vm575, %v4059, 0
        %v4131 = vsel %vm575, %v4060, 0
        %v4134 = vsel %vm575, %v4061, 0
        %v4137 = vsel %vm575, %v4062, 0
        %v4140 = vsel %vm575, %v4063, 0
        %v4143 = vsel %vm575, %v4064, 0
        %v4146 = vsel %vm575, %v4065, 0
        %v4149 = vsel %vm575, %v4066, 0
        %v4152 = vsel %vm575, %v4067, 0
        %v4155 = vsel %vm575, %v4068, 0
        %v4158 = vsel %vm575, %v4069, 0
        %v4161 = vsel %vm575, %v4070, 0
        %v4164 = vsel %vm575, %v4071, 0
        %v4167 = vsel %vm575, %v4072, 0
        %v4170 = vsel %vm575, %v4073, 0
        %4172 = vmatprep.subr.mxu0 0.0
        %4173 = vmatpush1.msra.mxu0 %v4075
        %4174 = vmatprep.subr.mxu0 0.0
        %4175 = vmatpush1.msra.mxu0 0.0
        %4176 = vmatprep.subr.mxu0 0.0
        %4177 = vmatpush1.msra.mxu0 0.0
        %4178 = vmatprep.subr.mxu0 0.0
        %4179 = vmatpush1.msra.mxu0 0.0
        %4180 = vmatprep.subr.mxu0 0.0
        %4181 = vmatpush1.msra.mxu0 0.0
        %4182 = vmatprep.subr.mxu0 0.0
        %4183 = vmatpush1.msra.mxu0 0.0
        %4184 = vmatprep.subr.mxu0 0.0
        %4185 = vmatpush1.msra.mxu0 0.0
        %4186 = vmatprep.subr.mxu0 0.0
        %4187 = vmatpush1.msra.mxu0 0.0
        %4188 = vmatprep.subr.mxu0 0.0
        %4189 = vmatpush1.msra.mxu0 0.0
        %4190 = vmatprep.subr.mxu0 0.0
        %4191 = vmatpush1.msra.mxu0 0.0
        %4192 = vmatprep.subr.mxu0 0.0
        %4193 = vmatpush1.msra.mxu0 0.0
        %4194 = vmatprep.subr.mxu0 0.0
        %4195 = vmatpush1.msra.mxu0 0.0
        %4196 = vmatprep.subr.mxu0 0.0
        %4197 = vmatpush1.msra.mxu0 0.0
        %4198 = vmatprep.subr.mxu0 0.0
        %4199 = vmatpush1.msra.mxu0 0.0
        %4200 = vmatprep.subr.mxu0 0.0
        %4201 = vmatpush1.msra.mxu0 0.0
        %4202 = vmatprep.subr.mxu0 0.0
        %4203 = vmatpush1.msra.mxu0 0.0
        %4204 = vmatprep.subr.mxu0 0.0
        %4205 = vmatpush1.msra.mxu0 0.0
        %4206 = vmatprep.subr.mxu0 0.0
        %4207 = vmatpush1.msra.mxu0 0.0
        %4208 = vmatprep.subr.mxu0 0.0
        %4209 = vmatpush1.msra.mxu0 0.0
        %4210 = vmatprep.subr.mxu0 0.0
        %4211 = vmatpush1.msra.mxu0 0.0
        %4212 = vmatprep.subr.mxu0 0.0
        %4213 = vmatpush1.msra.mxu0 0.0
        %4214 = vmatprep.subr.mxu0 0.0
        %4215 = vmatpush1.msra.mxu0 0.0
        %4216 = vmatprep.subr.mxu0 0.0
        %4217 = vmatpush1.msra.mxu0 0.0
        %4218 = vmatprep.subr.mxu0 0.0
        %4219 = vmatpush1.msra.mxu0 0.0
        %4220 = vmatprep.subr.mxu0 0.0
        %4221 = vmatpush1.msra.mxu0 0.0
        %4222 = vmatprep.subr.mxu0 0.0
        %4223 = vmatpush1.msra.mxu0 0.0
        %4224 = vmatprep.subr.mxu0 0.0
        %4225 = vmatpush1.msra.mxu0 0.0
        %4226 = vmatprep.subr.mxu0 0.0
        %4227 = vmatpush1.msra.mxu0 0.0
        %4228 = vmatprep.subr.mxu0 0.0
        %4229 = vmatpush1.msra.mxu0 0.0
        %4230 = vmatprep.subr.mxu0 0.0
        %4231 = vmatpush1.msra.mxu0 0.0
        %4232 = vmatprep.subr.mxu0 0.0
        %4233 = vmatpush1.msra.mxu0 0.0
        %4234 = vmatprep.subr.mxu0 0.0
        %4235 = vmatpush1.msra.mxu0 0.0
        %4236 = vmatprep.mubr.f32.mxu0 0.0
        %4237 = vmatmul.mubr.f32.gmra.mrb[0].mxu0 %v4077
        %v4238 = vpop.f32.mrb[0].mxu0
        %v4239 = vadd.f32 0.0, %v4238
        %v4240 = vpop.f32.mrb[0].mxu0
        %4241 = vmatprep.mubr.f32.mxu0 0.0
        %4242 = vmatmul.mubr.f32.gmra.mrb[0].mxu0 %v4080
        %v4243 = vpop.f32.mrb[0].mxu0
        %v4244 = vadd.f32 0.0, %v4243
        %v4245 = vpop.f32.mrb[0].mxu0
        %4246 = vmatprep.mubr.f32.mxu0 0.0
        %4247 = vmatmul.mubr.f32.gmra.mrb[0].mxu0 %v4083
        %v4248 = vpop.f32.mrb[0].mxu0
        %v4249 = vadd.f32 0.0, %v4248
        %v4250 = vpop.f32.mrb[0].mxu0
        %4251 = vmatprep.mubr.f32.mxu0 0.0
        %4252 = vmatmul.mubr.f32.gmra.mrb[0].mxu0 %v4086
        %v4253 = vpop.f32.mrb[0].mxu0
        %v4254 = vadd.f32 0.0, %v4253
        %v4255 = vpop.f32.mrb[0].mxu0
        %4256 = vmatprep.mubr.f32.mxu0 0.0
        %4257 = vmatmul.mubr.f32.gmra.mrb[0].mxu0 %v4089
        %v4258 = vpop.f32.mrb[0].mxu0
        %v4259 = vadd.f32 0.0, %v4258
        %v4260 = vpop.f32.mrb[0].mxu0
        %4261 = vmatprep.mubr.f32.mxu0 0.0
        %4262 = vmatmul.mubr.f32.gmra.mrb[0].mxu0 %v4092
        %v4263 = vpop.f32.mrb[0].mxu0
        %v4264 = vadd.f32 0.0, %v4263
        %v4265 = vpop.f32.mrb[0].mxu0
        %4266 = vmatprep.mubr.f32.mxu0 0.0
        %4267 = vmatmul.mubr.f32.gmra.mrb[0].mxu0 %v4095
        %v4268 = vpop.f32.mrb[0].mxu0
        %v4269 = vadd.f32 0.0, %v4268
        %v4270 = vpop.f32.mrb[0].mxu0
        %4271 = vmatprep.mubr.f32.mxu0 0.0
        %4272 = vmatmul.mubr.f32.gmra.mrb[0].mxu0 %v4098
        %v4273 = vpop.f32.mrb[0].mxu0
        %v4274 = vadd.f32 0.0, %v4273
        %v4275 = vpop.f32.mrb[0].mxu0
        %4276 = vmatprep.mubr.f32.mxu0 0.0
        %4277 = vmatmul.mubr.f32.gmra.mrb[0].mxu0 %v4101
        %v4278 = vpop.f32.mrb[0].mxu0
        %v4279 = vadd.f32 0.0, %v4278
        %v4280 = vpop.f32.mrb[0].mxu0
        %4281 = vmatprep.mubr.f32.mxu0 0.0
        %4282 = vmatmul.mubr.f32.gmra.mrb[0].mxu0 %v4104
        %v4283 = vpop.f32.mrb[0].mxu0
        %v4284 = vadd.f32 0.0, %v4283
        %v4285 = vpop.f32.mrb[0].mxu0
        %4286 = vmatprep.mubr.f32.mxu0 0.0
        %4287 = vmatmul.mubr.f32.gmra.mrb[0].mxu0 %v4107
        %v4288 = vpop.f32.mrb[0].mxu0
        %v4289 = vadd.f32 0.0, %v4288
        %v4290 = vpop.f32.mrb[0].mxu0
        %4291 = vmatprep.mubr.f32.mxu0 0.0
        %4292 = vmatmul.mubr.f32.gmra.mrb[0].mxu0 %v4110
        %v4293 = vpop.f32.mrb[0].mxu0
        %v4294 = vadd.f32 0.0, %v4293
        %v4295 = vpop.f32.mrb[0].mxu0
        %4296 = vmatprep.mubr.f32.mxu0 0.0
        %4297 = vmatmul.mubr.f32.gmra.mrb[0].mxu0 %v4113
        %v4298 = vpop.f32.mrb[0].mxu0
        %v4299 = vadd.f32 0.0, %v4298
        %v4300 = vpop.f32.mrb[0].mxu0
        %4301 = vmatprep.mubr.f32.mxu0 0.0
        %4302 = vmatmul.mubr.f32.gmra.mrb[0].mxu0 %v4116
        %v4303 = vpop.f32.mrb[0].mxu0
        %v4304 = vadd.f32 0.0, %v4303
        %v4305 = vpop.f32.mrb[0].mxu0
        %4306 = vmatprep.mubr.f32.mxu0 0.0
        %4307 = vmatmul.mubr.f32.gmra.mrb[0].mxu0 %v4119
        %v4308 = vpop.f32.mrb[0].mxu0
        %v4309 = vadd.f32 0.0, %v4308
        %v4310 = vpop.f32.mrb[0].mxu0
        %4311 = vmatprep.mubr.f32.mxu0 0.0
        %4312 = vmatmul.mubr.f32.gmra.mrb[0].mxu0 %v4122
        %v4313 = vpop.f32.mrb[0].mxu0
        %v4314 = vadd.f32 0.0, %v4313
        %v4315 = vpop.f32.mrb[0].mxu0
        %4316 = vmatprep.mubr.f32.mxu0 0.0
        %4317 = vmatmul.mubr.f32.gmra.mrb[0].mxu0 %v4125
        %v4318 = vpop.f32.mrb[0].mxu0
        %v4319 = vadd.f32 0.0, %v4318
        %v4320 = vpop.f32.mrb[0].mxu0
        %4321 = vmatprep.mubr.f32.mxu0 0.0
        %4322 = vmatmul.mubr.f32.gmra.mrb[0].mxu0 %v4128
        %v4323 = vpop.f32.mrb[0].mxu0
        %v4324 = vadd.f32 0.0, %v4323
        %v4325 = vpop.f32.mrb[0].mxu0
        %4326 = vmatprep.mubr.f32.mxu0 0.0
        %4327 = vmatmul.mubr.f32.gmra.mrb[0].mxu0 %v4131
        %v4328 = vpop.f32.mrb[0].mxu0
        %v4329 = vadd.f32 0.0, %v4328
        %v4330 = vpop.f32.mrb[0].mxu0
        %4331 = vmatprep.mubr.f32.mxu0 0.0
        %4332 = vmatmul.mubr.f32.gmra.mrb[0].mxu0 %v4134
        %v4333 = vpop.f32.mrb[0].mxu0
        %v4334 = vadd.f32 0.0, %v4333
        %v4335 = vpop.f32.mrb[0].mxu0
        %4336 = vmatprep.mubr.f32.mxu0 0.0
        %4337 = vmatmul.mubr.f32.gmra.mrb[0].mxu0 %v4137
        %v4338 = vpop.f32.mrb[0].mxu0
        %v4339 = vadd.f32 0.0, %v4338
        %v4340 = vpop.f32.mrb[0].mxu0
        %4341 = vmatprep.mubr.f32.mxu0 0.0
        %4342 = vmatmul.mubr.f32.gmra.mrb[0].mxu0 %v4140
        %v4343 = vpop.f32.mrb[0].mxu0
        %v4344 = vadd.f32 0.0, %v4343
        %v4345 = vpop.f32.mrb[0].mxu0
        %4346 = vmatprep.mubr.f32.mxu0 0.0
        %4347 = vmatmul.mubr.f32.gmra.mrb[0].mxu0 %v4143
        %v4348 = vpop.f32.mrb[0].mxu0
        %v4349 = vadd.f32 0.0, %v4348
        %v4350 = vpop.f32.mrb[0].mxu0
        %4351 = vmatprep.mubr.f32.mxu0 0.0
        %4352 = vmatmul.mubr.f32.gmra.mrb[0].mxu0 %v4146
        %v4353 = vpop.f32.mrb[0].mxu0
        %v4354 = vadd.f32 0.0, %v4353
        %v4355 = vpop.f32.mrb[0].mxu0
        %4356 = vmatprep.mubr.f32.mxu0 0.0
        %4357 = vmatmul.mubr.f32.gmra.mrb[0].mxu0 %v4149
        %v4358 = vpop.f32.mrb[0].mxu0
        %v4359 = vadd.f32 0.0, %v4358
        %v4360 = vpop.f32.mrb[0].mxu0
        %4361 = vmatprep.mubr.f32.mxu0 0.0
        %4362 = vmatmul.mubr.f32.gmra.mrb[0].mxu0 %v4152
        %v4363 = vpop.f32.mrb[0].mxu0
        %v4364 = vadd.f32 0.0, %v4363
        %v4365 = vpop.f32.mrb[0].mxu0
        %4366 = vmatprep.mubr.f32.mxu0 0.0
        %4367 = vmatmul.mubr.f32.gmra.mrb[0].mxu0 %v4155
        %v4368 = vpop.f32.mrb[0].mxu0
        %v4369 = vadd.f32 0.0, %v4368
        %v4370 = vpop.f32.mrb[0].mxu0
        %4371 = vmatprep.mubr.f32.mxu0 0.0
        %4372 = vmatmul.mubr.f32.gmra.mrb[0].mxu0 %v4158
        %v4373 = vpop.f32.mrb[0].mxu0
        %v4374 = vadd.f32 0.0, %v4373
        %v4375 = vpop.f32.mrb[0].mxu0
        %4376 = vmatprep.mubr.f32.mxu0 0.0
        %4377 = vmatmul.mubr.f32.gmra.mrb[0].mxu0 %v4161
        %v4378 = vpop.f32.mrb[0].mxu0
        %v4379 = vadd.f32 0.0, %v4378
        %v4380 = vpop.f32.mrb[0].mxu0
        %4381 = vmatprep.mubr.f32.mxu0 0.0
        %4382 = vmatmul.mubr.f32.gmra.mrb[0].mxu0 %v4164
        %v4383 = vpop.f32.mrb[0].mxu0
        %v4384 = vadd.f32 0.0, %v4383
        %v4385 = vpop.f32.mrb[0].mxu0
        %4386 = vmatprep.mubr.f32.mxu0 0.0
        %4387 = vmatmul.mubr.f32.gmra.mrb[0].mxu0 %v4167
        %v4388 = vpop.f32.mrb[0].mxu0
        %v4389 = vadd.f32 0.0, %v4388
        %v4390 = vpop.f32.mrb[0].mxu0
        %4391 = vmatprep.mubr.f32.mxu0 0.0
        %4392 = vmatmul.mubr.f32.gmra.mrb[0].mxu0 %v4170
        %v4393 = vpop.f32.mrb[0].mxu0
        %v4394 = vadd.f32 0.0, %v4393
        %v4395 = vpop.f32.mrb[0].mxu0
        %4396 = vdwg.mxu0
        %v4397 = vadd.f32 %v3643, %v4239
        %v4398 = vadd.f32 %v3644, %v4244
        %v4399 = vadd.f32 %v3645, %v4249
        %v4400 = vadd.f32 %v3646, %v4254
        %v4401 = vadd.f32 %v3647, %v4259
        %v4402 = vadd.f32 %v3648, %v4264
        %v4403 = vadd.f32 %v3649, %v4269
        %v4404 = vadd.f32 %v3650, %v4274
        %v4405 = vadd.f32 %v3651, %v4279
        %v4406 = vadd.f32 %v3652, %v4284
        %v4407 = vadd.f32 %v3653, %v4289
        %v4408 = vadd.f32 %v3654, %v4294
        %v4409 = vadd.f32 %v3655, %v4299
        %v4410 = vadd.f32 %v3656, %v4304
        %v4411 = vadd.f32 %v3657, %v4309
        %v4412 = vadd.f32 %v3658, %v4314
        %v4413 = vadd.f32 %v3659, %v4319
        %v4414 = vadd.f32 %v3660, %v4324
        %v4415 = vadd.f32 %v3661, %v4329
        %v4416 = vadd.f32 %v3662, %v4334
        %v4417 = vadd.f32 %v3663, %v4339
        %v4418 = vadd.f32 %v3664, %v4344
        %v4419 = vadd.f32 %v3665, %v4349
        %v4420 = vadd.f32 %v3666, %v4354
        %v4421 = vadd.f32 %v3667, %v4359
        %v4422 = vadd.f32 %v3668, %v4364
        %v4423 = vadd.f32 %v3669, %v4369
        %v4424 = vadd.f32 %v3670, %v4374
        %v4425 = vadd.f32 %v3671, %v4379
        %v4426 = vadd.f32 %v3672, %v4384
        %v4427 = vadd.f32 %v3673, %v4389
        %v4428 = vadd.f32 %v3674, %v4394
        %v4429 = vlaneseq
        %v4430 = vshrl.u32 %v4429, 7
        %v4431 = vsub.s32 0, %v4430
        %v4432 = vrot.slane %v646, %v4431
        %v4433 = vadd.f32 %v4397, %v4432
        %v4434 = vadd.f32 %v4398, %v4432
        %v4435 = vadd.f32 %v4399, %v4432
        %v4436 = vadd.f32 %v4400, %v4432
        %v4437 = vadd.f32 %v4401, %v4432
        %v4438 = vadd.f32 %v4402, %v4432
        %v4439 = vadd.f32 %v4403, %v4432
        %v4440 = vadd.f32 %v4404, %v4432
        %v4441 = vadd.f32 %v4405, %v4432
        %v4442 = vadd.f32 %v4406, %v4432
        %v4443 = vadd.f32 %v4407, %v4432
        %v4444 = vadd.f32 %v4408, %v4432
        %v4445 = vadd.f32 %v4409, %v4432
        %v4446 = vadd.f32 %v4410, %v4432
        %v4447 = vadd.f32 %v4411, %v4432
        %v4448 = vadd.f32 %v4412, %v4432
        %v4449 = vadd.f32 %v4413, %v4432
        %v4450 = vadd.f32 %v4414, %v4432
        %v4451 = vadd.f32 %v4415, %v4432
        %v4452 = vadd.f32 %v4416, %v4432
        %v4453 = vadd.f32 %v4417, %v4432
        %v4454 = vadd.f32 %v4418, %v4432
        %v4455 = vadd.f32 %v4419, %v4432
        %v4456 = vadd.f32 %v4420, %v4432
        %v4457 = vadd.f32 %v4421, %v4432
        %v4458 = vadd.f32 %v4422, %v4432
        %v4459 = vadd.f32 %v4423, %v4432
        %v4460 = vadd.f32 %v4424, %v4432
        %v4461 = vadd.f32 %v4425, %v4432
        %v4462 = vadd.f32 %v4426, %v4432
        %v4463 = vadd.f32 %v4427, %v4432
        %v4464 = vadd.f32 %v4428, %v4432
        %v4465 = vld [vmem:[%s9] sm:$0x1]
        %v4466 = vld [vmem:[%s10] sm:$0x1]
        %v4468 = vlaneseq
        %v4469 = vshrl.u32 %v4468, 7
        %v4470 = vsub.s32 0, %v4469
        %v4471 = vrot.slane %v4465, %v4470
        %v4473 = vmul.f32 %v4433, %v4471
        %v4474 = vmul.f32 %v4434, %v4471
        %v4475 = vmul.f32 %v4435, %v4471
        %v4476 = vmul.f32 %v4436, %v4471
        %v4477 = vmul.f32 %v4437, %v4471
        %v4478 = vmul.f32 %v4438, %v4471
        %v4479 = vmul.f32 %v4439, %v4471
        %v4480 = vmul.f32 %v4440, %v4471
        %v4481 = vmul.f32 %v4441, %v4471
        %v4482 = vmul.f32 %v4442, %v4471
        %v4483 = vmul.f32 %v4443, %v4471
        %v4484 = vmul.f32 %v4444, %v4471
        %v4485 = vmul.f32 %v4445, %v4471
        %v4486 = vmul.f32 %v4446, %v4471
        %v4487 = vmul.f32 %v4447, %v4471
        %v4488 = vmul.f32 %v4448, %v4471
        %v4489 = vmul.f32 %v4449, %v4471
        %v4490 = vmul.f32 %v4450, %v4471
        %v4491 = vmul.f32 %v4451, %v4471
        %v4492 = vmul.f32 %v4452, %v4471
        %v4493 = vmul.f32 %v4453, %v4471
        %v4494 = vmul.f32 %v4454, %v4471
        %v4495 = vmul.f32 %v4455, %v4471
        %v4496 = vmul.f32 %v4456, %v4471
        %v4497 = vmul.f32 %v4457, %v4471
        %v4498 = vmul.f32 %v4458, %v4471
        %v4499 = vmul.f32 %v4459, %v4471
        %v4500 = vmul.f32 %v4460, %v4471
        %v4501 = vmul.f32 %v4461, %v4471
        %v4502 = vmul.f32 %v4462, %v4471
        %v4503 = vmul.f32 %v4463, %v4471
        %v4504 = vmul.f32 %v4464, %v4471
        %v4506 = vlaneseq
        %v4507 = vshrl.u32 %v4506, 7
        %v4508 = vsub.s32 0, %v4507
        %v4509 = vrot.slane %v4466, %v4508
        %v4511 = vadd.f32 %v4473, %v4509
        %v4512 = vadd.f32 %v4474, %v4509
        %v4513 = vadd.f32 %v4475, %v4509
        %v4514 = vadd.f32 %v4476, %v4509
        %v4515 = vadd.f32 %v4477, %v4509
        %v4516 = vadd.f32 %v4478, %v4509
        %v4517 = vadd.f32 %v4479, %v4509
        %v4518 = vadd.f32 %v4480, %v4509
        %v4519 = vadd.f32 %v4481, %v4509
        %v4520 = vadd.f32 %v4482, %v4509
        %v4521 = vadd.f32 %v4483, %v4509
        %v4522 = vadd.f32 %v4484, %v4509
        %v4523 = vadd.f32 %v4485, %v4509
        %v4524 = vadd.f32 %v4486, %v4509
        %v4525 = vadd.f32 %v4487, %v4509
        %v4526 = vadd.f32 %v4488, %v4509
        %v4527 = vadd.f32 %v4489, %v4509
        %v4528 = vadd.f32 %v4490, %v4509
        %v4529 = vadd.f32 %v4491, %v4509
        %v4530 = vadd.f32 %v4492, %v4509
        %v4531 = vadd.f32 %v4493, %v4509
        %v4532 = vadd.f32 %v4494, %v4509
        %v4533 = vadd.f32 %v4495, %v4509
        %v4534 = vadd.f32 %v4496, %v4509
        %v4535 = vadd.f32 %v4497, %v4509
        %v4536 = vadd.f32 %v4498, %v4509
        %v4537 = vadd.f32 %v4499, %v4509
        %v4538 = vadd.f32 %v4500, %v4509
        %v4539 = vadd.f32 %v4501, %v4509
        %v4540 = vadd.f32 %v4502, %v4509
        %v4541 = vadd.f32 %v4503, %v4509
        %v4542 = vadd.f32 %v4504, %v4509
        %vm4543 = vcmp.ge.f32.partialorder %v4511, 0.0
        %vm4544 = vcmp.ge.f32.partialorder %v4512, 0.0
        %vm4545 = vcmp.ge.f32.partialorder %v4513, 0.0
        %vm4546 = vcmp.ge.f32.partialorder %v4514, 0.0
        %vm4547 = vcmp.ge.f32.partialorder %v4515, 0.0
        %vm4548 = vcmp.ge.f32.partialorder %v4516, 0.0
        %vm4549 = vcmp.ge.f32.partialorder %v4517, 0.0
        %vm4550 = vcmp.ge.f32.partialorder %v4518, 0.0
        %vm4551 = vcmp.ge.f32.partialorder %v4519, 0.0
        %vm4552 = vcmp.ge.f32.partialorder %v4520, 0.0
        %vm4553 = vcmp.ge.f32.partialorder %v4521, 0.0
        %vm4554 = vcmp.ge.f32.partialorder %v4522, 0.0
        %vm4555 = vcmp.ge.f32.partialorder %v4523, 0.0
        %vm4556 = vcmp.ge.f32.partialorder %v4524, 0.0
        %vm4557 = vcmp.ge.f32.partialorder %v4525, 0.0
        %vm4558 = vcmp.ge.f32.partialorder %v4526, 0.0
        %vm4559 = vcmp.ge.f32.partialorder %v4527, 0.0
        %vm4560 = vcmp.ge.f32.partialorder %v4528, 0.0
        %vm4561 = vcmp.ge.f32.partialorder %v4529, 0.0
        %vm4562 = vcmp.ge.f32.partialorder %v4530, 0.0
        %vm4563 = vcmp.ge.f32.partialorder %v4531, 0.0
        %vm4564 = vcmp.ge.f32.partialorder %v4532, 0.0
        %vm4565 = vcmp.ge.f32.partialorder %v4533, 0.0
        %vm4566 = vcmp.ge.f32.partialorder %v4534, 0.0
        %vm4567 = vcmp.ge.f32.partialorder %v4535, 0.0
        %vm4568 = vcmp.ge.f32.partialorder %v4536, 0.0
        %vm4569 = vcmp.ge.f32.partialorder %v4537, 0.0
        %vm4570 = vcmp.ge.f32.partialorder %v4538, 0.0
        %vm4571 = vcmp.ge.f32.partialorder %v4539, 0.0
        %vm4572 = vcmp.ge.f32.partialorder %v4540, 0.0
        %vm4573 = vcmp.ge.f32.partialorder %v4541, 0.0
        %vm4574 = vcmp.ge.f32.partialorder %v4542, 0.0
        %v4575 = vmul.f32 %v4511, 0.01
        %v4576 = vmul.f32 %v4512, 0.01
        %v4577 = vmul.f32 %v4513, 0.01
        %v4578 = vmul.f32 %v4514, 0.01
        %v4579 = vmul.f32 %v4515, 0.01
        %v4580 = vmul.f32 %v4516, 0.01
        %v4581 = vmul.f32 %v4517, 0.01
        %v4582 = vmul.f32 %v4518, 0.01
        %v4583 = vmul.f32 %v4519, 0.01
        %v4584 = vmul.f32 %v4520, 0.01
        %v4585 = vmul.f32 %v4521, 0.01
        %v4586 = vmul.f32 %v4522, 0.01
        %v4587 = vmul.f32 %v4523, 0.01
        %v4588 = vmul.f32 %v4524, 0.01
        %v4589 = vmul.f32 %v4525, 0.01
        %v4590 = vmul.f32 %v4526, 0.01
        %v4591 = vmul.f32 %v4527, 0.01
        %v4592 = vmul.f32 %v4528, 0.01
        %v4593 = vmul.f32 %v4529, 0.01
        %v4594 = vmul.f32 %v4530, 0.01
        %v4595 = vmul.f32 %v4531, 0.01
        %v4596 = vmul.f32 %v4532, 0.01
        %v4597 = vmul.f32 %v4533, 0.01
        %v4598 = vmul.f32 %v4534, 0.01
        %v4599 = vmul.f32 %v4535, 0.01
        %v4600 = vmul.f32 %v4536, 0.01
        %v4601 = vmul.f32 %v4537, 0.01
        %v4602 = vmul.f32 %v4538, 0.01
        %v4603 = vmul.f32 %v4539, 0.01
        %v4604 = vmul.f32 %v4540, 0.01
        %v4605 = vmul.f32 %v4541, 0.01
        %v4606 = vmul.f32 %v4542, 0.01
        %v4607 = vsel %vm4543, %v4511, %v4575
        %v4608 = vsel %vm4544, %v4512, %v4576
        %v4609 = vsel %vm4545, %v4513, %v4577
        %v4610 = vsel %vm4546, %v4514, %v4578
        %v4611 = vsel %vm4547, %v4515, %v4579
        %v4612 = vsel %vm4548, %v4516, %v4580
        %v4613 = vsel %vm4549, %v4517, %v4581
        %v4614 = vsel %vm4550, %v4518, %v4582
        %v4615 = vsel %vm4551, %v4519, %v4583
        %v4616 = vsel %vm4552, %v4520, %v4584
        %v4617 = vsel %vm4553, %v4521, %v4585
        %v4618 = vsel %vm4554, %v4522, %v4586
        %v4619 = vsel %vm4555, %v4523, %v4587
        %v4620 = vsel %vm4556, %v4524, %v4588
        %v4621 = vsel %vm4557, %v4525, %v4589
        %v4622 = vsel %vm4558, %v4526, %v4590
        %v4623 = vsel %vm4559, %v4527, %v4591
        %v4624 = vsel %vm4560, %v4528, %v4592
        %v4625 = vsel %vm4561, %v4529, %v4593
        %v4626 = vsel %vm4562, %v4530, %v4594
        %v4627 = vsel %vm4563, %v4531, %v4595
        %v4628 = vsel %vm4564, %v4532, %v4596
        %v4629 = vsel %vm4565, %v4533, %v4597
        %v4630 = vsel %vm4566, %v4534, %v4598
        %v4631 = vsel %vm4567, %v4535, %v4599
        %v4632 = vsel %vm4568, %v4536, %v4600
        %v4633 = vsel %vm4569, %v4537, %v4601
        %v4634 = vsel %vm4570, %v4538, %v4602
        %v4635 = vsel %vm4571, %v4539, %v4603
        %v4636 = vsel %vm4572, %v4540, %v4604
        %v4637 = vsel %vm4573, %v4541, %v4605
        %v4638 = vsel %vm4574, %v4542, %v4606
        %4639 = vst.msk [vmem:[%s379] sm:$0xff] %vm1612, %v4607
        %4640 = vst.msk [vmem:[%s379 + $0x8] sm:$0xff] %vm1612, %v4608
        %4641 = vst.msk [vmem:[%s379 + $0x10] sm:$0xff] %vm1612, %v4609
        %4642 = vst.msk [vmem:[%s379 + $0x18] sm:$0xff] %vm1612, %v4610
        %4643 = vst.msk [vmem:[%s379 + $0x20] sm:$0xff] %vm1612, %v4611
        %4644 = vst.msk [vmem:[%s379 + $0x28] sm:$0xff] %vm1612, %v4612
        %4645 = vst.msk [vmem:[%s379 + $0x30] sm:$0xff] %vm1612, %v4613
        %4646 = vst.msk [vmem:[%s379 + $0x38] sm:$0xff] %vm1612, %v4614
        %4647 = vst.msk [vmem:[%s379 + $0x40] sm:$0xff] %vm1612, %v4615
        %4648 = vst.msk [vmem:[%s379 + $0x48] sm:$0xff] %vm1612, %v4616
        %4649 = vst.msk [vmem:[%s379 + $0x50] sm:$0xff] %vm1612, %v4617
        %4650 = vst.msk [vmem:[%s379 + $0x58] sm:$0xff] %vm1612, %v4618
        %4651 = vst.msk [vmem:[%s379 + $0x60] sm:$0xff] %vm1612, %v4619
        %4652 = vst.msk [vmem:[%s379 + $0x68] sm:$0xff] %vm1612, %v4620
        %4653 = vst.msk [vmem:[%s379 + $0x70] sm:$0xff] %vm1612, %v4621
        %4654 = vst.msk [vmem:[%s379 + $0x78] sm:$0xff] %vm1612, %v4622
        %4655 = vst.msk [vmem:[%s379 + $0x80] sm:$0xff] %vm1612, %v4623
        %4656 = vst.msk [vmem:[%s379 + $0x88] sm:$0xff] %vm1612, %v4624
        %4657 = vst.msk [vmem:[%s379 + $0x90] sm:$0xff] %vm1612, %v4625
        %4658 = vst.msk [vmem:[%s379 + $0x98] sm:$0xff] %vm1612, %v4626
        %4659 = vst.msk [vmem:[%s379 + $0xa0] sm:$0xff] %vm1612, %v4627
        %4660 = vst.msk [vmem:[%s379 + $0xa8] sm:$0xff] %vm1612, %v4628
        %4661 = vst.msk [vmem:[%s379 + $0xb0] sm:$0xff] %vm1612, %v4629
        %4662 = vst.msk [vmem:[%s379 + $0xb8] sm:$0xff] %vm1612, %v4630
        %4663 = vst.msk [vmem:[%s379 + $0xc0] sm:$0xff] %vm1612, %v4631
        %4664 = vst.msk [vmem:[%s379 + $0xc8] sm:$0xff] %vm1612, %v4632
        %4665 = vst.msk [vmem:[%s379 + $0xd0] sm:$0xff] %vm1612, %v4633
        %4666 = vst.msk [vmem:[%s379 + $0xd8] sm:$0xff] %vm1612, %v4634
        %4667 = vst.msk [vmem:[%s379 + $0xe0] sm:$0xff] %vm1612, %v4635
        %4668 = vst.msk [vmem:[%s379 + $0xe8] sm:$0xff] %vm1612, %v4636
        %4669 = vst.msk [vmem:[%s379 + $0xf0] sm:$0xff] %vm1612, %v4637
        %4670 = vst.msk [vmem:[%s379 + $0xf8] sm:$0xff] %vm1612, %v4638
        %s4671 = sand.u32 %s269, 1
        %s4672 = scalar_lea.sflag [#allocation3], %s4671
        %s4673 = sand.u32 %s269, 1
        %s4674 = smul.addr %s4673, 256
        %s4675 = scalar_lea.vmem [#allocation2], %s4674
        // Predicated region
        $region65: #{tpu_custom_call.1} parent=63 // pred_check
          %p4676 = pneg %p279
        $region66: #{tpu_custom_call.1} parent=63 // pred_check_branch
          %4678 = sbr.rel (%p4676) target = $region68
        $region67: #{tpu_custom_call.1} parent=63 // pred_region
          %s4680 = ssub.s32 4096, 4096
          %4681 = vsyncadd %s4672, %s4680
          %s4682 = smul.addr %s25, 32
          %s4683 = smul.addr %s4682, 128
          %s4684 = scalar_lea.hbm %s11, %s4683
          %s4685 = sshll.u32 %s4675, 4
          %s4686 = int_to_ptr.vmem [resolvable:$true] %s4685
          %4691 = dma.vmem_to_hbm [thread:$0]  %s4686, 4096, %s4684, %s4672, 128, 128, 8
        $region68: #{tpu_custom_call.1} parent=63 // pred_fallthru
          _
      $region64: #{tpu_custom_call.1} parent=5 // pred_fallthru
        _
      %p4692 = scmp.le.s32.totalorder 2, %s20
      // Predicated region
      $region69: #{tpu_custom_call.1} parent=5 // pred_check
        %p4693 = pneg %p4692
      $region70: #{tpu_custom_call.1} parent=5 // pred_check_branch
        %4695 = sbr.rel (%p4693) target = $region72
      $region71: #{tpu_custom_call.1} parent=5 // pred_region
        %s4696 = ssub.s32 %s20, 2
        // Predicated region
        $region73: #{tpu_custom_call.1} parent=71 // pred_check
          %p4697 = pneg %p285
        $region74: #{tpu_custom_call.1} parent=71 // pred_check_branch
          %4699 = sbr.rel (%p4697) target = $region76
        $region75: #{tpu_custom_call.1} parent=71 // pred_region
          %s4700 = sand.u32 %s270, 1
          %s4701 = scalar_lea.sflag [#allocation3], %s4700
          %s4702 = sand.u32 %s270, 1
          %s4703 = smul.addr %s4702, 256
          %s4704 = scalar_lea.vmem [#allocation2], %s4703
          %4705 = dma.done %s4701, 4096
        $region76: #{tpu_custom_call.1} parent=71 // pred_fallthru
          _
      $region72: #{tpu_custom_call.1} parent=5 // pred_fallthru
        _
    $region6: #{tpu_custom_call.1} parent=1 // loop_footer
      %s24 = sadd.s32 1, %s20
    $region7: #{tpu_custom_call.1} parent=1 // loop_footer_branch
      %19 = sbr.rel target = $region3
    $region8: #{tpu_custom_call.1} parent=1 // loop_exit
      _
    %4706 = vsyncpa [#allocation3], 1
    %s4707 = scalar_lea.sflag [#allocation3], 1
    %4708 = vsyncpa %s4707, 1

</llo_original>
